<compile_context>
chip_gen: v7x
topology: tpu7x:2x2x1
jax: 0.10.0
libtpu: 0.0.40
codegen_flags: <defaults>
</compile_context>

<pallas_src>
import functools
import math

import jax
import jax.numpy as jnp
from jax.experimental import pallas as pl
from jax.experimental.pallas import tpu as pltpu

BN_EPS = 1e-5
NEG_SLOPE = 0.01   # nn.LeakyReLU default


# ----------------------------------------------------------------------------
# Hardware-aware knobs
# ----------------------------------------------------------------------------
def _vmem_limit_bytes():
    cap = 64 << 20                     # conservative fallback (v7x physical VMEM)
    try:
        cap = int(getattr(pltpu.get_tpu_info(), "vmem_capacity_bytes", cap))
    except Exception:
        pass
    return (cap * 3) // 4              # ~96 MiB on v5e/v6e, ~48 MiB on v7x


def _pick_cout_tile(cout):
    kind = ""
    try:
        kind = jax.devices()[0].device_kind.lower()
    except Exception:
        pass
    is_v5e = ("v5e" in kind) or ("v5 lite" in kind) or ("v5litepod" in kind)
    if cout % 256 == 0 and not is_v5e:   # v6e/v7x MXU is 256 wide
        return 256
    if cout % 128 == 0:
        return 128
    # Lane-sparse fallback (masked partial stores) for odd channel counts.
    return cout


def _row_tile(h, w, tc, bytes_per_elem=8, budget=4 << 20):
    th = h
    while th % 2 == 0 and th > 8 and th * w * tc * bytes_per_elem > budget:
        th //= 2
    return th


# ----------------------------------------------------------------------------
# Kernel A: 3x3 "same" conv (one image, one Cout tile) + per-channel sum/sumsq
# ----------------------------------------------------------------------------
def _conv_stats_kernel(x_ref, w_ref, y_ref, s_ref, *, taps, out_h, out_w):
    # x_ref : (1, H+ph, W+pw, K) bf16   (K = 9*Cin with one tap, or Cin with 9 taps)
    # w_ref : (T, K, tc)         bf16
    # y_ref : (1, H, W, tc)      bf16   raw (unnormalized) conv output
    # s_ref : (1, 2, tc)         f32    per-image [sum, sum of squares]
    m = out_h * out_w
    k = x_ref.shape[-1]

    # Sum tap contributions as values; single store (no accumulator RMW).
    acc = None
    for t, (dy, dx) in enumerate(taps):
        rows = x_ref[0, dy:dy + out_h, dx:dx + out_w, :].reshape(m, k)
        part = jnp.dot(rows, w_ref[t], preferred_element_type=jnp.float32)
        acc = part if acc is None else acc + part

    tc = acc.shape[-1]
    y_ref[...] = acc.reshape(1, out_h, out_w, tc).astype(y_ref.dtype)

    # Single-sweep batch statistics (sum + sumsq) over the live f32 accumulator.
    stats = jnp.concatenate(
        [jnp.sum(acc, axis=0, keepdims=True),
         jnp.sum(acc * acc, axis=0, keepdims=True)], axis=0)     # (2, tc)
    s_ref[...] = stats.reshape(1, 2, tc)


# ----------------------------------------------------------------------------
# Kernel B: BatchNorm apply (precomputed scale/shift) + LeakyReLU(0.01)
# ----------------------------------------------------------------------------
def _bn_lrelu_kernel(y_ref, scale_ref, shift_ref, o_ref):
    # y_ref: (1, th, W, tc) bf16; scale/shift: (1, tc) f32
    z = y_ref[...].astype(jnp.float32) * scale_ref[...] + shift_ref[...]
    o_ref[...] = jnp.maximum(z, NEG_SLOPE * z).astype(o_ref.dtype)


# ----------------------------------------------------------------------------
# One conv block: conv -> train-mode BN -> LeakyReLU
# ----------------------------------------------------------------------------
def conv_block(x_nhwc, p, *, act_dtype=jnp.bfloat16):
    N, H, W, Cin = x_nhwc.shape
    w = p["w"]
    Cout = int(w.shape[0])
    tc = _pick_cout_tile(Cout)
    n_ct = Cout // tc
    vmem_limit = _vmem_limit_bytes()

    # Spatial "same" padding once, in bf16 (1x activation traffic).
    xp = jnp.pad(x_nhwc, ((0, 0), (1, 1), (1, 1), (0, 0))).astype(jnp.bfloat16)

    if Cin <= 32:
        # Small Cin (first conv): fold all 9 taps into channels -> one K=9*Cin dot.
        xin = jnp.concatenate(
            [xp[:, dy:dy + H, dx:dx + W, :] for dy in range(3) for dx in range(3)],
            axis=-1)                                          # (N, H, W, 9*Cin)
        taps = ((0, 0),)
        t_dim, k_dim = 1, 9 * Cin
    else:
        # Large Cin (second conv): taps handled in-kernel -> no 3x HBM copy.
        xin = xp                                              # (N, H+2, W+2, Cin)
        taps = tuple((dy, dx) for dy in range(3) for dx in range(3))
        t_dim, k_dim = 9, Cin

    # Weights (Cout,Cin,3,3) OIHW -> (T, K, Cout), matching the tap/channel order.
    wk = jnp.transpose(w, (2, 3, 1, 0)).reshape(t_dim, k_dim, Cout).astype(jnp.bfloat16)
    # NOTE: conv bias is intentionally NOT applied: under train-mode BatchNorm it
    # cancels exactly in the forward (only the unimplemented running stats differ).

    in_h, in_w = xin.shape[1], xin.shape[2]
    y_raw, stats = pl.pallas_call(
        functools.partial(_conv_stats_kernel, taps=taps, out_h=H, out_w=W),
        out_shape=(jax.ShapeDtypeStruct((N, H, W, Cout), jnp.bfloat16),
                   jax.ShapeDtypeStruct((N, 2, Cout), jnp.float32)),
        grid=(N, n_ct),
        in_specs=[
            pl.BlockSpec((1, in_h, in_w, k_dim), lambda n, c: (n, 0, 0, 0)),
            pl.BlockSpec((t_dim, k_dim, tc), lambda n, c: (0, 0, c)),
        ],
        out_specs=(
            pl.BlockSpec((1, H, W, tc), lambda n, c: (n, 0, 0, c)),
            pl.BlockSpec((1, 2, tc), lambda n, c: (n, 0, c)),
        ),
        compiler_params=pltpu.CompilerParams(
            dimension_semantics=("parallel", "parallel"),
            vmem_limit_bytes=vmem_limit),
    )(xin, wk)

    # Tiny XLA glue: reduce per-image stats -> per-channel scale/shift.
    m_total = float(N * H * W)
    s = jnp.sum(stats, axis=0)                                # (2, Cout)
    mean = s[0] / m_total
    var = jnp.maximum(s[1] / m_total - mean * mean, 0.0)      # clamp >= 0
    inv = jax.lax.rsqrt(var + BN_EPS)
    scale = (p["gamma"] * inv).astype(jnp.float32).reshape(1, Cout)
    shift = (p["beta"] - mean * p["gamma"] * inv).astype(jnp.float32).reshape(1, Cout)

    th = _row_tile(H, W, tc)
    out = pl.pallas_call(
        _bn_lrelu_kernel,
        out_shape=jax.ShapeDtypeStruct((N, H, W, Cout), act_dtype),
        grid=(N, H // th, n_ct),
        in_specs=[
            pl.BlockSpec((1, th, W, tc), lambda n, h, c: (n, h, 0, c)),
            pl.BlockSpec((1, tc), lambda n, h, c: (0, c)),
            pl.BlockSpec((1, tc), lambda n, h, c: (0, c)),
        ],
        out_specs=pl.BlockSpec((1, th, W, tc), lambda n, h, c: (n, h, 0, c)),
        compiler_params=pltpu.CompilerParams(
            dimension_semantics=("parallel", "parallel", "parallel"),
            vmem_limit_bytes=vmem_limit),
    )(y_raw, scale, shift)
    return out


# ----------------------------------------------------------------------------
# Contraction forward (matches the PyTorch module, NCHW interface)
# ----------------------------------------------------------------------------
def forward(params, x_nchw, out_dtype=jnp.float32):
    x = jnp.transpose(x_nchw, (0, 2, 3, 1))                   # NCHW -> NHWC
    a1 = conv_block(x, params["block1"], act_dtype=jnp.bfloat16)
    a2 = conv_block(a1, params["block2"], act_dtype=jnp.bfloat16)
    return jnp.transpose(a2, (0, 3, 1, 2)).astype(out_dtype)  # NHWC -> NCHW


# ----------------------------------------------------------------------------
# Deterministic parameter init (mirrors PyTorch defaults)
# ----------------------------------------------------------------------------
def init_params(key, in_channels, out_channels):
    k1, k2 = jax.random.split(key)

    def conv_block_p(k, cin, cout):
        kw, kb = jax.random.split(k)
        bound = 1.0 / math.sqrt(cin * 9)
        return {
            "w": jax.random.uniform(kw, (cout, cin, 3, 3), jnp.float32, -bound, bound),
            "b": jax.random.uniform(kb, (cout,), jnp.float32, -bound, bound),
            "gamma": jnp.ones((cout,), jnp.float32),          # BatchNorm2d weight init
            "beta": jnp.zeros((cout,), jnp.float32),          # BatchNorm2d bias init
        }

    return {
        "block1": conv_block_p(k1, in_channels, out_channels),
        "block2": conv_block_p(k2, out_channels, out_channels),
    }


# ----------------------------------------------------------------------------
# Pure-JAX f32 reference (includes the bias, which cancels under train-mode BN)
# ----------------------------------------------------------------------------
def _ref_forward(params, x_nchw):
    x = x_nchw
    for blk in ("block1", "block2"):
        p = params[blk]
        y = jax.lax.conv_general_dilated(
            x, p["w"], window_strides=(1, 1), padding="SAME",
            dimension_numbers=("NCHW", "OIHW", "NCHW"))
        y = y + p["b"].reshape(1, -1, 1, 1)
        mean = jnp.mean(y, axis=(0, 2, 3), keepdims=True)
        var = jnp.mean((y - mean) ** 2, axis=(0, 2, 3), keepdims=True)
        z = (y - mean) * jax.lax.rsqrt(var + BN_EPS)
        z = z * p["gamma"].reshape(1, -1, 1, 1) + p["beta"].reshape(1, -1, 1, 1)
        x = jnp.maximum(z, NEG_SLOPE * z)
    return x


if __name__ == "__main__":
    key = jax.random.PRNGKey(0)
    kx_, kp_ = jax.random.split(key)

    N, Cin, Cout, H, W = 2, 4, 128, 16, 16
    x = jax.random.normal(kx_, (N, Cin, H, W), jnp.float32)   # PyTorch-style NCHW
    params = init_params(kp_, Cin, Cout)

    out = jax.jit(forward)(params, x)
    out = jax.block_until_ready(out)

    assert out.shape == (N, Cout, H, W), out.shape
    assert bool(jnp.all(jnp.isfinite(out)))

    # Loose tolerance: kernels run bf16 activations/weights vs f32 reference.
    ref = jax.jit(_ref_forward)(params, x)
    ref = jax.block_until_ready(ref)
    assert float(jnp.max(jnp.abs(out - ref))) < 0.3

    print("KERNEL_OK")
</pallas_src>

<mosaic_0001>
module attributes {stable_mosaic.version = 11 : i64} {
  func.func @_conv_stats_kernel(%arg0: i32, %arg1: i32, %arg2: memref<1x16x16x36xbf16, #tpu.memory_space<vmem>>, %arg3: memref<1x36x128xbf16, #tpu.memory_space<vmem>>, %arg4: memref<1x16x16x128xbf16, #tpu.memory_space<vmem>>, %arg5: memref<1x2x128xf32, #tpu.memory_space<vmem>>) attributes {dimension_semantics = [#tpu.dimension_semantics<parallel>, #tpu.dimension_semantics<parallel>], iteration_bounds = array<i64: 2, 1>, scalar_prefetch = 0 : i64, scratch_operands = 0 : i64, tpu.core_type = #tpu.core_type<tc>, window_params = [{transform_indices = @transform_0, window_bounds = array<i64: 1, 16, 16, 36>}, {transform_indices = @transform_1, window_bounds = array<i64: 1, 36, 128>}, {transform_indices = @transform_2, window_bounds = array<i64: 1, 16, 16, 128>}, {transform_indices = @transform_3, window_bounds = array<i64: 1, 2, 128>}]} {
    %c0 = arith.constant 0 : index
    %c0_0 = arith.constant 0 : index
    %c0_1 = arith.constant 0 : index
    %c0_2 = arith.constant 0 : index
    %0 = vector.load %arg2[%c0, %c0_0, %c0_1, %c0_2] : memref<1x16x16x36xbf16, #tpu.memory_space<vmem>>, vector<1x16x16x36xbf16>
    %1 = vector.shape_cast %0 : vector<1x16x16x36xbf16> to vector<16x16x36xbf16>
    %2 = vector.shape_cast %1 : vector<16x16x36xbf16> to vector<256x36xbf16>
    %c0_3 = arith.constant 0 : index
    %c0_4 = arith.constant 0 : index
    %c0_5 = arith.constant 0 : index
    %3 = vector.load %arg3[%c0_3, %c0_4, %c0_5] : memref<1x36x128xbf16, #tpu.memory_space<vmem>>, vector<1x36x128xbf16>
    %4 = vector.shape_cast %3 : vector<1x36x128xbf16> to vector<36x128xbf16>
    %cst = arith.constant dense<0.000000e+00> : vector<256x128xf32>
    %5 = tpu.matmul %2, %4, %cst {dimension_numbers = #tpu.dot_dimension_numbers<[1], [0], [0], [1], [0, 0, 1, 1], [], []>} : vector<256x36xbf16>, vector<36x128xbf16>, vector<256x128xf32> -> vector<256x128xf32>
    %6 = vector.shape_cast %5 : vector<256x128xf32> to vector<1x16x16x128xf32>
    %7 = arith.truncf %6 : vector<1x16x16x128xf32> to vector<1x16x16x128xbf16>
    %c0_6 = arith.constant 0 : index
    %c0_7 = arith.constant 0 : index
    %c0_8 = arith.constant 0 : index
    %c0_9 = arith.constant 0 : index
    %8 = vector.load %arg4[%c0_6, %c0_7, %c0_8, %c0_9] : memref<1x16x16x128xbf16, #tpu.memory_space<vmem>>, vector<1x16x16x128xbf16>
    tpu.vector_store %arg4[%c0_6, %c0_7, %c0_8, %c0_9], %7 {strides = array<i32>} : memref<1x16x16x128xbf16, #tpu.memory_space<vmem>>, vector<1x16x16x128xbf16>,
    %cst_10 = arith.constant dense<0.000000e+00> : vector<128xf32>
    %9 = vector.multi_reduction <add>, %5, %cst_10 [0] : vector<256x128xf32> to vector<128xf32>
    %10 = vector.shape_cast %9 : vector<128xf32> to vector<1x128xf32>
    %11 = arith.mulf %5, %5 : vector<256x128xf32>
    %cst_11 = arith.constant dense<0.000000e+00> : vector<128xf32>
    %12 = vector.multi_reduction <add>, %11, %cst_11 [0] : vector<256x128xf32> to vector<128xf32>
    %13 = vector.shape_cast %12 : vector<128xf32> to vector<1x128xf32>
    %14 = tpu.concatenate %10, %13 in 0 : vector<1x128xf32>, vector<1x128xf32> -> vector<2x128xf32>
    %15 = vector.shape_cast %14 : vector<2x128xf32> to vector<1x2x128xf32>
    %c0_12 = arith.constant 0 : index
    %c0_13 = arith.constant 0 : index
    %c0_14 = arith.constant 0 : index
    %16 = vector.load %arg5[%c0_12, %c0_13, %c0_14] : memref<1x2x128xf32, #tpu.memory_space<vmem>>, vector<1x2x128xf32>
    tpu.vector_store %arg5[%c0_12, %c0_13, %c0_14], %15 {strides = array<i32>} : memref<1x2x128xf32, #tpu.memory_space<vmem>>, vector<1x2x128xf32>,
    return
  }
  func.func @transform_0(%arg0: i32, %arg1: i32) -> (i32, i32, i32, i32) {
    %c0_i32 = arith.constant 0 : i32
    %c0_i32_0 = arith.constant 0 : i32
    %c0_i32_1 = arith.constant 0 : i32
    %c0_i32_2 = arith.constant 0 : i32
    return %arg0, %c0_i32, %c0_i32_0, %c0_i32_1 : i32, i32, i32, i32
  }
  func.func @transform_1(%arg0: i32, %arg1: i32) -> (i32, i32, i32) {
    %c0_i32 = arith.constant 0 : i32
    %c0_i32_0 = arith.constant 0 : i32
    %c0_i32_1 = arith.constant 0 : i32
    return %c0_i32, %c0_i32_0, %arg1 : i32, i32, i32
  }
  func.func @transform_2(%arg0: i32, %arg1: i32) -> (i32, i32, i32, i32) {
    %c0_i32 = arith.constant 0 : i32
    %c0_i32_0 = arith.constant 0 : i32
    %c0_i32_1 = arith.constant 0 : i32
    return %arg0, %c0_i32, %c0_i32_0, %arg1 : i32, i32, i32, i32
  }
  func.func @transform_3(%arg0: i32, %arg1: i32) -> (i32, i32, i32) {
    %c0_i32 = arith.constant 0 : i32
    %c0_i32_0 = arith.constant 0 : i32
    return %arg0, %c0_i32, %arg1 : i32, i32, i32
  }
}

module attributes {stable_mosaic.version = 11 : i64} {
  func.func @_bn_lrelu_kernel(%arg0: i32, %arg1: i32, %arg2: i32, %arg3: memref<1x16x16x128xbf16, #tpu.memory_space<vmem>>, %arg4: memref<1x128xf32, #tpu.memory_space<vmem>>, %arg5: memref<1x128xf32, #tpu.memory_space<vmem>>, %arg6: memref<1x16x16x128xbf16, #tpu.memory_space<vmem>>) attributes {dimension_semantics = [#tpu.dimension_semantics<parallel>, #tpu.dimension_semantics<parallel>, #tpu.dimension_semantics<parallel>], iteration_bounds = array<i64: 2, 1, 1>, scalar_prefetch = 0 : i64, scratch_operands = 0 : i64, tpu.core_type = #tpu.core_type<tc>, window_params = [{transform_indices = @transform_0, window_bounds = array<i64: 1, 16, 16, 128>}, {transform_indices = @transform_1, window_bounds = array<i64: 1, 128>}, {transform_indices = @transform_2, window_bounds = array<i64: 1, 128>}, {transform_indices = @transform_3, window_bounds = array<i64: 1, 16, 16, 128>}]} {
    %c0 = arith.constant 0 : index
    %c0_0 = arith.constant 0 : index
    %c0_1 = arith.constant 0 : index
    %c0_2 = arith.constant 0 : index
    %0 = vector.load %arg3[%c0, %c0_0, %c0_1, %c0_2] : memref<1x16x16x128xbf16, #tpu.memory_space<vmem>>, vector<1x16x16x128xbf16>
    %1 = arith.extf %0 : vector<1x16x16x128xbf16> to vector<1x16x16x128xf32>
    %c0_3 = arith.constant 0 : index
    %c0_4 = arith.constant 0 : index
    %2 = vector.load %arg4[%c0_3, %c0_4] : memref<1x128xf32, #tpu.memory_space<vmem>>, vector<1x128xf32>
    %3 = vector.shape_cast %2 : vector<1x128xf32> to vector<1x1x1x128xf32>
    %4 = vector.broadcast %3 : vector<1x1x1x128xf32> to vector<1x16x16x128xf32>
    %5 = arith.mulf %1, %4 : vector<1x16x16x128xf32>
    %c0_5 = arith.constant 0 : index
    %c0_6 = arith.constant 0 : index
    %6 = vector.load %arg5[%c0_5, %c0_6] : memref<1x128xf32, #tpu.memory_space<vmem>>, vector<1x128xf32>
    %7 = vector.shape_cast %6 : vector<1x128xf32> to vector<1x1x1x128xf32>
    %8 = vector.broadcast %7 : vector<1x1x1x128xf32> to vector<1x16x16x128xf32>
    %9 = arith.addf %5, %8 : vector<1x16x16x128xf32>
    %cst = arith.constant 0.00999999977 : f32
    %10 = vector.broadcast %cst : f32 to vector<1x16x16x128xf32>
    %11 = arith.mulf %10, %9 : vector<1x16x16x128xf32>
    %12 = arith.maximumf %9, %11 : vector<1x16x16x128xf32>
    %13 = arith.truncf %12 : vector<1x16x16x128xf32> to vector<1x16x16x128xbf16>
    %c0_7 = arith.constant 0 : index
    %c0_8 = arith.constant 0 : index
    %c0_9 = arith.constant 0 : index
    %c0_10 = arith.constant 0 : index
    %14 = vector.load %arg6[%c0_7, %c0_8, %c0_9, %c0_10] : memref<1x16x16x128xbf16, #tpu.memory_space<vmem>>, vector<1x16x16x128xbf16>
    tpu.vector_store %arg6[%c0_7, %c0_8, %c0_9, %c0_10], %13 {strides = array<i32>} : memref<1x16x16x128xbf16, #tpu.memory_space<vmem>>, vector<1x16x16x128xbf16>,
    return
  }
  func.func @transform_0(%arg0: i32, %arg1: i32, %arg2: i32) -> (i32, i32, i32, i32) {
    %c0_i32 = arith.constant 0 : i32
    %c0_i32_0 = arith.constant 0 : i32
    return %arg0, %arg1, %c0_i32, %arg2 : i32, i32, i32, i32
  }
  func.func @transform_1(%arg0: i32, %arg1: i32, %arg2: i32) -> (i32, i32) {
    %c0_i32 = arith.constant 0 : i32
    %c0_i32_0 = arith.constant 0 : i32
    return %c0_i32, %arg2 : i32, i32
  }
  func.func @transform_2(%arg0: i32, %arg1: i32, %arg2: i32) -> (i32, i32) {
    %c0_i32 = arith.constant 0 : i32
    %c0_i32_0 = arith.constant 0 : i32
    return %c0_i32, %arg2 : i32, i32
  }
  func.func @transform_3(%arg0: i32, %arg1: i32, %arg2: i32) -> (i32, i32, i32, i32) {
    %c0_i32 = arith.constant 0 : i32
    %c0_i32_0 = arith.constant 0 : i32
    return %arg0, %arg1, %c0_i32, %arg2 : i32, i32, i32, i32
  }
}

module attributes {stable_mosaic.version = 11 : i64} {
  func.func @_conv_stats_kernel(%arg0: i32, %arg1: i32, %arg2: memref<1x18x18x128xbf16, #tpu.memory_space<vmem>>, %arg3: memref<9x128x128xbf16, #tpu.memory_space<vmem>>, %arg4: memref<1x16x16x128xbf16, #tpu.memory_space<vmem>>, %arg5: memref<1x2x128xf32, #tpu.memory_space<vmem>>) attributes {dimension_semantics = [#tpu.dimension_semantics<parallel>, #tpu.dimension_semantics<parallel>], iteration_bounds = array<i64: 2, 1>, scalar_prefetch = 0 : i64, scratch_operands = 0 : i64, tpu.core_type = #tpu.core_type<tc>, window_params = [{transform_indices = @transform_0, window_bounds = array<i64: 1, 18, 18, 128>}, {transform_indices = @transform_1, window_bounds = array<i64: 9, 128, 128>}, {transform_indices = @transform_2, window_bounds = array<i64: 1, 16, 16, 128>}, {transform_indices = @transform_3, window_bounds = array<i64: 1, 2, 128>}]} {
    %c0 = arith.constant 0 : index
    %c0_0 = arith.constant 0 : index
    %c0_1 = arith.constant 0 : index
    %c0_2 = arith.constant 0 : index
    %0 = vector.load %arg2[%c0, %c0_0, %c0_1, %c0_2] : memref<1x18x18x128xbf16, #tpu.memory_space<vmem>>, vector<1x16x16x128xbf16>
    %1 = vector.shape_cast %0 : vector<1x16x16x128xbf16> to vector<16x16x128xbf16>
    %2 = vector.shape_cast %1 : vector<16x16x128xbf16> to vector<256x128xbf16>
    %c0_3 = arith.constant 0 : index
    %c0_4 = arith.constant 0 : index
    %c0_5 = arith.constant 0 : index
    %3 = vector.load %arg3[%c0_3, %c0_4, %c0_5] : memref<9x128x128xbf16, #tpu.memory_space<vmem>>, vector<1x128x128xbf16>
    %4 = vector.shape_cast %3 : vector<1x128x128xbf16> to vector<128x128xbf16>
    %cst = arith.constant dense<0.000000e+00> : vector<256x128xf32>
    %5 = tpu.matmul %2, %4, %cst {dimension_numbers = #tpu.dot_dimension_numbers<[1], [0], [0], [1], [0, 0, 1, 1], [], []>} : vector<256x128xbf16>, vector<128x128xbf16>, vector<256x128xf32> -> vector<256x128xf32>
    %c0_6 = arith.constant 0 : index
    %c0_7 = arith.constant 0 : index
    %c1 = arith.constant 1 : index
    %c0_8 = arith.constant 0 : index
    %6 = vector.load %arg2[%c0_6, %c0_7, %c1, %c0_8] : memref<1x18x18x128xbf16, #tpu.memory_space<vmem>>, vector<1x16x16x128xbf16>
    %7 = vector.shape_cast %6 : vector<1x16x16x128xbf16> to vector<16x16x128xbf16>
    %8 = vector.shape_cast %7 : vector<16x16x128xbf16> to vector<256x128xbf16>
    %c1_9 = arith.constant 1 : index
    %c0_10 = arith.constant 0 : index
    %c0_11 = arith.constant 0 : index
    %9 = vector.load %arg3[%c1_9, %c0_10, %c0_11] : memref<9x128x128xbf16, #tpu.memory_space<vmem>>, vector<1x128x128xbf16>
    %10 = vector.shape_cast %9 : vector<1x128x128xbf16> to vector<128x128xbf16>
    %cst_12 = arith.constant dense<0.000000e+00> : vector<256x128xf32>
    %11 = tpu.matmul %8, %10, %cst_12 {dimension_numbers = #tpu.dot_dimension_numbers<[1], [0], [0], [1], [0, 0, 1, 1], [], []>} : vector<256x128xbf16>, vector<128x128xbf16>, vector<256x128xf32> -> vector<256x128xf32>
    %12 = arith.addf %5, %11 : vector<256x128xf32>
    %c0_13 = arith.constant 0 : index
    %c0_14 = arith.constant 0 : index
    %c2 = arith.constant 2 : index
    %c0_15 = arith.constant 0 : index
    %13 = vector.load %arg2[%c0_13, %c0_14, %c2, %c0_15] : memref<1x18x18x128xbf16, #tpu.memory_space<vmem>>, vector<1x16x16x128xbf16>
    %14 = vector.shape_cast %13 : vector<1x16x16x128xbf16> to vector<16x16x128xbf16>
    %15 = vector.shape_cast %14 : vector<16x16x128xbf16> to vector<256x128xbf16>
    %c2_16 = arith.constant 2 : index
    %c0_17 = arith.constant 0 : index
    %c0_18 = arith.constant 0 : index
    %16 = vector.load %arg3[%c2_16, %c0_17, %c0_18] : memref<9x128x128xbf16, #tpu.memory_space<vmem>>, vector<1x128x128xbf16>
    %17 = vector.shape_cast %16 : vector<1x128x128xbf16> to vector<128x128xbf16>
    %cst_19 = arith.constant dense<0.000000e+00> : vector<256x128xf32>
    %18 = tpu.matmul %15, %17, %cst_19 {dimension_numbers = #tpu.dot_dimension_numbers<[1], [0], [0], [1], [0, 0, 1, 1], [], []>} : vector<256x128xbf16>, vector<128x128xbf16>, vector<256x128xf32> -> vector<256x128xf32>
    %19 = arith.addf %12, %18 : vector<256x128xf32>
    %c0_20 = arith.constant 0 : index
    %c1_21 = arith.constant 1 : index
    %c0_22 = arith.constant 0 : index
    %c0_23 = arith.constant 0 : index
    %20 = vector.load %arg2[%c0_20, %c1_21, %c0_22, %c0_23] : memref<1x18x18x128xbf16, #tpu.memory_space<vmem>>, vector<1x16x16x128xbf16>
    %21 = vector.shape_cast %20 : vector<1x16x16x128xbf16> to vector<16x16x128xbf16>
    %22 = vector.shape_cast %21 : vector<16x16x128xbf16> to vector<256x128xbf16>
    %c3 = arith.constant 3 : index
    %c0_24 = arith.constant 0 : index
    %c0_25 = arith.constant 0 : index
    %23 = vector.load %arg3[%c3, %c0_24, %c0_25] : memref<9x128x128xbf16, #tpu.memory_space<vmem>>, vector<1x128x128xbf16>
    %24 = vector.shape_cast %23 : vector<1x128x128xbf16> to vector<128x128xbf16>
    %cst_26 = arith.constant dense<0.000000e+00> : vector<256x128xf32>
    %25 = tpu.matmul %22, %24, %cst_26 {dimension_numbers = #tpu.dot_dimension_numbers<[1], [0], [0], [1], [0, 0, 1, 1], [], []>} : vector<256x128xbf16>, vector<128x128xbf16>, vector<256x128xf32> -> vector<256x128xf32>
    %26 = arith.addf %19, %25 : vector<256x128xf32>
    %c0_27 = arith.constant 0 : index
    %c1_28 = arith.constant 1 : index
    %c1_29 = arith.constant 1 : index
    %c0_30 = arith.constant 0 : index
    %27 = vector.load %arg2[%c0_27, %c1_28, %c1_29, %c0_30] : memref<1x18x18x128xbf16, #tpu.memory_space<vmem>>, vector<1x16x16x128xbf16>
    %28 = vector.shape_cast %27 : vector<1x16x16x128xbf16> to vector<16x16x128xbf16>
    %29 = vector.shape_cast %28 : vector<16x16x128xbf16> to vector<256x128xbf16>
    %c4 = arith.constant 4 : index
    %c0_31 = arith.constant 0 : index
    %c0_32 = arith.constant 0 : index
    %30 = vector.load %arg3[%c4, %c0_31, %c0_32] : memref<9x128x128xbf16, #tpu.memory_space<vmem>>, vector<1x128x128xbf16>
    %31 = vector.shape_cast %30 : vector<1x128x128xbf16> to vector<128x128xbf16>
    %cst_33 = arith.constant dense<0.000000e+00> : vector<256x128xf32>
    %32 = tpu.matmul %29, %31, %cst_33 {dimension_numbers = #tpu.dot_dimension_numbers<[1], [0], [0], [1], [0, 0, 1, 1], [], []>} : vector<256x128xbf16>, vector<128x128xbf16>, vector<256x128xf32> -> vector<256x128xf32>
    %33 = arith.addf %26, %32 : vector<256x128xf32>
    %c0_34 = arith.constant 0 : index
    %c1_35 = arith.constant 1 : index
    %c2_36 = arith.constant 2 : index
    %c0_37 = arith.constant 0 : index
    %34 = vector.load %arg2[%c0_34, %c1_35, %c2_36, %c0_37] : memref<1x18x18x128xbf16, #tpu.memory_space<vmem>>, vector<1x16x16x128xbf16>
    %35 = vector.shape_cast %34 : vector<1x16x16x128xbf16> to vector<16x16x128xbf16>
    %36 = vector.shape_cast %35 : vector<16x16x128xbf16> to vector<256x128xbf16>
    %c5 = arith.constant 5 : index
    %c0_38 = arith.constant 0 : index
    %c0_39 = arith.constant 0 : index
    %37 = vector.load %arg3[%c5, %c0_38, %c0_39] : memref<9x128x128xbf16, #tpu.memory_space<vmem>>, vector<1x128x128xbf16>
    %38 = vector.shape_cast %37 : vector<1x128x128xbf16> to vector<128x128xbf16>
    %cst_40 = arith.constant dense<0.000000e+00> : vector<256x128xf32>
    %39 = tpu.matmul %36, %38, %cst_40 {dimension_numbers = #tpu.dot_dimension_numbers<[1], [0], [0], [1], [0, 0, 1, 1], [], []>} : vector<256x128xbf16>, vector<128x128xbf16>, vector<256x128xf32> -> vector<256x128xf32>
    %40 = arith.addf %33, %39 : vector<256x128xf32>
    %c0_41 = arith.constant 0 : index
    %c2_42 = arith.constant 2 : index
    %c0_43 = arith.constant 0 : index
    %c0_44 = arith.constant 0 : index
    %41 = vector.load %arg2[%c0_41, %c2_42, %c0_43, %c0_44] : memref<1x18x18x128xbf16, #tpu.memory_space<vmem>>, vector<1x16x16x128xbf16>
    %42 = vector.shape_cast %41 : vector<1x16x16x128xbf16> to vector<16x16x128xbf16>
    %43 = vector.shape_cast %42 : vector<16x16x128xbf16> to vector<256x128xbf16>
    %c6 = arith.constant 6 : index
    %c0_45 = arith.constant 0 : index
    %c0_46 = arith.constant 0 : index
    %44 = vector.load %arg3[%c6, %c0_45, %c0_46] : memref<9x128x128xbf16, #tpu.memory_space<vmem>>, vector<1x128x128xbf16>
    %45 = vector.shape_cast %44 : vector<1x128x128xbf16> to vector<128x128xbf16>
    %cst_47 = arith.constant dense<0.000000e+00> : vector<256x128xf32>
    %46 = tpu.matmul %43, %45, %cst_47 {dimension_numbers = #tpu.dot_dimension_numbers<[1], [0], [0], [1], [0, 0, 1, 1], [], []>} : vector<256x128xbf16>, vector<128x128xbf16>, vector<256x128xf32> -> vector<256x128xf32>
    %47 = arith.addf %40, %46 : vector<256x128xf32>
    %c0_48 = arith.constant 0 : index
    %c2_49 = arith.constant 2 : index
    %c1_50 = arith.constant 1 : index
    %c0_51 = arith.constant 0 : index
    %48 = vector.load %arg2[%c0_48, %c2_49, %c1_50, %c0_51] : memref<1x18x18x128xbf16, #tpu.memory_space<vmem>>, vector<1x16x16x128xbf16>
    %49 = vector.shape_cast %48 : vector<1x16x16x128xbf16> to vector<16x16x128xbf16>
    %50 = vector.shape_cast %49 : vector<16x16x128xbf16> to vector<256x128xbf16>
    %c7 = arith.constant 7 : index
    %c0_52 = arith.constant 0 : index
    %c0_53 = arith.constant 0 : index
    %51 = vector.load %arg3[%c7, %c0_52, %c0_53] : memref<9x128x128xbf16, #tpu.memory_space<vmem>>, vector<1x128x128xbf16>
    %52 = vector.shape_cast %51 : vector<1x128x128xbf16> to vector<128x128xbf16>
    %cst_54 = arith.constant dense<0.000000e+00> : vector<256x128xf32>
    %53 = tpu.matmul %50, %52, %cst_54 {dimension_numbers = #tpu.dot_dimension_numbers<[1], [0], [0], [1], [0, 0, 1, 1], [], []>} : vector<256x128xbf16>, vector<128x128xbf16>, vector<256x128xf32> -> vector<256x128xf32>
    %54 = arith.addf %47, %53 : vector<256x128xf32>
    %c0_55 = arith.constant 0 : index
    %c2_56 = arith.constant 2 : index
    %c2_57 = arith.constant 2 : index
    %c0_58 = arith.constant 0 : index
    %55 = vector.load %arg2[%c0_55, %c2_56, %c2_57, %c0_58] : memref<1x18x18x128xbf16, #tpu.memory_space<vmem>>, vector<1x16x16x128xbf16>
    %56 = vector.shape_cast %55 : vector<1x16x16x128xbf16> to vector<16x16x128xbf16>
    %57 = vector.shape_cast %56 : vector<16x16x128xbf16> to vector<256x128xbf16>
    %c8 = arith.constant 8 : index
    %c0_59 = arith.constant 0 : index
    %c0_60 = arith.constant 0 : index
    %58 = vector.load %arg3[%c8, %c0_59, %c0_60] : memref<9x128x128xbf16, #tpu.memory_space<vmem>>, vector<1x128x128xbf16>
    %59 = vector.shape_cast %58 : vector<1x128x128xbf16> to vector<128x128xbf16>
    %cst_61 = arith.constant dense<0.000000e+00> : vector<256x128xf32>
    %60 = tpu.matmul %57, %59, %cst_61 {dimension_numbers = #tpu.dot_dimension_numbers<[1], [0], [0], [1], [0, 0, 1, 1], [], []>} : vector<256x128xbf16>, vector<128x128xbf16>, vector<256x128xf32> -> vector<256x128xf32>
    %61 = arith.addf %54, %60 : vector<256x128xf32>
    %62 = vector.shape_cast %61 : vector<256x128xf32> to vector<1x16x16x128xf32>
    %63 = arith.truncf %62 : vector<1x16x16x128xf32> to vector<1x16x16x128xbf16>
    %c0_62 = arith.constant 0 : index
    %c0_63 = arith.constant 0 : index
    %c0_64 = arith.constant 0 : index
    %c0_65 = arith.constant 0 : index
    %64 = vector.load %arg4[%c0_62, %c0_63, %c0_64, %c0_65] : memref<1x16x16x128xbf16, #tpu.memory_space<vmem>>, vector<1x16x16x128xbf16>
    tpu.vector_store %arg4[%c0_62, %c0_63, %c0_64, %c0_65], %63 {strides = array<i32>} : memref<1x16x16x128xbf16, #tpu.memory_space<vmem>>, vector<1x16x16x128xbf16>,
    %cst_66 = arith.constant dense<0.000000e+00> : vector<128xf32>
    %65 = vector.multi_reduction <add>, %61, %cst_66 [0] : vector<256x128xf32> to vector<128xf32>
    %66 = vector.shape_cast %65 : vector<128xf32> to vector<1x128xf32>
    %67 = arith.mulf %61, %61 : vector<256x128xf32>
    %cst_67 = arith.constant dense<0.000000e+00> : vector<128xf32>
    %68 = vector.multi_reduction <add>, %67, %cst_67 [0] : vector<256x128xf32> to vector<128xf32>
    %69 = vector.shape_cast %68 : vector<128xf32> to vector<1x128xf32>
    %70 = tpu.concatenate %66, %69 in 0 : vector<1x128xf32>, vector<1x128xf32> -> vector<2x128xf32>
    %71 = vector.shape_cast %70 : vector<2x128xf32> to vector<1x2x128xf32>
    %c0_68 = arith.constant 0 : index
    %c0_69 = arith.constant 0 : index
    %c0_70 = arith.constant 0 : index
    %72 = vector.load %arg5[%c0_68, %c0_69, %c0_70] : memref<1x2x128xf32, #tpu.memory_space<vmem>>, vector<1x2x128xf32>
    tpu.vector_store %arg5[%c0_68, %c0_69, %c0_70], %71 {strides = array<i32>} : memref<1x2x128xf32, #tpu.memory_space<vmem>>, vector<1x2x128xf32>,
    return
  }
  func.func @transform_0(%arg0: i32, %arg1: i32) -> (i32, i32, i32, i32) {
    %c0_i32 = arith.constant 0 : i32
    %c0_i32_0 = arith.constant 0 : i32
    %c0_i32_1 = arith.constant 0 : i32
    %c0_i32_2 = arith.constant 0 : i32
    return %arg0, %c0_i32, %c0_i32_0, %c0_i32_1 : i32, i32, i32, i32
  }
  func.func @transform_1(%arg0: i32, %arg1: i32) -> (i32, i32, i32) {
    %c0_i32 = arith.constant 0 : i32
    %c0_i32_0 = arith.constant 0 : i32
    %c0_i32_1 = arith.constant 0 : i32
    return %c0_i32, %c0_i32_0, %arg1 : i32, i32, i32
  }
  func.func @transform_2(%arg0: i32, %arg1: i32) -> (i32, i32, i32, i32) {
    %c0_i32 = arith.constant 0 : i32
    %c0_i32_0 = arith.constant 0 : i32
    %c0_i32_1 = arith.constant 0 : i32
    return %arg0, %c0_i32, %c0_i32_0, %arg1 : i32, i32, i32, i32
  }
  func.func @transform_3(%arg0: i32, %arg1: i32) -> (i32, i32, i32) {
    %c0_i32 = arith.constant 0 : i32
    %c0_i32_0 = arith.constant 0 : i32
    return %arg0, %c0_i32, %arg1 : i32, i32, i32
  }
}

</mosaic_0001>

<llo_original>
// kernel: forward.5
$region0: #{forward.5}
  #allocation0 [shape = 'u32[]', space=smem, size = 0x4, offset = 0x4, fixed_abs, tag = 'smem constant byte address 0x4 - core index']
  #allocation1 [shape = 'u32[144,128]{1,0:T(1,128)}', space=vmem, size = 0x12000, scoped, tag = 'internal scratch']
  %s0 = inlined_call_operand.vmem [shape: bf16[2,16,16,128], index: 0, kind: input, shape index: {}]
  %s1 = inlined_call_operand.vmem [shape: f32[1,128], index: 1, kind: input, shape index: {}]
  %s2 = inlined_call_operand.vmem [shape: f32[1,128], index: 2, kind: input, shape index: {}]
  %s3 = inlined_call_operand.vmem [shape: bf16[2,16,16,128], index: 3, kind: output, shape index: {}]
  %s4 = sld [smem:[#allocation0]]
  $region45: #{forward.5} parent=0
    _
  %s6 = ssub.s32 1, %s4
  %s7 = scalar_select 0, %s6, %s4
  loop: start=0, step=1, limit=4
  $region2: #{forward.5} parent=0 // loop_pre_header
    _
  $region3: #{forward.5} parent=0 // loop_header
    %s9 = sphi 0, %s13
    %p10 = scmp.ge.s32.totalorder %s9, 4
    %s16 = sphi 0, %s35
    %s17 = sphi 0, %s31
    %s18 = sphi 0, %s27
    %s19 = sphi 0, %s16
    %s20 = sphi 0, %s17
    %s21 = sphi 0, %s18
    %s22 = sphi 0, %s19
    %s23 = sphi 0, %s20
    %s24 = sphi 0, %s21
    %s42 = sphi 0, %s44
    %s45 = sphi 0, %s42
    %s46 = sphi 0, %s45
    %s62 = sphi 0, %s46
    %s68 = sphi 0, %s70
    %s71 = sphi 0, %s68
    %s72 = sphi 0, %s71
    %s88 = sphi 0, %s72
    %s94 = sphi 0, %s96
    %s97 = sphi 0, %s94
    %s98 = sphi 0, %s97
    %s114 = sphi 0, %s98
    %s124 = sphi 0, %s126
    %s127 = sphi 0, %s124
    %s128 = sphi 0, %s127
    %s144 = sphi 0, %s128
  $region4: #{forward.5} parent=0 // loop_header_branch
    %12 = sbr.rel (%p10) target = $region8
  $region5: #{forward.5} parent=0 // loop_body
    %s14 = ssub.s32 %s9, 1
    %s15 = ssub.s32 %s9, 2
    %s25 = sadd.s32 1, %s18
    %p26 = scmp.ge.s32.totalorder %s25, 1
    %s27 = scalar_select %p26, 0, %s25
    %s28 = sadd.s32 1, %s17
    %s29 = scalar_select %p26, %s28, %s17
    %p30 = scmp.ge.s32.totalorder %s29, 1
    %s31 = scalar_select %p30, 0, %s29
    %s32 = sadd.s32 1, %s16
    %s33 = scalar_select %p30, %s32, %s16
    %p34 = scmp.ge.s32.totalorder %s33, 2
    %s35 = scalar_select %p34, 0, %s33
    %s36 = ssub.s32 %s16, %s35
    %s37 = ssub.s32 %s17, %s31
    %s38 = sor.u32 %s36, %s37
    %s39 = ssub.s32 %s18, %s27
    %s40 = sor.u32 %s38, %s39
    %p41 = scmp.eq.s32.totalorder %s40, 0
    %s43 = sadd.s32 %s42, 1
    %s44 = scalar_select %p41, %s42, %s43
    %p47 = pneg %p41
    %p48 = scmp.eq.s32.totalorder %s9, 1
    %p49 = por %p47, %p48
    %p50 = scmp.ne.s32.totalorder %s42, %s45
    %p51 = scmp.eq.s32.totalorder %s9, 0
    %p52 = por %p50, %p51
    %p53 = scmp.ne.s32.totalorder %s42, %s45
    %p54 = scmp.eq.s32.totalorder %s14, 1
    %p55 = por %p53, %p54
    %p56 = scmp.ne.s32.totalorder %s45, %s46
    %p57 = scmp.eq.s32.totalorder %s14, 0
    %p58 = por %p56, %p57
    %p59 = scmp.ne.s32.totalorder %s45, %s46
    %p60 = scmp.eq.s32.totalorder %s15, 1
    %p61 = por %p59, %p60
    %p63 = scmp.ne.s32.totalorder %s46, %s62
    %p64 = scmp.eq.s32.totalorder %s15, 0
    %p65 = por %p63, %p64
    %s66 = ssub.s32 %s18, %s27
    %p67 = scmp.eq.s32.totalorder %s66, 0
    %s69 = sadd.s32 %s68, 1
    %s70 = scalar_select %p67, %s68, %s69
    %p73 = pneg %p67
    %p74 = scmp.eq.s32.totalorder %s9, 1
    %p75 = por %p73, %p74
    %p76 = scmp.ne.s32.totalorder %s68, %s71
    %p77 = scmp.eq.s32.totalorder %s9, 0
    %p78 = por %p76, %p77
    %p79 = scmp.ne.s32.totalorder %s68, %s71
    %p80 = scmp.eq.s32.totalorder %s14, 1
    %p81 = por %p79, %p80
    %p82 = scmp.ne.s32.totalorder %s71, %s72
    %p83 = scmp.eq.s32.totalorder %s14, 0
    %p84 = por %p82, %p83
    %p85 = scmp.ne.s32.totalorder %s71, %s72
    %p86 = scmp.eq.s32.totalorder %s15, 1
    %p87 = por %p85, %p86
    %p89 = scmp.ne.s32.totalorder %s72, %s88
    %p90 = scmp.eq.s32.totalorder %s15, 0
    %p91 = por %p89, %p90
    %s92 = ssub.s32 %s18, %s27
    %p93 = scmp.eq.s32.totalorder %s92, 0
    %s95 = sadd.s32 %s94, 1
    %s96 = scalar_select %p93, %s94, %s95
    %p99 = pneg %p93
    %p100 = scmp.eq.s32.totalorder %s9, 1
    %p101 = por %p99, %p100
    %p102 = scmp.ne.s32.totalorder %s94, %s97
    %p103 = scmp.eq.s32.totalorder %s9, 0
    %p104 = por %p102, %p103
    %p105 = scmp.ne.s32.totalorder %s94, %s97
    %p106 = scmp.eq.s32.totalorder %s14, 1
    %p107 = por %p105, %p106
    %p108 = scmp.ne.s32.totalorder %s97, %s98
    %p109 = scmp.eq.s32.totalorder %s14, 0
    %p110 = por %p108, %p109
    %p111 = scmp.ne.s32.totalorder %s97, %s98
    %p112 = scmp.eq.s32.totalorder %s15, 1
    %p113 = por %p111, %p112
    %p115 = scmp.ne.s32.totalorder %s98, %s114
    %p116 = scmp.eq.s32.totalorder %s15, 0
    %p117 = por %p115, %p116
    %s118 = ssub.s32 %s16, %s35
    %s119 = ssub.s32 %s17, %s31
    %s120 = sor.u32 %s118, %s119
    %s121 = ssub.s32 %s18, %s27
    %s122 = sor.u32 %s120, %s121
    %p123 = scmp.eq.s32.totalorder %s122, 0
    %s125 = sadd.s32 %s124, 1
    %s126 = scalar_select %p123, %s124, %s125
    %p129 = pneg %p123
    %p130 = scmp.eq.s32.totalorder %s9, 1
    %p131 = por %p129, %p130
    %p132 = scmp.ne.s32.totalorder %s124, %s127
    %p133 = scmp.eq.s32.totalorder %s9, 0
    %p134 = por %p132, %p133
    %p135 = scmp.ne.s32.totalorder %s124, %s127
    %p136 = scmp.eq.s32.totalorder %s14, 1
    %p137 = por %p135, %p136
    %p138 = scmp.ne.s32.totalorder %s127, %s128
    %p139 = scmp.eq.s32.totalorder %s14, 0
    %p140 = por %p138, %p139
    %p141 = scmp.ne.s32.totalorder %s127, %s128
    %p142 = scmp.eq.s32.totalorder %s15, 1
    %p143 = por %p141, %p142
    %p145 = scmp.ne.s32.totalorder %s128, %s144
    %p146 = scmp.eq.s32.totalorder %s15, 0
    %p147 = por %p145, %p146
    %p148 = scmp.le.s32.totalorder 1, %s9
    %p149 = scmp.lt.s32.totalorder %s9, 3
    %p150 = pnand %p148, %p149
    %p151 = pneg %p150
    // Predicated region
    $region9: #{forward.5} parent=5 // pred_check
      _
    $region10: #{forward.5} parent=5 // pred_check_branch
      %153 = sbr.rel (%p150) target = $region12
    $region11: #{forward.5} parent=5 // pred_region
      %s154 = ssub.s32 %s9, 1
      // Predicated region
      $region13: #{forward.5} parent=11 // pred_check
        %p155 = pneg %p84
      $region14: #{forward.5} parent=11 // pred_check_branch
        %157 = sbr.rel (%p155) target = $region16
      $region15: #{forward.5} parent=11 // pred_region
        %p158 = scmp.lt.s32.totalorder %s21, 0
        %s159 = scalar_select %p158, %s21, 0
        %s160 = scalar_lea.vmem %s1, %s159
      $region16: #{forward.5} parent=11 // pred_fallthru
        _
      // Predicated region
      $region17: #{forward.5} parent=11 // pred_check
        %p161 = pneg %p110
      $region18: #{forward.5} parent=11 // pred_check_branch
        %163 = sbr.rel (%p161) target = $region20
      $region19: #{forward.5} parent=11 // pred_region
        %p164 = scmp.lt.s32.totalorder %s21, 0
        %s165 = scalar_select %p164, %s21, 0
        %s166 = scalar_lea.vmem %s2, %s165
      $region20: #{forward.5} parent=11 // pred_fallthru
        _
    $region12: #{forward.5} parent=5 // pred_fallthru
      _
    %p167 = scmp.lt.s32.totalorder %s9, 2
    // Predicated region
    $region21: #{forward.5} parent=5 // pred_check
      %p168 = pneg %p167
    $region22: #{forward.5} parent=5 // pred_check_branch
      %170 = sbr.rel (%p168) target = $region24
    $region23: #{forward.5} parent=5 // pred_region
      // Predicated region
      $region25: #{forward.5} parent=23 // pred_check
        %p171 = pneg %p52
      $region26: #{forward.5} parent=23 // pred_check_branch
        %173 = sbr.rel (%p171) target = $region28
      $region27: #{forward.5} parent=23 // pred_region
        %s174 = smul.u32 16, %s17
        %p175 = scmp.lt.s32.totalorder %s16, 1
        %s176 = scalar_select %p175, %s16, 1
        %p177 = scmp.lt.s32.totalorder %s174, 15
        %s178 = scalar_select %p177, %s174, 15
        %p179 = scmp.lt.s32.totalorder %s18, 0
        %s180 = scalar_select %p179, %s18, 0
        %s181 = smul.addr %s178, 2
        %s182 = sadd.s32 %s180, %s181
        %s183 = smul.addr %s176, 32
        %s184 = sadd.s32 %s182, %s183
        %s185 = smul.addr %s184, 4
        %s186 = scalar_lea.vmem %s0, %s185
        %s187 = smul.u32 16, %s17
      $region28: #{forward.5} parent=23 // pred_fallthru
        _
    $region24: #{forward.5} parent=5 // pred_fallthru
      _
    %p188 = scmp.le.s32.totalorder 1, %s9
    %p189 = scmp.lt.s32.totalorder %s9, 3
    %p190 = pnand %p188, %p189
    %p191 = pneg %p190
    // Predicated region
    $region29: #{forward.5} parent=5 // pred_check
      _
    $region30: #{forward.5} parent=5 // pred_check_branch
      %193 = sbr.rel (%p190) target = $region32
    $region31: #{forward.5} parent=5 // pred_region
      %s194 = ssub.s32 %s9, 1
      %s195 = smul.u32 16, %s20
      %p196 = scmp.lt.s32.totalorder %s19, 1
      %s197 = scalar_select %p196, %s19, 1
      %p198 = scmp.lt.s32.totalorder %s195, 15
      %s199 = scalar_select %p198, %s195, 15
      %p200 = scmp.lt.s32.totalorder %s21, 0
      %s201 = scalar_select %p200, %s21, 0
      %s202 = smul.addr %s199, 2
      %s203 = sadd.s32 %s201, %s202
      %s204 = smul.addr %s197, 32
      %s205 = sadd.s32 %s203, %s204
      %s206 = smul.addr %s205, 4
      %s207 = scalar_lea.vmem %s0, %s206
      %p208 = pneg %p58
      %p209 = pneg %p55
      %p210 = scmp.lt.s32.totalorder %s21, 0
      %s211 = scalar_select %p210, %s21, 0
      %s212 = scalar_lea.vmem %s1, %s211
      %p213 = pneg %p84
      %p214 = pneg %p81
      %p215 = scmp.lt.s32.totalorder %s21, 0
      %s216 = scalar_select %p215, %s21, 0
      %s217 = scalar_lea.vmem %s2, %s216
      %p218 = pneg %p110
      %p219 = pneg %p107
      %p220 = pneg %p140
      %p221 = pneg %p137
      %s222 = smul.u32 16, %s20
      %p223 = scmp.lt.s32.totalorder %s19, 1
      %s224 = scalar_select %p223, %s19, 1
      %p225 = scmp.lt.s32.totalorder %s222, 15
      %s226 = scalar_select %p225, %s222, 15
      %p227 = scmp.lt.s32.totalorder %s21, 0
      %s228 = scalar_select %p227, %s21, 0
      %s229 = smul.addr %s226, 2
      %s230 = sadd.s32 %s228, %s229
      %s231 = smul.addr %s224, 32
      %s232 = sadd.s32 %s230, %s231
      %s233 = smul.addr %s232, 4
      %s234 = scalar_lea.vmem %s3, %s233
      %s235 = smul.u32 16, %s20
      %p236 = scmp.lt.s32.totalorder %s19, 1
      %s237 = scalar_select %p236, %s19, 1
      %p238 = scmp.lt.s32.totalorder %s235, 15
      %s239 = scalar_select %p238, %s235, 15
      %p240 = scmp.lt.s32.totalorder %s21, 0
      %s241 = scalar_select %p240, %s21, 0
      %s242 = smul.addr %s239, 2
      %s243 = sadd.s32 %s241, %s242
      %s244 = smul.addr %s237, 32
      %s245 = sadd.s32 %s243, %s244
      %s246 = smul.addr %s245, 4
      %s247 = scalar_lea.vmem %s0, %s246
      %s248 = smul.u32 16, %s20
      %p249 = scmp.lt.s32.totalorder %s21, 0
      %s250 = scalar_select %p249, %s21, 0
      %s251 = scalar_lea.vmem %s1, %s250
      %p252 = scmp.lt.s32.totalorder %s21, 0
      %s253 = scalar_select %p252, %s21, 0
      %s254 = scalar_lea.vmem %s2, %s253
      %s255 = smul.u32 16, %s20
      %p256 = scmp.lt.s32.totalorder %s19, 1
      %s257 = scalar_select %p256, %s19, 1
      %p258 = scmp.lt.s32.totalorder %s255, 15
      %s259 = scalar_select %p258, %s255, 15
      %p260 = scmp.lt.s32.totalorder %s21, 0
      %s261 = scalar_select %p260, %s21, 0
      %s262 = smul.addr %s259, 2
      %s263 = sadd.s32 %s261, %s262
      %s264 = smul.addr %s257, 32
      %s265 = sadd.s32 %s263, %s264
      %s266 = smul.addr %s265, 4
      %s267 = scalar_lea.vmem %s3, %s266
      %s268 = smul.u32 16, %s20
      %v269 = vld [vmem:[%s247] sm:$0xf]
      %v270 = vld [vmem:[%s247 + $0x4] sm:$0xf]
      %v271 = vld [vmem:[%s247 + $0x8] sm:$0xf]
      %v272 = vld [vmem:[%s247 + $0xc] sm:$0xf]
      %v273 = vld [vmem:[%s247 + $0x10] sm:$0xf]
      %v274 = vld [vmem:[%s247 + $0x14] sm:$0xf]
      %v275 = vld [vmem:[%s247 + $0x18] sm:$0xf]
      %v276 = vld [vmem:[%s247 + $0x1c] sm:$0xf]
      %v277 = vld [vmem:[%s247 + $0x20] sm:$0xf]
      %v278 = vld [vmem:[%s247 + $0x24] sm:$0xf]
      %v279 = vld [vmem:[%s247 + $0x28] sm:$0xf]
      %v280 = vld [vmem:[%s247 + $0x2c] sm:$0xf]
      %v281 = vld [vmem:[%s247 + $0x30] sm:$0xf]
      %v282 = vld [vmem:[%s247 + $0x34] sm:$0xf]
      %v283 = vld [vmem:[%s247 + $0x38] sm:$0xf]
      %v284 = vld [vmem:[%s247 + $0x3c] sm:$0xf]
      %v285 = vld [vmem:[%s247 + $0x40] sm:$0xf]
      %v286 = vld [vmem:[%s247 + $0x44] sm:$0xf]
      %v287 = vld [vmem:[%s247 + $0x48] sm:$0xf]
      %v288 = vld [vmem:[%s247 + $0x4c] sm:$0xf]
      %v289 = vld [vmem:[%s247 + $0x50] sm:$0xf]
      %v290 = vld [vmem:[%s247 + $0x54] sm:$0xf]
      %v291 = vld [vmem:[%s247 + $0x58] sm:$0xf]
      %v292 = vld [vmem:[%s247 + $0x5c] sm:$0xf]
      %v293 = vld [vmem:[%s247 + $0x60] sm:$0xf]
      %v294 = vld [vmem:[%s247 + $0x64] sm:$0xf]
      %v295 = vld [vmem:[%s247 + $0x68] sm:$0xf]
      %v296 = vld [vmem:[%s247 + $0x6c] sm:$0xf]
      %v297 = vld [vmem:[%s247 + $0x70] sm:$0xf]
      %v298 = vld [vmem:[%s247 + $0x74] sm:$0xf]
      %v299 = vld [vmem:[%s247 + $0x78] sm:$0xf]
      %v300 = vld [vmem:[%s247 + $0x7c] sm:$0xf]
      %v301 = vunpack.c.l.bf16 %v269
      %v302 = vunpack.c.l.bf16 %v270
      %v303 = vunpack.c.l.bf16 %v271
      %v304 = vunpack.c.l.bf16 %v272
      %v305 = vunpack.c.l.bf16 %v273
      %v306 = vunpack.c.l.bf16 %v274
      %v307 = vunpack.c.l.bf16 %v275
      %v308 = vunpack.c.l.bf16 %v276
      %v309 = vunpack.c.l.bf16 %v277
      %v310 = vunpack.c.l.bf16 %v278
      %v311 = vunpack.c.l.bf16 %v279
      %v312 = vunpack.c.l.bf16 %v280
      %v313 = vunpack.c.l.bf16 %v281
      %v314 = vunpack.c.l.bf16 %v282
      %v315 = vunpack.c.l.bf16 %v283
      %v316 = vunpack.c.l.bf16 %v284
      %v317 = vunpack.c.l.bf16 %v285
      %v318 = vunpack.c.l.bf16 %v286
      %v319 = vunpack.c.l.bf16 %v287
      %v320 = vunpack.c.l.bf16 %v288
      %v321 = vunpack.c.l.bf16 %v289
      %v322 = vunpack.c.l.bf16 %v290
      %v323 = vunpack.c.l.bf16 %v291
      %v324 = vunpack.c.l.bf16 %v292
      %v325 = vunpack.c.l.bf16 %v293
      %v326 = vunpack.c.l.bf16 %v294
      %v327 = vunpack.c.l.bf16 %v295
      %v328 = vunpack.c.l.bf16 %v296
      %v329 = vunpack.c.l.bf16 %v297
      %v330 = vunpack.c.l.bf16 %v298
      %v331 = vunpack.c.l.bf16 %v299
      %v332 = vunpack.c.l.bf16 %v300
      %v333 = vld [vmem:[%s251] sm:$0x1]
      %v335 = vlaneseq
      %v336 = vshrl.u32 %v335, 7
      %v337 = vsub.s32 0, %v336
      %v338 = vrot.slane %v333, %v337
      %v340 = vmul.f32 %v301, %v338
      %v341 = vmul.f32 %v302, %v338
      %v342 = vmul.f32 %v303, %v338
      %v343 = vmul.f32 %v304, %v338
      %v344 = vmul.f32 %v305, %v338
      %v345 = vmul.f32 %v306, %v338
      %v346 = vmul.f32 %v307, %v338
      %v347 = vmul.f32 %v308, %v338
      %v348 = vmul.f32 %v309, %v338
      %v349 = vmul.f32 %v310, %v338
      %v350 = vmul.f32 %v311, %v338
      %v351 = vmul.f32 %v312, %v338
      %v352 = vmul.f32 %v313, %v338
      %v353 = vmul.f32 %v314, %v338
      %v354 = vmul.f32 %v315, %v338
      %v355 = vmul.f32 %v316, %v338
      %v356 = vmul.f32 %v317, %v338
      %v357 = vmul.f32 %v318, %v338
      %v358 = vmul.f32 %v319, %v338
      %v359 = vmul.f32 %v320, %v338
      %v360 = vmul.f32 %v321, %v338
      %v361 = vmul.f32 %v322, %v338
      %v362 = vmul.f32 %v323, %v338
      %v363 = vmul.f32 %v324, %v338
      %v364 = vmul.f32 %v325, %v338
      %v365 = vmul.f32 %v326, %v338
      %v366 = vmul.f32 %v327, %v338
      %v367 = vmul.f32 %v328, %v338
      %v368 = vmul.f32 %v329, %v338
      %v369 = vmul.f32 %v330, %v338
      %v370 = vmul.f32 %v331, %v338
      %v371 = vmul.f32 %v332, %v338
      %v372 = vld [vmem:[%s254] sm:$0x1]
      %v374 = vlaneseq
      %v375 = vshrl.u32 %v374, 7
      %v376 = vsub.s32 0, %v375
      %v377 = vrot.slane %v372, %v376
      %v379 = vadd.f32 %v340, %v377
      %v380 = vadd.f32 %v341, %v377
      %v381 = vadd.f32 %v342, %v377
      %v382 = vadd.f32 %v343, %v377
      %v383 = vadd.f32 %v344, %v377
      %v384 = vadd.f32 %v345, %v377
      %v385 = vadd.f32 %v346, %v377
      %v386 = vadd.f32 %v347, %v377
      %v387 = vadd.f32 %v348, %v377
      %v388 = vadd.f32 %v349, %v377
      %v389 = vadd.f32 %v350, %v377
      %v390 = vadd.f32 %v351, %v377
      %v391 = vadd.f32 %v352, %v377
      %v392 = vadd.f32 %v353, %v377
      %v393 = vadd.f32 %v354, %v377
      %v394 = vadd.f32 %v355, %v377
      %v395 = vadd.f32 %v356, %v377
      %v396 = vadd.f32 %v357, %v377
      %v397 = vadd.f32 %v358, %v377
      %v398 = vadd.f32 %v359, %v377
      %v399 = vadd.f32 %v360, %v377
      %v400 = vadd.f32 %v361, %v377
      %v401 = vadd.f32 %v362, %v377
      %v402 = vadd.f32 %v363, %v377
      %v403 = vadd.f32 %v364, %v377
      %v404 = vadd.f32 %v365, %v377
      %v405 = vadd.f32 %v366, %v377
      %v406 = vadd.f32 %v367, %v377
      %v407 = vadd.f32 %v368, %v377
      %v408 = vadd.f32 %v369, %v377
      %v409 = vadd.f32 %v370, %v377
      %v410 = vadd.f32 %v371, %v377
      %v411 = vmul.f32 %v379, 0.01
      %v412 = vmul.f32 %v380, 0.01
      %v413 = vmul.f32 %v381, 0.01
      %v414 = vmul.f32 %v382, 0.01
      %v415 = vmul.f32 %v383, 0.01
      %v416 = vmul.f32 %v384, 0.01
      %v417 = vmul.f32 %v385, 0.01
      %v418 = vmul.f32 %v386, 0.01
      %v419 = vmul.f32 %v387, 0.01
      %v420 = vmul.f32 %v388, 0.01
      %v421 = vmul.f32 %v389, 0.01
      %v422 = vmul.f32 %v390, 0.01
      %v423 = vmul.f32 %v391, 0.01
      %v424 = vmul.f32 %v392, 0.01
      %v425 = vmul.f32 %v393, 0.01
      %v426 = vmul.f32 %v394, 0.01
      %v427 = vmul.f32 %v395, 0.01
      %v428 = vmul.f32 %v396, 0.01
      %v429 = vmul.f32 %v397, 0.01
      %v430 = vmul.f32 %v398, 0.01
      %v431 = vmul.f32 %v399, 0.01
      %v432 = vmul.f32 %v400, 0.01
      %v433 = vmul.f32 %v401, 0.01
      %v434 = vmul.f32 %v402, 0.01
      %v435 = vmul.f32 %v403, 0.01
      %v436 = vmul.f32 %v404, 0.01
      %v437 = vmul.f32 %v405, 0.01
      %v438 = vmul.f32 %v406, 0.01
      %v439 = vmul.f32 %v407, 0.01
      %v440 = vmul.f32 %v408, 0.01
      %v441 = vmul.f32 %v409, 0.01
      %v442 = vmul.f32 %v410, 0.01
      %v443 = vmax.f32 %v379, %v411
      %v444 = vmax.f32 %v380, %v412
      %v445 = vmax.f32 %v381, %v413
      %v446 = vmax.f32 %v382, %v414
      %v447 = vmax.f32 %v383, %v415
      %v448 = vmax.f32 %v384, %v416
      %v449 = vmax.f32 %v385, %v417
      %v450 = vmax.f32 %v386, %v418
      %v451 = vmax.f32 %v387, %v419
      %v452 = vmax.f32 %v388, %v420
      %v453 = vmax.f32 %v389, %v421
      %v454 = vmax.f32 %v390, %v422
      %v455 = vmax.f32 %v391, %v423
      %v456 = vmax.f32 %v392, %v424
      %v457 = vmax.f32 %v393, %v425
      %v458 = vmax.f32 %v394, %v426
      %v459 = vmax.f32 %v395, %v427
      %v460 = vmax.f32 %v396, %v428
      %v461 = vmax.f32 %v397, %v429
      %v462 = vmax.f32 %v398, %v430
      %v463 = vmax.f32 %v399, %v431
      %v464 = vmax.f32 %v400, %v432
      %v465 = vmax.f32 %v401, %v433
      %v466 = vmax.f32 %v402, %v434
      %v467 = vmax.f32 %v403, %v435
      %v468 = vmax.f32 %v404, %v436
      %v469 = vmax.f32 %v405, %v437
      %v470 = vmax.f32 %v406, %v438
      %v471 = vmax.f32 %v407, %v439
      %v472 = vmax.f32 %v408, %v440
      %v473 = vmax.f32 %v409, %v441
      %v474 = vmax.f32 %v410, %v442
      %v475 = vpack.c.bf16 %v444, %v443
      %v476 = vpack.c.bf16 %v446, %v445
      %v477 = vpack.c.bf16 %v448, %v447
      %v478 = vpack.c.bf16 %v450, %v449
      %v479 = vpack.c.bf16 %v452, %v451
      %v480 = vpack.c.bf16 %v454, %v453
      %v481 = vpack.c.bf16 %v456, %v455
      %v482 = vpack.c.bf16 %v458, %v457
      %v483 = vpack.c.bf16 %v460, %v459
      %v484 = vpack.c.bf16 %v462, %v461
      %v485 = vpack.c.bf16 %v464, %v463
      %v486 = vpack.c.bf16 %v466, %v465
      %v487 = vpack.c.bf16 %v468, %v467
      %v488 = vpack.c.bf16 %v470, %v469
      %v489 = vpack.c.bf16 %v472, %v471
      %v490 = vpack.c.bf16 %v474, %v473
      %v507 = vunpack.c.l.b16 %v475
      %v508 = vunpack.c.h.b16 %v475
      %v509 = vunpack.c.l.b16 %v476
      %v510 = vunpack.c.h.b16 %v476
      %v511 = vunpack.c.l.b16 %v477
      %v512 = vunpack.c.h.b16 %v477
      %v513 = vunpack.c.l.b16 %v478
      %v514 = vunpack.c.h.b16 %v478
      %v515 = vunpack.c.l.b16 %v479
      %v516 = vunpack.c.h.b16 %v479
      %v517 = vunpack.c.l.b16 %v480
      %v518 = vunpack.c.h.b16 %v480
      %v519 = vunpack.c.l.b16 %v481
      %v520 = vunpack.c.h.b16 %v481
      %v521 = vunpack.c.l.b16 %v482
      %v522 = vunpack.c.h.b16 %v482
      %v523 = vunpack.c.l.b16 %v483
      %v524 = vunpack.c.h.b16 %v483
      %v525 = vunpack.c.l.b16 %v484
      %v526 = vunpack.c.h.b16 %v484
      %v527 = vunpack.c.l.b16 %v485
      %v528 = vunpack.c.h.b16 %v485
      %v529 = vunpack.c.l.b16 %v486
      %v530 = vunpack.c.h.b16 %v486
      %v531 = vunpack.c.l.b16 %v487
      %v532 = vunpack.c.h.b16 %v487
      %v533 = vunpack.c.l.b16 %v488
      %v534 = vunpack.c.h.b16 %v488
      %v535 = vunpack.c.l.b16 %v489
      %v536 = vunpack.c.h.b16 %v489
      %v537 = vunpack.c.l.b16 %v490
      %v538 = vunpack.c.h.b16 %v490
      %v539 = vpack.c.b16 %v507, %v507
      %v540 = vpack.c.b16 %v508, %v508
      %v541 = vpack.c.b16 %v509, %v509
      %v542 = vpack.c.b16 %v510, %v510
      %v543 = vpack.c.b16 %v511, %v511
      %v544 = vpack.c.b16 %v512, %v512
      %v545 = vpack.c.b16 %v513, %v513
      %v546 = vpack.c.b16 %v514, %v514
      %v547 = vpack.c.b16 %v515, %v515
      %v548 = vpack.c.b16 %v516, %v516
      %v549 = vpack.c.b16 %v517, %v517
      %v550 = vpack.c.b16 %v518, %v518
      %v551 = vpack.c.b16 %v519, %v519
      %v552 = vpack.c.b16 %v520, %v520
      %v553 = vpack.c.b16 %v521, %v521
      %v554 = vpack.c.b16 %v522, %v522
      %v555 = vpack.c.b16 %v523, %v523
      %v556 = vpack.c.b16 %v524, %v524
      %v557 = vpack.c.b16 %v525, %v525
      %v558 = vpack.c.b16 %v526, %v526
      %v559 = vpack.c.b16 %v527, %v527
      %v560 = vpack.c.b16 %v528, %v528
      %v561 = vpack.c.b16 %v529, %v529
      %v562 = vpack.c.b16 %v530, %v530
      %v563 = vpack.c.b16 %v531, %v531
      %v564 = vpack.c.b16 %v532, %v532
      %v565 = vpack.c.b16 %v533, %v533
      %v566 = vpack.c.b16 %v534, %v534
      %v567 = vpack.c.b16 %v535, %v535
      %v568 = vpack.c.b16 %v536, %v536
      %v569 = vpack.c.b16 %v537, %v537
      %v570 = vpack.c.b16 %v538, %v538
      %603 = vst [vmem:[%s267] sm:$0xf] %v539
      %604 = vst [vmem:[%s267 + $0x4] sm:$0xf] %v540
      %605 = vst [vmem:[%s267 + $0x8] sm:$0xf] %v541
      %606 = vst [vmem:[%s267 + $0xc] sm:$0xf] %v542
      %607 = vst [vmem:[%s267 + $0x10] sm:$0xf] %v543
      %608 = vst [vmem:[%s267 + $0x14] sm:$0xf] %v544
      %609 = vst [vmem:[%s267 + $0x18] sm:$0xf] %v545
      %610 = vst [vmem:[%s267 + $0x1c] sm:$0xf] %v546
      %611 = vst [vmem:[%s267 + $0x20] sm:$0xf] %v547
      %612 = vst [vmem:[%s267 + $0x24] sm:$0xf] %v548
      %613 = vst [vmem:[%s267 + $0x28] sm:$0xf] %v549
      %614 = vst [vmem:[%s267 + $0x2c] sm:$0xf] %v550
      %615 = vst [vmem:[%s267 + $0x30] sm:$0xf] %v551
      %616 = vst [vmem:[%s267 + $0x34] sm:$0xf] %v552
      %617 = vst [vmem:[%s267 + $0x38] sm:$0xf] %v553
      %618 = vst [vmem:[%s267 + $0x3c] sm:$0xf] %v554
      %619 = vst [vmem:[%s267 + $0x40] sm:$0xf] %v555
      %620 = vst [vmem:[%s267 + $0x44] sm:$0xf] %v556
      %621 = vst [vmem:[%s267 + $0x48] sm:$0xf] %v557
      %622 = vst [vmem:[%s267 + $0x4c] sm:$0xf] %v558
      %623 = vst [vmem:[%s267 + $0x50] sm:$0xf] %v559
      %624 = vst [vmem:[%s267 + $0x54] sm:$0xf] %v560
      %625 = vst [vmem:[%s267 + $0x58] sm:$0xf] %v561
      %626 = vst [vmem:[%s267 + $0x5c] sm:$0xf] %v562
      %627 = vst [vmem:[%s267 + $0x60] sm:$0xf] %v563
      %628 = vst [vmem:[%s267 + $0x64] sm:$0xf] %v564
      %629 = vst [vmem:[%s267 + $0x68] sm:$0xf] %v565
      %630 = vst [vmem:[%s267 + $0x6c] sm:$0xf] %v566
      %631 = vst [vmem:[%s267 + $0x70] sm:$0xf] %v567
      %632 = vst [vmem:[%s267 + $0x74] sm:$0xf] %v568
      %633 = vst [vmem:[%s267 + $0x78] sm:$0xf] %v569
      %634 = vst [vmem:[%s267 + $0x7c] sm:$0xf] %v570
      %s635 = smul.u32 16, %s20
      %p636 = scmp.lt.s32.totalorder %s19, 1
      %s637 = scalar_select %p636, %s19, 1
      %p638 = scmp.lt.s32.totalorder %s635, 15
      %s639 = scalar_select %p638, %s635, 15
      %p640 = scmp.lt.s32.totalorder %s21, 0
      %s641 = scalar_select %p640, %s21, 0
      %s642 = smul.addr %s639, 2
      %s643 = sadd.s32 %s641, %s642
      %s644 = smul.addr %s637, 32
      %s645 = sadd.s32 %s643, %s644
      %s646 = smul.addr %s645, 4
      %s647 = scalar_lea.vmem %s3, %s646
      // Predicated region
      $region33: #{forward.5} parent=31 // pred_check
        %p648 = pneg %p137
      $region34: #{forward.5} parent=31 // pred_check_branch
        %650 = sbr.rel (%p648) target = $region36
      $region35: #{forward.5} parent=31 // pred_region
        %s651 = smul.u32 16, %s20
      $region36: #{forward.5} parent=31 // pred_fallthru
        _
    $region32: #{forward.5} parent=5 // pred_fallthru
      _
    %p652 = scmp.le.s32.totalorder 2, %s9
    // Predicated region
    $region37: #{forward.5} parent=5 // pred_check
      %p653 = pneg %p652
    $region38: #{forward.5} parent=5 // pred_check_branch
      %655 = sbr.rel (%p653) target = $region40
    $region39: #{forward.5} parent=5 // pred_region
      %s656 = ssub.s32 %s9, 2
      // Predicated region
      $region41: #{forward.5} parent=39 // pred_check
        %p657 = pneg %p143
      $region42: #{forward.5} parent=39 // pred_check_branch
        %659 = sbr.rel (%p657) target = $region44
      $region43: #{forward.5} parent=39 // pred_region
        %s660 = smul.u32 16, %s23
        %p661 = scmp.lt.s32.totalorder %s22, 1
        %s662 = scalar_select %p661, %s22, 1
        %p663 = scmp.lt.s32.totalorder %s660, 15
        %s664 = scalar_select %p663, %s660, 15
        %p665 = scmp.lt.s32.totalorder %s24, 0
        %s666 = scalar_select %p665, %s24, 0
        %s667 = smul.addr %s664, 2
        %s668 = sadd.s32 %s666, %s667
        %s669 = smul.addr %s662, 32
        %s670 = sadd.s32 %s668, %s669
        %s671 = smul.addr %s670, 4
        %s672 = scalar_lea.vmem %s3, %s671
      $region44: #{forward.5} parent=39 // pred_fallthru
        _
    $region40: #{forward.5} parent=5 // pred_fallthru
      _
  $region6: #{forward.5} parent=0 // loop_footer
    %s13 = sadd.s32 1, %s9
  $region7: #{forward.5} parent=0 // loop_footer_branch
    %8 = sbr.rel target = $region3
  $region8: #{forward.5} parent=0 // loop_exit
    _

// kernel: forward.4
$region0: #{forward.4}
  #allocation0 [shape = 'u32[]', space=smem, size = 0x4, offset = 0x4, fixed_abs, tag = 'smem constant byte address 0x4 - core index']
  #allocation1 [shape = 'u32[144,128]{1,0:T(1,128)}', space=vmem, size = 0x12000, scoped, tag = 'internal scratch']
  %s0 = inlined_call_operand.vmem [shape: bf16[2,16,16,36], index: 0, kind: input, shape index: {}]
  %s1 = inlined_call_operand.vmem [shape: bf16[1,36,128], index: 1, kind: input, shape index: {}]
  %s2 = inlined_call_operand.vmem [shape: bf16[2,16,16,128], index: 2, kind: output, shape index: {0}]
  %s3 = inlined_call_operand.vmem [shape: f32[2,2,128], index: 3, kind: output, shape index: {1}]
  %4 = xla_tuple %s2, %s3
  %s5 = sld [smem:[#allocation0]]
  $region49: #{forward.4} parent=0
    _
  %s7 = ssub.s32 1, %s5
  %s8 = scalar_select 0, %s7, %s5
  loop: start=0, step=1, limit=4
  $region2: #{forward.4} parent=0 // loop_pre_header
    _
  $region3: #{forward.4} parent=0 // loop_header
    %s10 = sphi 0, %s14
    %p11 = scmp.ge.s32.totalorder %s10, 4
    %s17 = sphi 0, %s29
    %s18 = sphi 0, %s25
    %s19 = sphi 0, %s17
    %s20 = sphi 0, %s18
    %s21 = sphi 0, %s19
    %s22 = sphi 0, %s20
    %s32 = sphi 0, %s34
    %s35 = sphi 0, %s32
    %s36 = sphi 0, %s35
    %s52 = sphi 0, %s36
    %s58 = sphi 0, %s60
    %s61 = sphi 0, %s58
    %s62 = sphi 0, %s61
    %s78 = sphi 0, %s62
    %s86 = sphi 0, %s88
    %s89 = sphi 0, %s86
    %s90 = sphi 0, %s89
    %s106 = sphi 0, %s90
    %s114 = sphi 0, %s116
    %s117 = sphi 0, %s114
    %s118 = sphi 0, %s117
    %s134 = sphi 0, %s118
  $region4: #{forward.4} parent=0 // loop_header_branch
    %13 = sbr.rel (%p11) target = $region8
  $region5: #{forward.4} parent=0 // loop_body
    %s15 = ssub.s32 %s10, 1
    %s16 = ssub.s32 %s10, 2
    %s23 = sadd.s32 1, %s18
    %p24 = scmp.ge.s32.totalorder %s23, 1
    %s25 = scalar_select %p24, 0, %s23
    %s26 = sadd.s32 1, %s17
    %s27 = scalar_select %p24, %s26, %s17
    %p28 = scmp.ge.s32.totalorder %s27, 2
    %s29 = scalar_select %p28, 0, %s27
    %s30 = ssub.s32 %s17, %s29
    %p31 = scmp.eq.s32.totalorder %s30, 0
    %s33 = sadd.s32 %s32, 1
    %s34 = scalar_select %p31, %s32, %s33
    %p37 = pneg %p31
    %p38 = scmp.eq.s32.totalorder %s10, 1
    %p39 = por %p37, %p38
    %p40 = scmp.ne.s32.totalorder %s32, %s35
    %p41 = scmp.eq.s32.totalorder %s10, 0
    %p42 = por %p40, %p41
    %p43 = scmp.ne.s32.totalorder %s32, %s35
    %p44 = scmp.eq.s32.totalorder %s15, 1
    %p45 = por %p43, %p44
    %p46 = scmp.ne.s32.totalorder %s35, %s36
    %p47 = scmp.eq.s32.totalorder %s15, 0
    %p48 = por %p46, %p47
    %p49 = scmp.ne.s32.totalorder %s35, %s36
    %p50 = scmp.eq.s32.totalorder %s16, 1
    %p51 = por %p49, %p50
    %p53 = scmp.ne.s32.totalorder %s36, %s52
    %p54 = scmp.eq.s32.totalorder %s16, 0
    %p55 = por %p53, %p54
    %s56 = ssub.s32 %s18, %s25
    %p57 = scmp.eq.s32.totalorder %s56, 0
    %s59 = sadd.s32 %s58, 1
    %s60 = scalar_select %p57, %s58, %s59
    %p63 = pneg %p57
    %p64 = scmp.eq.s32.totalorder %s10, 1
    %p65 = por %p63, %p64
    %p66 = scmp.ne.s32.totalorder %s58, %s61
    %p67 = scmp.eq.s32.totalorder %s10, 0
    %p68 = por %p66, %p67
    %p69 = scmp.ne.s32.totalorder %s58, %s61
    %p70 = scmp.eq.s32.totalorder %s15, 1
    %p71 = por %p69, %p70
    %p72 = scmp.ne.s32.totalorder %s61, %s62
    %p73 = scmp.eq.s32.totalorder %s15, 0
    %p74 = por %p72, %p73
    %p75 = scmp.ne.s32.totalorder %s61, %s62
    %p76 = scmp.eq.s32.totalorder %s16, 1
    %p77 = por %p75, %p76
    %p79 = scmp.ne.s32.totalorder %s62, %s78
    %p80 = scmp.eq.s32.totalorder %s16, 0
    %p81 = por %p79, %p80
    %s82 = ssub.s32 %s17, %s29
    %s83 = ssub.s32 %s18, %s25
    %s84 = sor.u32 %s82, %s83
    %p85 = scmp.eq.s32.totalorder %s84, 0
    %s87 = sadd.s32 %s86, 1
    %s88 = scalar_select %p85, %s86, %s87
    %p91 = pneg %p85
    %p92 = scmp.eq.s32.totalorder %s10, 1
    %p93 = por %p91, %p92
    %p94 = scmp.ne.s32.totalorder %s86, %s89
    %p95 = scmp.eq.s32.totalorder %s10, 0
    %p96 = por %p94, %p95
    %p97 = scmp.ne.s32.totalorder %s86, %s89
    %p98 = scmp.eq.s32.totalorder %s15, 1
    %p99 = por %p97, %p98
    %p100 = scmp.ne.s32.totalorder %s89, %s90
    %p101 = scmp.eq.s32.totalorder %s15, 0
    %p102 = por %p100, %p101
    %p103 = scmp.ne.s32.totalorder %s89, %s90
    %p104 = scmp.eq.s32.totalorder %s16, 1
    %p105 = por %p103, %p104
    %p107 = scmp.ne.s32.totalorder %s90, %s106
    %p108 = scmp.eq.s32.totalorder %s16, 0
    %p109 = por %p107, %p108
    %s110 = ssub.s32 %s17, %s29
    %s111 = ssub.s32 %s18, %s25
    %s112 = sor.u32 %s110, %s111
    %p113 = scmp.eq.s32.totalorder %s112, 0
    %s115 = sadd.s32 %s114, 1
    %s116 = scalar_select %p113, %s114, %s115
    %p119 = pneg %p113
    %p120 = scmp.eq.s32.totalorder %s10, 1
    %p121 = por %p119, %p120
    %p122 = scmp.ne.s32.totalorder %s114, %s117
    %p123 = scmp.eq.s32.totalorder %s10, 0
    %p124 = por %p122, %p123
    %p125 = scmp.ne.s32.totalorder %s114, %s117
    %p126 = scmp.eq.s32.totalorder %s15, 1
    %p127 = por %p125, %p126
    %p128 = scmp.ne.s32.totalorder %s117, %s118
    %p129 = scmp.eq.s32.totalorder %s15, 0
    %p130 = por %p128, %p129
    %p131 = scmp.ne.s32.totalorder %s117, %s118
    %p132 = scmp.eq.s32.totalorder %s16, 1
    %p133 = por %p131, %p132
    %p135 = scmp.ne.s32.totalorder %s118, %s134
    %p136 = scmp.eq.s32.totalorder %s16, 0
    %p137 = por %p135, %p136
    %p138 = scmp.le.s32.totalorder 1, %s10
    %p139 = scmp.lt.s32.totalorder %s10, 3
    %p140 = pnand %p138, %p139
    %p141 = pneg %p140
    // Predicated region
    $region9: #{forward.4} parent=5 // pred_check
      _
    $region10: #{forward.4} parent=5 // pred_check_branch
      %143 = sbr.rel (%p140) target = $region12
    $region11: #{forward.4} parent=5 // pred_region
      %s144 = ssub.s32 %s10, 1
      // Predicated region
      $region13: #{forward.4} parent=11 // pred_check
        %p145 = pneg %p74
      $region14: #{forward.4} parent=11 // pred_check_branch
        %147 = sbr.rel (%p145) target = $region16
      $region15: #{forward.4} parent=11 // pred_region
        %p148 = scmp.lt.s32.totalorder %s20, 0
        %s149 = scalar_select %p148, %s20, 0
        %s150 = smul.addr %s149, 4
        %s151 = scalar_lea.vmem %s1, %s150
      $region16: #{forward.4} parent=11 // pred_fallthru
        _
    $region12: #{forward.4} parent=5 // pred_fallthru
      _
    %p152 = scmp.lt.s32.totalorder %s10, 2
    // Predicated region
    $region17: #{forward.4} parent=5 // pred_check
      %p153 = pneg %p152
    $region18: #{forward.4} parent=5 // pred_check_branch
      %155 = sbr.rel (%p153) target = $region20
    $region19: #{forward.4} parent=5 // pred_region
      // Predicated region
      $region21: #{forward.4} parent=19 // pred_check
        %p156 = pneg %p42
      $region22: #{forward.4} parent=19 // pred_check_branch
        %158 = sbr.rel (%p156) target = $region24
      $region23: #{forward.4} parent=19 // pred_region
        %p159 = scmp.lt.s32.totalorder %s17, 1
        %s160 = scalar_select %p159, %s17, 1
        %s161 = smul.addr %s160, 32
        %s162 = smul.addr %s161, 4
        %s163 = scalar_lea.vmem %s0, %s162
      $region24: #{forward.4} parent=19 // pred_fallthru
        _
    $region20: #{forward.4} parent=5 // pred_fallthru
      _
    %p164 = scmp.le.s32.totalorder 1, %s10
    %p165 = scmp.lt.s32.totalorder %s10, 3
    %p166 = pnand %p164, %p165
    %p167 = pneg %p166
    // Predicated region
    $region25: #{forward.4} parent=5 // pred_check
      _
    $region26: #{forward.4} parent=5 // pred_check_branch
      %169 = sbr.rel (%p166) target = $region28
    $region27: #{forward.4} parent=5 // pred_region
      %s170 = ssub.s32 %s10, 1
      %p171 = scmp.lt.s32.totalorder %s19, 1
      %s172 = scalar_select %p171, %s19, 1
      %s173 = smul.addr %s172, 32
      %s174 = smul.addr %s173, 4
      %s175 = scalar_lea.vmem %s0, %s174
      %p176 = pneg %p48
      %p177 = pneg %p45
      %p178 = scmp.lt.s32.totalorder %s20, 0
      %s179 = scalar_select %p178, %s20, 0
      %s180 = smul.addr %s179, 4
      %s181 = scalar_lea.vmem %s1, %s180
      %p182 = pneg %p74
      %p183 = pneg %p71
      %p184 = pneg %p102
      %p185 = pneg %p99
      %p186 = scmp.lt.s32.totalorder %s19, 1
      %s187 = scalar_select %p186, %s19, 1
      %p188 = scmp.lt.s32.totalorder %s20, 0
      %s189 = scalar_select %p188, %s20, 0
      %s190 = smul.addr %s187, 32
      %s191 = sadd.s32 %s189, %s190
      %s192 = smul.addr %s191, 4
      %s193 = scalar_lea.vmem %s2, %s192
      %p194 = pneg %p130
      %p195 = pneg %p127
      %p196 = scmp.lt.s32.totalorder %s19, 1
      %s197 = scalar_select %p196, %s19, 1
      %p198 = scmp.lt.s32.totalorder %s20, 0
      %s199 = scalar_select %p198, %s20, 0
      %s200 = sadd.s32 %s199, %s197
      %s201 = smul.addr %s200, 2
      %s202 = scalar_lea.vmem %s3, %s201
      %p203 = scmp.lt.s32.totalorder %s19, 1
      %s204 = scalar_select %p203, %s19, 1
      %s205 = smul.addr %s204, 32
      %s206 = smul.addr %s205, 4
      %s207 = scalar_lea.vmem %s0, %s206
      %p208 = scmp.lt.s32.totalorder %s20, 0
      %s209 = scalar_select %p208, %s20, 0
      %s210 = smul.addr %s209, 4
      %s211 = scalar_lea.vmem %s1, %s210
      %p212 = scmp.lt.s32.totalorder %s19, 1
      %s213 = scalar_select %p212, %s19, 1
      %p214 = scmp.lt.s32.totalorder %s20, 0
      %s215 = scalar_select %p214, %s20, 0
      %s216 = smul.addr %s213, 32
      %s217 = sadd.s32 %s215, %s216
      %s218 = smul.addr %s217, 4
      %s219 = scalar_lea.vmem %s2, %s218
      %p220 = scmp.lt.s32.totalorder %s19, 1
      %s221 = scalar_select %p220, %s19, 1
      %p222 = scmp.lt.s32.totalorder %s20, 0
      %s223 = scalar_select %p222, %s20, 0
      %s224 = sadd.s32 %s223, %s221
      %s225 = smul.addr %s224, 2
      %s226 = scalar_lea.vmem %s3, %s225
      %v228 = vld [vmem:[%s207] sm:$0xf]
      %v229 = vld [vmem:[%s207 + $0x4] sm:$0xf]
      %v230 = vld [vmem:[%s207 + $0x8] sm:$0xf]
      %v231 = vld [vmem:[%s207 + $0xc] sm:$0xf]
      %v232 = vld [vmem:[%s207 + $0x10] sm:$0xf]
      %v233 = vld [vmem:[%s207 + $0x14] sm:$0xf]
      %v234 = vld [vmem:[%s207 + $0x18] sm:$0xf]
      %v235 = vld [vmem:[%s207 + $0x1c] sm:$0xf]
      %v236 = vld [vmem:[%s207 + $0x20] sm:$0xf]
      %v237 = vld [vmem:[%s207 + $0x24] sm:$0xf]
      %v238 = vld [vmem:[%s207 + $0x28] sm:$0xf]
      %v239 = vld [vmem:[%s207 + $0x2c] sm:$0xf]
      %v240 = vld [vmem:[%s207 + $0x30] sm:$0xf]
      %v241 = vld [vmem:[%s207 + $0x34] sm:$0xf]
      %v242 = vld [vmem:[%s207 + $0x38] sm:$0xf]
      %v243 = vld [vmem:[%s207 + $0x3c] sm:$0xf]
      %v244 = vld [vmem:[%s207 + $0x40] sm:$0xf]
      %v245 = vld [vmem:[%s207 + $0x44] sm:$0xf]
      %v246 = vld [vmem:[%s207 + $0x48] sm:$0xf]
      %v247 = vld [vmem:[%s207 + $0x4c] sm:$0xf]
      %v248 = vld [vmem:[%s207 + $0x50] sm:$0xf]
      %v249 = vld [vmem:[%s207 + $0x54] sm:$0xf]
      %v250 = vld [vmem:[%s207 + $0x58] sm:$0xf]
      %v251 = vld [vmem:[%s207 + $0x5c] sm:$0xf]
      %v252 = vld [vmem:[%s207 + $0x60] sm:$0xf]
      %v253 = vld [vmem:[%s207 + $0x64] sm:$0xf]
      %v254 = vld [vmem:[%s207 + $0x68] sm:$0xf]
      %v255 = vld [vmem:[%s207 + $0x6c] sm:$0xf]
      %v256 = vld [vmem:[%s207 + $0x70] sm:$0xf]
      %v257 = vld [vmem:[%s207 + $0x74] sm:$0xf]
      %v258 = vld [vmem:[%s207 + $0x78] sm:$0xf]
      %v259 = vld [vmem:[%s207 + $0x7c] sm:$0xf]
      %v260 = vld [vmem:[%s211] sm:$0xf]
      %v261 = vld [vmem:[%s211 + $0x4] sm:$0xf]
      %v262 = vld [vmem:[%s211 + $0x8] sm:$0xf]
      %v263 = vld [vmem:[%s211 + $0xc] sm:$0xf]
      %v264 = vld [vmem:[%s211 + $0x10] sm:$0x3]
      %v297 = vunpack.c.l.b16 %v228
      %v298 = vunpack.c.l.b16 %v229
      %v299 = vunpack.c.l.b16 %v230
      %v300 = vunpack.c.l.b16 %v231
      %v301 = vunpack.c.l.b16 %v232
      %v302 = vunpack.c.l.b16 %v233
      %v303 = vunpack.c.l.b16 %v234
      %v304 = vunpack.c.l.b16 %v235
      %v305 = vunpack.c.l.b16 %v236
      %v306 = vunpack.c.l.b16 %v237
      %v307 = vunpack.c.l.b16 %v238
      %v308 = vunpack.c.l.b16 %v239
      %v309 = vunpack.c.l.b16 %v240
      %v310 = vunpack.c.l.b16 %v241
      %v311 = vunpack.c.l.b16 %v242
      %v312 = vunpack.c.l.b16 %v243
      %v313 = vunpack.c.l.b16 %v244
      %v314 = vunpack.c.l.b16 %v245
      %v315 = vunpack.c.l.b16 %v246
      %v316 = vunpack.c.l.b16 %v247
      %v317 = vunpack.c.l.b16 %v248
      %v318 = vunpack.c.l.b16 %v249
      %v319 = vunpack.c.l.b16 %v250
      %v320 = vunpack.c.l.b16 %v251
      %v321 = vunpack.c.l.b16 %v252
      %v322 = vunpack.c.l.b16 %v253
      %v323 = vunpack.c.l.b16 %v254
      %v324 = vunpack.c.l.b16 %v255
      %v325 = vunpack.c.l.b16 %v256
      %v326 = vunpack.c.l.b16 %v257
      %v327 = vunpack.c.l.b16 %v258
      %v328 = vunpack.c.l.b16 %v259
      %v329 = vpack.c.b16 %v298, %v297
      %v330 = vpack.c.b16 %v300, %v299
      %v331 = vpack.c.b16 %v302, %v301
      %v332 = vpack.c.b16 %v304, %v303
      %v333 = vpack.c.b16 %v306, %v305
      %v334 = vpack.c.b16 %v308, %v307
      %v335 = vpack.c.b16 %v310, %v309
      %v336 = vpack.c.b16 %v312, %v311
      %v337 = vpack.c.b16 %v314, %v313
      %v338 = vpack.c.b16 %v316, %v315
      %v339 = vpack.c.b16 %v318, %v317
      %v340 = vpack.c.b16 %v320, %v319
      %v341 = vpack.c.b16 %v322, %v321
      %v342 = vpack.c.b16 %v324, %v323
      %v343 = vpack.c.b16 %v326, %v325
      %v344 = vpack.c.b16 %v328, %v327
      %v350 = vunpack.c.l.b16 %v260
      %v351 = vunpack.c.l.b16 %v261
      %v352 = vunpack.c.l.b16 %v262
      %v353 = vunpack.c.l.b16 %v263
      %v354 = vunpack.c.l.b16 %v264
      %v355 = vpack.c.b16 %v351, %v350
      %v356 = vpack.c.b16 %v353, %v352
      %v357 = vpack.c.b16 %v354, %v354
      %vm360 = vcmask 293888
      %v362 = vsel %vm360, %v329, 0
      %v365 = vsel %vm360, %v330, 0
      %v368 = vsel %vm360, %v331, 0
      %v371 = vsel %vm360, %v332, 0
      %v374 = vsel %vm360, %v333, 0
      %v377 = vsel %vm360, %v334, 0
      %v380 = vsel %vm360, %v335, 0
      %v383 = vsel %vm360, %v336, 0
      %v386 = vsel %vm360, %v337, 0
      %v389 = vsel %vm360, %v338, 0
      %v392 = vsel %vm360, %v339, 0
      %v395 = vsel %vm360, %v340, 0
      %v398 = vsel %vm360, %v341, 0
      %v401 = vsel %vm360, %v342, 0
      %v404 = vsel %vm360, %v343, 0
      %v407 = vsel %vm360, %v344, 0
      %vm409 = vcmask 1041408
      %v411 = vsel %vm409, %v357, 0
      %413 = vmatprep.subr.bf16.mxu0 0
      %414 = vmatpush1.bf16.msra.mxu0 %v355
      %415 = vmatprep.subr.bf16.mxu0 0
      %416 = vmatpush1.bf16.msra.mxu0 %v356
      %417 = vmatprep.subr.bf16.mxu0 0
      %418 = vmatpush1.bf16.msra.mxu0 %v411
      %419 = vmatprep.subr.bf16.mxu0 0
      %420 = vmatpush1.bf16.msra.mxu0 0
      %421 = vmatprep.subr.bf16.mxu0 0
      %422 = vmatpush1.bf16.msra.mxu0 0
      %423 = vmatprep.subr.bf16.mxu0 0
      %424 = vmatpush1.bf16.msra.mxu0 0
      %425 = vmatprep.subr.bf16.mxu0 0
      %426 = vmatpush1.bf16.msra.mxu0 0
      %427 = vmatprep.subr.bf16.mxu0 0
      %428 = vmatpush1.bf16.msra.mxu0 0
      %429 = vmatprep.subr.bf16.mxu0 0
      %430 = vmatpush1.bf16.msra.mxu0 0
      %431 = vmatprep.subr.bf16.mxu0 0
      %432 = vmatpush1.bf16.msra.mxu0 0
      %433 = vmatprep.subr.bf16.mxu0 0
      %434 = vmatpush1.bf16.msra.mxu0 0
      %435 = vmatprep.subr.bf16.mxu0 0
      %436 = vmatpush1.bf16.msra.mxu0 0
      %437 = vmatprep.subr.bf16.mxu0 0
      %438 = vmatpush1.bf16.msra.mxu0 0
      %439 = vmatprep.subr.bf16.mxu0 0
      %440 = vmatpush1.bf16.msra.mxu0 0
      %441 = vmatprep.subr.bf16.mxu0 0
      %442 = vmatpush1.bf16.msra.mxu0 0
      %443 = vmatprep.subr.bf16.mxu0 0
      %444 = vmatpush1.bf16.msra.mxu0 0
      %445 = vmatprep.mubr.bf16.mxu0 0
      %446 = vmatmul.mubr.bf16.gmra.mrb[0].mxu0 %v362
      %v447 = vpop.f32.mrb[0].mxu0
      %v448 = vadd.f32 0.0, %v447
      %v449 = vpop.f32.mrb[0].mxu0
      %v450 = vpop.f32.mrb[0].mxu0
      %v451 = vadd.f32 0.0, %v450
      %v452 = vpop.f32.mrb[0].mxu0
      %453 = vmatprep.mubr.bf16.mxu0 0
      %454 = vmatmul.mubr.bf16.gmra.mrb[0].mxu0 %v365
      %v455 = vpop.f32.mrb[0].mxu0
      %v456 = vadd.f32 0.0, %v455
      %v457 = vpop.f32.mrb[0].mxu0
      %v458 = vpop.f32.mrb[0].mxu0
      %v459 = vadd.f32 0.0, %v458
      %v460 = vpop.f32.mrb[0].mxu0
      %461 = vmatprep.mubr.bf16.mxu0 0
      %462 = vmatmul.mubr.bf16.gmra.mrb[0].mxu0 %v368
      %v463 = vpop.f32.mrb[0].mxu0
      %v464 = vadd.f32 0.0, %v463
      %v465 = vpop.f32.mrb[0].mxu0
      %v466 = vpop.f32.mrb[0].mxu0
      %v467 = vadd.f32 0.0, %v466
      %v468 = vpop.f32.mrb[0].mxu0
      %469 = vmatprep.mubr.bf16.mxu0 0
      %470 = vmatmul.mubr.bf16.gmra.mrb[0].mxu0 %v371
      %v471 = vpop.f32.mrb[0].mxu0
      %v472 = vadd.f32 0.0, %v471
      %v473 = vpop.f32.mrb[0].mxu0
      %v474 = vpop.f32.mrb[0].mxu0
      %v475 = vadd.f32 0.0, %v474
      %v476 = vpop.f32.mrb[0].mxu0
      %477 = vmatprep.mubr.bf16.mxu0 0
      %478 = vmatmul.mubr.bf16.gmra.mrb[0].mxu0 %v374
      %v479 = vpop.f32.mrb[0].mxu0
      %v480 = vadd.f32 0.0, %v479
      %v481 = vpop.f32.mrb[0].mxu0
      %v482 = vpop.f32.mrb[0].mxu0
      %v483 = vadd.f32 0.0, %v482
      %v484 = vpop.f32.mrb[0].mxu0
      %485 = vmatprep.mubr.bf16.mxu0 0
      %486 = vmatmul.mubr.bf16.gmra.mrb[0].mxu0 %v377
      %v487 = vpop.f32.mrb[0].mxu0
      %v488 = vadd.f32 0.0, %v487
      %v489 = vpop.f32.mrb[0].mxu0
      %v490 = vpop.f32.mrb[0].mxu0
      %v491 = vadd.f32 0.0, %v490
      %v492 = vpop.f32.mrb[0].mxu0
      %493 = vmatprep.mubr.bf16.mxu0 0
      %494 = vmatmul.mubr.bf16.gmra.mrb[0].mxu0 %v380
      %v495 = vpop.f32.mrb[0].mxu0
      %v496 = vadd.f32 0.0, %v495
      %v497 = vpop.f32.mrb[0].mxu0
      %v498 = vpop.f32.mrb[0].mxu0
      %v499 = vadd.f32 0.0, %v498
      %v500 = vpop.f32.mrb[0].mxu0
      %501 = vmatprep.mubr.bf16.mxu0 0
      %502 = vmatmul.mubr.bf16.gmra.mrb[0].mxu0 %v383
      %v503 = vpop.f32.mrb[0].mxu0
      %v504 = vadd.f32 0.0, %v503
      %v505 = vpop.f32.mrb[0].mxu0
      %v506 = vpop.f32.mrb[0].mxu0
      %v507 = vadd.f32 0.0, %v506
      %v508 = vpop.f32.mrb[0].mxu0
      %509 = vmatprep.mubr.bf16.mxu0 0
      %510 = vmatmul.mubr.bf16.gmra.mrb[0].mxu0 %v386
      %v511 = vpop.f32.mrb[0].mxu0
      %v512 = vadd.f32 0.0, %v511
      %v513 = vpop.f32.mrb[0].mxu0
      %v514 = vpop.f32.mrb[0].mxu0
      %v515 = vadd.f32 0.0, %v514
      %v516 = vpop.f32.mrb[0].mxu0
      %517 = vmatprep.mubr.bf16.mxu0 0
      %518 = vmatmul.mubr.bf16.gmra.mrb[0].mxu0 %v389
      %v519 = vpop.f32.mrb[0].mxu0
      %v520 = vadd.f32 0.0, %v519
      %v521 = vpop.f32.mrb[0].mxu0
      %v522 = vpop.f32.mrb[0].mxu0
      %v523 = vadd.f32 0.0, %v522
      %v524 = vpop.f32.mrb[0].mxu0
      %525 = vmatprep.mubr.bf16.mxu0 0
      %526 = vmatmul.mubr.bf16.gmra.mrb[0].mxu0 %v392
      %v527 = vpop.f32.mrb[0].mxu0
      %v528 = vadd.f32 0.0, %v527
      %v529 = vpop.f32.mrb[0].mxu0
      %v530 = vpop.f32.mrb[0].mxu0
      %v531 = vadd.f32 0.0, %v530
      %v532 = vpop.f32.mrb[0].mxu0
      %533 = vmatprep.mubr.bf16.mxu0 0
      %534 = vmatmul.mubr.bf16.gmra.mrb[0].mxu0 %v395
      %v535 = vpop.f32.mrb[0].mxu0
      %v536 = vadd.f32 0.0, %v535
      %v537 = vpop.f32.mrb[0].mxu0
      %v538 = vpop.f32.mrb[0].mxu0
      %v539 = vadd.f32 0.0, %v538
      %v540 = vpop.f32.mrb[0].mxu0
      %541 = vmatprep.mubr.bf16.mxu0 0
      %542 = vmatmul.mubr.bf16.gmra.mrb[0].mxu0 %v398
      %v543 = vpop.f32.mrb[0].mxu0
      %v544 = vadd.f32 0.0, %v543
      %v545 = vpop.f32.mrb[0].mxu0
      %v546 = vpop.f32.mrb[0].mxu0
      %v547 = vadd.f32 0.0, %v546
      %v548 = vpop.f32.mrb[0].mxu0
      %549 = vmatprep.mubr.bf16.mxu0 0
      %550 = vmatmul.mubr.bf16.gmra.mrb[0].mxu0 %v401
      %v551 = vpop.f32.mrb[0].mxu0
      %v552 = vadd.f32 0.0, %v551
      %v553 = vpop.f32.mrb[0].mxu0
      %v554 = vpop.f32.mrb[0].mxu0
      %v555 = vadd.f32 0.0, %v554
      %v556 = vpop.f32.mrb[0].mxu0
      %557 = vmatprep.mubr.bf16.mxu0 0
      %558 = vmatmul.mubr.bf16.gmra.mrb[0].mxu0 %v404
      %v559 = vpop.f32.mrb[0].mxu0
      %v560 = vadd.f32 0.0, %v559
      %v561 = vpop.f32.mrb[0].mxu0
      %v562 = vpop.f32.mrb[0].mxu0
      %v563 = vadd.f32 0.0, %v562
      %v564 = vpop.f32.mrb[0].mxu0
      %565 = vmatprep.mubr.bf16.mxu0 0
      %566 = vmatmul.mubr.bf16.gmra.mrb[0].mxu0 %v407
      %v567 = vpop.f32.mrb[0].mxu0
      %v568 = vadd.f32 0.0, %v567
      %v569 = vpop.f32.mrb[0].mxu0
      %v570 = vpop.f32.mrb[0].mxu0
      %v571 = vadd.f32 0.0, %v570
      %v572 = vpop.f32.mrb[0].mxu0
      %573 = vdwg.mxu0
      %v574 = vpack.c.bf16 %v451, %v448
      %v575 = vpack.c.bf16 %v459, %v456
      %v576 = vpack.c.bf16 %v467, %v464
      %v577 = vpack.c.bf16 %v475, %v472
      %v578 = vpack.c.bf16 %v483, %v480
      %v579 = vpack.c.bf16 %v491, %v488
      %v580 = vpack.c.bf16 %v499, %v496
      %v581 = vpack.c.bf16 %v507, %v504
      %v582 = vpack.c.bf16 %v515, %v512
      %v583 = vpack.c.bf16 %v523, %v520
      %v584 = vpack.c.bf16 %v531, %v528
      %v585 = vpack.c.bf16 %v539, %v536
      %v586 = vpack.c.bf16 %v547, %v544
      %v587 = vpack.c.bf16 %v555, %v552
      %v588 = vpack.c.bf16 %v563, %v560
      %v589 = vpack.c.bf16 %v571, %v568
      %v606 = vunpack.c.l.b16 %v574
      %v607 = vunpack.c.h.b16 %v574
      %v608 = vunpack.c.l.b16 %v575
      %v609 = vunpack.c.h.b16 %v575
      %v610 = vunpack.c.l.b16 %v576
      %v611 = vunpack.c.h.b16 %v576
      %v612 = vunpack.c.l.b16 %v577
      %v613 = vunpack.c.h.b16 %v577
      %v614 = vunpack.c.l.b16 %v578
      %v615 = vunpack.c.h.b16 %v578
      %v616 = vunpack.c.l.b16 %v579
      %v617 = vunpack.c.h.b16 %v579
      %v618 = vunpack.c.l.b16 %v580
      %v619 = vunpack.c.h.b16 %v580
      %v620 = vunpack.c.l.b16 %v581
      %v621 = vunpack.c.h.b16 %v581
      %v622 = vunpack.c.l.b16 %v582
      %v623 = vunpack.c.h.b16 %v582
      %v624 = vunpack.c.l.b16 %v583
      %v625 = vunpack.c.h.b16 %v583
      %v626 = vunpack.c.l.b16 %v584
      %v627 = vunpack.c.h.b16 %v584
      %v628 = vunpack.c.l.b16 %v585
      %v629 = vunpack.c.h.b16 %v585
      %v630 = vunpack.c.l.b16 %v586
      %v631 = vunpack.c.h.b16 %v586
      %v632 = vunpack.c.l.b16 %v587
      %v633 = vunpack.c.h.b16 %v587
      %v634 = vunpack.c.l.b16 %v588
      %v635 = vunpack.c.h.b16 %v588
      %v636 = vunpack.c.l.b16 %v589
      %v637 = vunpack.c.h.b16 %v589
      %v638 = vpack.c.b16 %v606, %v606
      %v639 = vpack.c.b16 %v607, %v607
      %v640 = vpack.c.b16 %v608, %v608
      %v641 = vpack.c.b16 %v609, %v609
      %v642 = vpack.c.b16 %v610, %v610
      %v643 = vpack.c.b16 %v611, %v611
      %v644 = vpack.c.b16 %v612, %v612
      %v645 = vpack.c.b16 %v613, %v613
      %v646 = vpack.c.b16 %v614, %v614
      %v647 = vpack.c.b16 %v615, %v615
      %v648 = vpack.c.b16 %v616, %v616
      %v649 = vpack.c.b16 %v617, %v617
      %v650 = vpack.c.b16 %v618, %v618
      %v651 = vpack.c.b16 %v619, %v619
      %v652 = vpack.c.b16 %v620, %v620
      %v653 = vpack.c.b16 %v621, %v621
      %v654 = vpack.c.b16 %v622, %v622
      %v655 = vpack.c.b16 %v623, %v623
      %v656 = vpack.c.b16 %v624, %v624
      %v657 = vpack.c.b16 %v625, %v625
      %v658 = vpack.c.b16 %v626, %v626
      %v659 = vpack.c.b16 %v627, %v627
      %v660 = vpack.c.b16 %v628, %v628
      %v661 = vpack.c.b16 %v629, %v629
      %v662 = vpack.c.b16 %v630, %v630
      %v663 = vpack.c.b16 %v631, %v631
      %v664 = vpack.c.b16 %v632, %v632
      %v665 = vpack.c.b16 %v633, %v633
      %v666 = vpack.c.b16 %v634, %v634
      %v667 = vpack.c.b16 %v635, %v635
      %v668 = vpack.c.b16 %v636, %v636
      %v669 = vpack.c.b16 %v637, %v637
      %702 = vst [vmem:[%s219] sm:$0xf] %v638
      %703 = vst [vmem:[%s219 + $0x4] sm:$0xf] %v639
      %704 = vst [vmem:[%s219 + $0x8] sm:$0xf] %v640
      %705 = vst [vmem:[%s219 + $0xc] sm:$0xf] %v641
      %706 = vst [vmem:[%s219 + $0x10] sm:$0xf] %v642
      %707 = vst [vmem:[%s219 + $0x14] sm:$0xf] %v643
      %708 = vst [vmem:[%s219 + $0x18] sm:$0xf] %v644
      %709 = vst [vmem:[%s219 + $0x1c] sm:$0xf] %v645
      %710 = vst [vmem:[%s219 + $0x20] sm:$0xf] %v646
      %711 = vst [vmem:[%s219 + $0x24] sm:$0xf] %v647
      %712 = vst [vmem:[%s219 + $0x28] sm:$0xf] %v648
      %713 = vst [vmem:[%s219 + $0x2c] sm:$0xf] %v649
      %714 = vst [vmem:[%s219 + $0x30] sm:$0xf] %v650
      %715 = vst [vmem:[%s219 + $0x34] sm:$0xf] %v651
      %716 = vst [vmem:[%s219 + $0x38] sm:$0xf] %v652
      %717 = vst [vmem:[%s219 + $0x3c] sm:$0xf] %v653
      %718 = vst [vmem:[%s219 + $0x40] sm:$0xf] %v654
      %719 = vst [vmem:[%s219 + $0x44] sm:$0xf] %v655
      %720 = vst [vmem:[%s219 + $0x48] sm:$0xf] %v656
      %721 = vst [vmem:[%s219 + $0x4c] sm:$0xf] %v657
      %722 = vst [vmem:[%s219 + $0x50] sm:$0xf] %v658
      %723 = vst [vmem:[%s219 + $0x54] sm:$0xf] %v659
      %724 = vst [vmem:[%s219 + $0x58] sm:$0xf] %v660
      %725 = vst [vmem:[%s219 + $0x5c] sm:$0xf] %v661
      %726 = vst [vmem:[%s219 + $0x60] sm:$0xf] %v662
      %727 = vst [vmem:[%s219 + $0x64] sm:$0xf] %v663
      %728 = vst [vmem:[%s219 + $0x68] sm:$0xf] %v664
      %729 = vst [vmem:[%s219 + $0x6c] sm:$0xf] %v665
      %730 = vst [vmem:[%s219 + $0x70] sm:$0xf] %v666
      %731 = vst [vmem:[%s219 + $0x74] sm:$0xf] %v667
      %732 = vst [vmem:[%s219 + $0x78] sm:$0xf] %v668
      %733 = vst [vmem:[%s219 + $0x7c] sm:$0xf] %v669
      %v734 = vadd.f32 %v448, %v451
      %v735 = vadd.f32 %v734, %v456
      %v736 = vadd.f32 %v735, %v459
      %v737 = vadd.f32 %v736, %v464
      %v738 = vadd.f32 %v737, %v467
      %v739 = vadd.f32 %v738, %v472
      %v740 = vadd.f32 %v739, %v475
      %v741 = vadd.f32 %v740, %v480
      %v742 = vadd.f32 %v741, %v483
      %v743 = vadd.f32 %v742, %v488
      %v744 = vadd.f32 %v743, %v491
      %v745 = vadd.f32 %v744, %v496
      %v746 = vadd.f32 %v745, %v499
      %v747 = vadd.f32 %v746, %v504
      %v748 = vadd.f32 %v747, %v507
      %v749 = vadd.f32 %v748, %v512
      %v750 = vadd.f32 %v749, %v515
      %v751 = vadd.f32 %v750, %v520
      %v752 = vadd.f32 %v751, %v523
      %v753 = vadd.f32 %v752, %v528
      %v754 = vadd.f32 %v753, %v531
      %v755 = vadd.f32 %v754, %v536
      %v756 = vadd.f32 %v755, %v539
      %v757 = vadd.f32 %v756, %v544
      %v758 = vadd.f32 %v757, %v547
      %v759 = vadd.f32 %v758, %v552
      %v760 = vadd.f32 %v759, %v555
      %v761 = vadd.f32 %v760, %v560
      %v762 = vadd.f32 %v761, %v563
      %v763 = vadd.f32 %v762, %v568
      %v764 = vadd.f32 %v763, %v571
      %v765 = vrot.slane %v764, 4
      %v766 = vadd.f32 %v764, %v765
      %v767 = vrot.slane %v766, 2
      %v768 = vadd.f32 %v766, %v767
      %v769 = vrot.slane %v768, 1
      %v770 = vadd.f32 %v768, %v769
      %v771 = vmul.f32 %v448, %v448
      %v772 = vmul.f32 %v451, %v451
      %v773 = vmul.f32 %v456, %v456
      %v774 = vmul.f32 %v459, %v459
      %v775 = vmul.f32 %v464, %v464
      %v776 = vmul.f32 %v467, %v467
      %v777 = vmul.f32 %v472, %v472
      %v778 = vmul.f32 %v475, %v475
      %v779 = vmul.f32 %v480, %v480
      %v780 = vmul.f32 %v483, %v483
      %v781 = vmul.f32 %v488, %v488
      %v782 = vmul.f32 %v491, %v491
      %v783 = vmul.f32 %v496, %v496
      %v784 = vmul.f32 %v499, %v499
      %v785 = vmul.f32 %v504, %v504
      %v786 = vmul.f32 %v507, %v507
      %v787 = vmul.f32 %v512, %v512
      %v788 = vmul.f32 %v515, %v515
      %v789 = vmul.f32 %v520, %v520
      %v790 = vmul.f32 %v523, %v523
      %v791 = vmul.f32 %v528, %v528
      %v792 = vmul.f32 %v531, %v531
      %v793 = vmul.f32 %v536, %v536
      %v794 = vmul.f32 %v539, %v539
      %v795 = vmul.f32 %v544, %v544
      %v796 = vmul.f32 %v547, %v547
      %v797 = vmul.f32 %v552, %v552
      %v798 = vmul.f32 %v555, %v555
      %v799 = vmul.f32 %v560, %v560
      %v800 = vmul.f32 %v563, %v563
      %v801 = vmul.f32 %v568, %v568
      %v802 = vmul.f32 %v571, %v571
      %v803 = vadd.f32 %v771, %v772
      %v804 = vadd.f32 %v803, %v773
      %v805 = vadd.f32 %v804, %v774
      %v806 = vadd.f32 %v805, %v775
      %v807 = vadd.f32 %v806, %v776
      %v808 = vadd.f32 %v807, %v777
      %v809 = vadd.f32 %v808, %v778
      %v810 = vadd.f32 %v809, %v779
      %v811 = vadd.f32 %v810, %v780
      %v812 = vadd.f32 %v811, %v781
      %v813 = vadd.f32 %v812, %v782
      %v814 = vadd.f32 %v813, %v783
      %v815 = vadd.f32 %v814, %v784
      %v816 = vadd.f32 %v815, %v785
      %v817 = vadd.f32 %v816, %v786
      %v818 = vadd.f32 %v817, %v787
      %v819 = vadd.f32 %v818, %v788
      %v820 = vadd.f32 %v819, %v789
      %v821 = vadd.f32 %v820, %v790
      %v822 = vadd.f32 %v821, %v791
      %v823 = vadd.f32 %v822, %v792
      %v824 = vadd.f32 %v823, %v793
      %v825 = vadd.f32 %v824, %v794
      %v826 = vadd.f32 %v825, %v795
      %v827 = vadd.f32 %v826, %v796
      %v828 = vadd.f32 %v827, %v797
      %v829 = vadd.f32 %v828, %v798
      %v830 = vadd.f32 %v829, %v799
      %v831 = vadd.f32 %v830, %v800
      %v832 = vadd.f32 %v831, %v801
      %v833 = vadd.f32 %v832, %v802
      %v834 = vrot.slane %v833, 4
      %v835 = vadd.f32 %v833, %v834
      %v836 = vrot.slane %v835, 2
      %v837 = vadd.f32 %v835, %v836
      %v838 = vrot.slane %v837, 1
      %v839 = vadd.f32 %v837, %v838
      %vm840 = vcmask 1040384
      %v841 = vsel %vm840, %v770, %v839
      %842 = vst [vmem:[%s226] sm:$0x3] %v841
      %p843 = scmp.lt.s32.totalorder %s19, 1
      %s844 = scalar_select %p843, %s19, 1
      %p845 = scmp.lt.s32.totalorder %s20, 0
      %s846 = scalar_select %p845, %s20, 0
      %s847 = smul.addr %s844, 32
      %s848 = sadd.s32 %s846, %s847
      %s849 = smul.addr %s848, 4
      %s850 = scalar_lea.vmem %s2, %s849
      %p851 = scmp.lt.s32.totalorder %s19, 1
      %s852 = scalar_select %p851, %s19, 1
      %p853 = scmp.lt.s32.totalorder %s20, 0
      %s854 = scalar_select %p853, %s20, 0
      %s855 = sadd.s32 %s854, %s852
      %s856 = smul.addr %s855, 2
      %s857 = scalar_lea.vmem %s3, %s856
      // Predicated region
      $region29: #{forward.4} parent=27 // pred_check
        %p858 = pneg %p99
      $region30: #{forward.4} parent=27 // pred_check_branch
        %860 = sbr.rel (%p858) target = $region32
      $region31: #{forward.4} parent=27 // pred_region
        _
      $region32: #{forward.4} parent=27 // pred_fallthru
        _
      // Predicated region
      $region33: #{forward.4} parent=27 // pred_check
        %p861 = pneg %p127
      $region34: #{forward.4} parent=27 // pred_check_branch
        %863 = sbr.rel (%p861) target = $region36
      $region35: #{forward.4} parent=27 // pred_region
        _
      $region36: #{forward.4} parent=27 // pred_fallthru
        _
    $region28: #{forward.4} parent=5 // pred_fallthru
      _
    %p864 = scmp.le.s32.totalorder 2, %s10
    // Predicated region
    $region37: #{forward.4} parent=5 // pred_check
      %p865 = pneg %p864
    $region38: #{forward.4} parent=5 // pred_check_branch
      %867 = sbr.rel (%p865) target = $region40
    $region39: #{forward.4} parent=5 // pred_region
      %s868 = ssub.s32 %s10, 2
      // Predicated region
      $region41: #{forward.4} parent=39 // pred_check
        %p869 = pneg %p105
      $region42: #{forward.4} parent=39 // pred_check_branch
        %871 = sbr.rel (%p869) target = $region44
      $region43: #{forward.4} parent=39 // pred_region
        %p872 = scmp.lt.s32.totalorder %s21, 1
        %s873 = scalar_select %p872, %s21, 1
        %p874 = scmp.lt.s32.totalorder %s22, 0
        %s875 = scalar_select %p874, %s22, 0
        %s876 = smul.addr %s873, 32
        %s877 = sadd.s32 %s875, %s876
        %s878 = smul.addr %s877, 4
        %s879 = scalar_lea.vmem %s2, %s878
      $region44: #{forward.4} parent=39 // pred_fallthru
        _
      // Predicated region
      $region45: #{forward.4} parent=39 // pred_check
        %p880 = pneg %p133
      $region46: #{forward.4} parent=39 // pred_check_branch
        %882 = sbr.rel (%p880) target = $region48
      $region47: #{forward.4} parent=39 // pred_region
        %p883 = scmp.lt.s32.totalorder %s21, 1
        %s884 = scalar_select %p883, %s21, 1
        %p885 = scmp.lt.s32.totalorder %s22, 0
        %s886 = scalar_select %p885, %s22, 0
        %s887 = sadd.s32 %s886, %s884
        %s888 = smul.addr %s887, 2
        %s889 = scalar_lea.vmem %s3, %s888
      $region48: #{forward.4} parent=39 // pred_fallthru
        _
    $region40: #{forward.4} parent=5 // pred_fallthru
      _
  $region6: #{forward.4} parent=0 // loop_footer
    %s14 = sadd.s32 1, %s10
  $region7: #{forward.4} parent=0 // loop_footer_branch
    %9 = sbr.rel target = $region3
  $region8: #{forward.4} parent=0 // loop_exit
    _

// kernel: forward.6
$region0: #{forward.6}
  #allocation0 [shape = 'u32[]', space=smem, size = 0x4, offset = 0x4, fixed_abs, tag = 'smem constant byte address 0x4 - core index']
  #allocation1 [shape = 'u32[144,128]{1,0:T(1,128)}', space=vmem, size = 0x12000, scoped, tag = 'internal scratch']
  %s0 = inlined_call_operand.vmem [shape: bf16[2,18,18,128], index: 0, kind: input, shape index: {}]
  %s1 = inlined_call_operand.vmem [shape: bf16[9,128,128], index: 1, kind: input, shape index: {}]
  %s2 = inlined_call_operand.vmem [shape: bf16[2,16,16,128], index: 2, kind: output, shape index: {0}]
  %s3 = inlined_call_operand.vmem [shape: f32[2,2,128], index: 3, kind: output, shape index: {1}]
  %4 = xla_tuple %s2, %s3
  %s5 = sld [smem:[#allocation0]]
  $region49: #{forward.6} parent=0
    _
  %s7 = ssub.s32 1, %s5
  %s8 = scalar_select 0, %s7, %s5
  loop: start=0, step=1, limit=4
  $region2: #{forward.6} parent=0 // loop_pre_header
    _
  $region3: #{forward.6} parent=0 // loop_header
    %s10 = sphi 0, %s14
    %p11 = scmp.ge.s32.totalorder %s10, 4
    %s17 = sphi 0, %s29
    %s18 = sphi 0, %s25
    %s19 = sphi 0, %s17
    %s20 = sphi 0, %s18
    %s21 = sphi 0, %s19
    %s22 = sphi 0, %s20
    %s32 = sphi 0, %s34
    %s35 = sphi 0, %s32
    %s36 = sphi 0, %s35
    %s52 = sphi 0, %s36
    %s58 = sphi 0, %s60
    %s61 = sphi 0, %s58
    %s62 = sphi 0, %s61
    %s78 = sphi 0, %s62
    %s86 = sphi 0, %s88
    %s89 = sphi 0, %s86
    %s90 = sphi 0, %s89
    %s106 = sphi 0, %s90
    %s114 = sphi 0, %s116
    %s117 = sphi 0, %s114
    %s118 = sphi 0, %s117
    %s134 = sphi 0, %s118
  $region4: #{forward.6} parent=0 // loop_header_branch
    %13 = sbr.rel (%p11) target = $region8
  $region5: #{forward.6} parent=0 // loop_body
    %s15 = ssub.s32 %s10, 1
    %s16 = ssub.s32 %s10, 2
    %s23 = sadd.s32 1, %s18
    %p24 = scmp.ge.s32.totalorder %s23, 1
    %s25 = scalar_select %p24, 0, %s23
    %s26 = sadd.s32 1, %s17
    %s27 = scalar_select %p24, %s26, %s17
    %p28 = scmp.ge.s32.totalorder %s27, 2
    %s29 = scalar_select %p28, 0, %s27
    %s30 = ssub.s32 %s17, %s29
    %p31 = scmp.eq.s32.totalorder %s30, 0
    %s33 = sadd.s32 %s32, 1
    %s34 = scalar_select %p31, %s32, %s33
    %p37 = pneg %p31
    %p38 = scmp.eq.s32.totalorder %s10, 1
    %p39 = por %p37, %p38
    %p40 = scmp.ne.s32.totalorder %s32, %s35
    %p41 = scmp.eq.s32.totalorder %s10, 0
    %p42 = por %p40, %p41
    %p43 = scmp.ne.s32.totalorder %s32, %s35
    %p44 = scmp.eq.s32.totalorder %s15, 1
    %p45 = por %p43, %p44
    %p46 = scmp.ne.s32.totalorder %s35, %s36
    %p47 = scmp.eq.s32.totalorder %s15, 0
    %p48 = por %p46, %p47
    %p49 = scmp.ne.s32.totalorder %s35, %s36
    %p50 = scmp.eq.s32.totalorder %s16, 1
    %p51 = por %p49, %p50
    %p53 = scmp.ne.s32.totalorder %s36, %s52
    %p54 = scmp.eq.s32.totalorder %s16, 0
    %p55 = por %p53, %p54
    %s56 = ssub.s32 %s18, %s25
    %p57 = scmp.eq.s32.totalorder %s56, 0
    %s59 = sadd.s32 %s58, 1
    %s60 = scalar_select %p57, %s58, %s59
    %p63 = pneg %p57
    %p64 = scmp.eq.s32.totalorder %s10, 1
    %p65 = por %p63, %p64
    %p66 = scmp.ne.s32.totalorder %s58, %s61
    %p67 = scmp.eq.s32.totalorder %s10, 0
    %p68 = por %p66, %p67
    %p69 = scmp.ne.s32.totalorder %s58, %s61
    %p70 = scmp.eq.s32.totalorder %s15, 1
    %p71 = por %p69, %p70
    %p72 = scmp.ne.s32.totalorder %s61, %s62
    %p73 = scmp.eq.s32.totalorder %s15, 0
    %p74 = por %p72, %p73
    %p75 = scmp.ne.s32.totalorder %s61, %s62
    %p76 = scmp.eq.s32.totalorder %s16, 1
    %p77 = por %p75, %p76
    %p79 = scmp.ne.s32.totalorder %s62, %s78
    %p80 = scmp.eq.s32.totalorder %s16, 0
    %p81 = por %p79, %p80
    %s82 = ssub.s32 %s17, %s29
    %s83 = ssub.s32 %s18, %s25
    %s84 = sor.u32 %s82, %s83
    %p85 = scmp.eq.s32.totalorder %s84, 0
    %s87 = sadd.s32 %s86, 1
    %s88 = scalar_select %p85, %s86, %s87
    %p91 = pneg %p85
    %p92 = scmp.eq.s32.totalorder %s10, 1
    %p93 = por %p91, %p92
    %p94 = scmp.ne.s32.totalorder %s86, %s89
    %p95 = scmp.eq.s32.totalorder %s10, 0
    %p96 = por %p94, %p95
    %p97 = scmp.ne.s32.totalorder %s86, %s89
    %p98 = scmp.eq.s32.totalorder %s15, 1
    %p99 = por %p97, %p98
    %p100 = scmp.ne.s32.totalorder %s89, %s90
    %p101 = scmp.eq.s32.totalorder %s15, 0
    %p102 = por %p100, %p101
    %p103 = scmp.ne.s32.totalorder %s89, %s90
    %p104 = scmp.eq.s32.totalorder %s16, 1
    %p105 = por %p103, %p104
    %p107 = scmp.ne.s32.totalorder %s90, %s106
    %p108 = scmp.eq.s32.totalorder %s16, 0
    %p109 = por %p107, %p108
    %s110 = ssub.s32 %s17, %s29
    %s111 = ssub.s32 %s18, %s25
    %s112 = sor.u32 %s110, %s111
    %p113 = scmp.eq.s32.totalorder %s112, 0
    %s115 = sadd.s32 %s114, 1
    %s116 = scalar_select %p113, %s114, %s115
    %p119 = pneg %p113
    %p120 = scmp.eq.s32.totalorder %s10, 1
    %p121 = por %p119, %p120
    %p122 = scmp.ne.s32.totalorder %s114, %s117
    %p123 = scmp.eq.s32.totalorder %s10, 0
    %p124 = por %p122, %p123
    %p125 = scmp.ne.s32.totalorder %s114, %s117
    %p126 = scmp.eq.s32.totalorder %s15, 1
    %p127 = por %p125, %p126
    %p128 = scmp.ne.s32.totalorder %s117, %s118
    %p129 = scmp.eq.s32.totalorder %s15, 0
    %p130 = por %p128, %p129
    %p131 = scmp.ne.s32.totalorder %s117, %s118
    %p132 = scmp.eq.s32.totalorder %s16, 1
    %p133 = por %p131, %p132
    %p135 = scmp.ne.s32.totalorder %s118, %s134
    %p136 = scmp.eq.s32.totalorder %s16, 0
    %p137 = por %p135, %p136
    %p138 = scmp.le.s32.totalorder 1, %s10
    %p139 = scmp.lt.s32.totalorder %s10, 3
    %p140 = pnand %p138, %p139
    %p141 = pneg %p140
    // Predicated region
    $region9: #{forward.6} parent=5 // pred_check
      _
    $region10: #{forward.6} parent=5 // pred_check_branch
      %143 = sbr.rel (%p140) target = $region12
    $region11: #{forward.6} parent=5 // pred_region
      %s144 = ssub.s32 %s10, 1
      // Predicated region
      $region13: #{forward.6} parent=11 // pred_check
        %p145 = pneg %p74
      $region14: #{forward.6} parent=11 // pred_check_branch
        %147 = sbr.rel (%p145) target = $region16
      $region15: #{forward.6} parent=11 // pred_region
        %p148 = scmp.lt.s32.totalorder %s20, 0
        %s149 = scalar_select %p148, %s20, 0
        %s150 = smul.addr %s149, 4
        %s151 = scalar_lea.vmem %s1, %s150
      $region16: #{forward.6} parent=11 // pred_fallthru
        _
    $region12: #{forward.6} parent=5 // pred_fallthru
      _
    %p152 = scmp.lt.s32.totalorder %s10, 2
    // Predicated region
    $region17: #{forward.6} parent=5 // pred_check
      %p153 = pneg %p152
    $region18: #{forward.6} parent=5 // pred_check_branch
      %155 = sbr.rel (%p153) target = $region20
    $region19: #{forward.6} parent=5 // pred_region
      // Predicated region
      $region21: #{forward.6} parent=19 // pred_check
        %p156 = pneg %p42
      $region22: #{forward.6} parent=19 // pred_check_branch
        %158 = sbr.rel (%p156) target = $region24
      $region23: #{forward.6} parent=19 // pred_region
        %p159 = scmp.lt.s32.totalorder %s17, 1
        %s160 = scalar_select %p159, %s17, 1
        %s161 = smul.addr %s160, 54
        %s162 = smul.addr %s161, 4
        %s163 = scalar_lea.vmem %s0, %s162
      $region24: #{forward.6} parent=19 // pred_fallthru
        _
    $region20: #{forward.6} parent=5 // pred_fallthru
      _
    %p164 = scmp.le.s32.totalorder 1, %s10
    %p165 = scmp.lt.s32.totalorder %s10, 3
    %p166 = pnand %p164, %p165
    %p167 = pneg %p166
    // Predicated region
    $region25: #{forward.6} parent=5 // pred_check
      _
    $region26: #{forward.6} parent=5 // pred_check_branch
      %169 = sbr.rel (%p166) target = $region28
    $region27: #{forward.6} parent=5 // pred_region
      %s170 = ssub.s32 %s10, 1
      %p171 = scmp.lt.s32.totalorder %s19, 1
      %s172 = scalar_select %p171, %s19, 1
      %s173 = smul.addr %s172, 54
      %s174 = smul.addr %s173, 4
      %s175 = scalar_lea.vmem %s0, %s174
      %p176 = pneg %p48
      %p177 = pneg %p45
      %p178 = scmp.lt.s32.totalorder %s20, 0
      %s179 = scalar_select %p178, %s20, 0
      %s180 = smul.addr %s179, 4
      %s181 = scalar_lea.vmem %s1, %s180
      %p182 = pneg %p74
      %p183 = pneg %p71
      %p184 = pneg %p102
      %p185 = pneg %p99
      %p186 = scmp.lt.s32.totalorder %s19, 1
      %s187 = scalar_select %p186, %s19, 1
      %p188 = scmp.lt.s32.totalorder %s20, 0
      %s189 = scalar_select %p188, %s20, 0
      %s190 = smul.addr %s187, 32
      %s191 = sadd.s32 %s189, %s190
      %s192 = smul.addr %s191, 4
      %s193 = scalar_lea.vmem %s2, %s192
      %p194 = pneg %p130
      %p195 = pneg %p127
      %p196 = scmp.lt.s32.totalorder %s19, 1
      %s197 = scalar_select %p196, %s19, 1
      %p198 = scmp.lt.s32.totalorder %s20, 0
      %s199 = scalar_select %p198, %s20, 0
      %s200 = sadd.s32 %s199, %s197
      %s201 = smul.addr %s200, 2
      %s202 = scalar_lea.vmem %s3, %s201
      %p203 = scmp.lt.s32.totalorder %s19, 1
      %s204 = scalar_select %p203, %s19, 1
      %s205 = smul.addr %s204, 54
      %s206 = smul.addr %s205, 4
      %s207 = scalar_lea.vmem %s0, %s206
      %p208 = scmp.lt.s32.totalorder %s20, 0
      %s209 = scalar_select %p208, %s20, 0
      %s210 = smul.addr %s209, 4
      %s211 = scalar_lea.vmem %s1, %s210
      %p212 = scmp.lt.s32.totalorder %s19, 1
      %s213 = scalar_select %p212, %s19, 1
      %p214 = scmp.lt.s32.totalorder %s20, 0
      %s215 = scalar_select %p214, %s20, 0
      %s216 = smul.addr %s213, 32
      %s217 = sadd.s32 %s215, %s216
      %s218 = smul.addr %s217, 4
      %s219 = scalar_lea.vmem %s2, %s218
      %p220 = scmp.lt.s32.totalorder %s19, 1
      %s221 = scalar_select %p220, %s19, 1
      %p222 = scmp.lt.s32.totalorder %s20, 0
      %s223 = scalar_select %p222, %s20, 0
      %s224 = sadd.s32 %s223, %s221
      %s225 = smul.addr %s224, 2
      %s226 = scalar_lea.vmem %s3, %s225
      %v228 = vld [vmem:[%s207] sm:$0xf]
      %v229 = vld [vmem:[%s207 + $0x4] sm:$0xf]
      %v230 = vld [vmem:[%s207 + $0xc] sm:$0xf]
      %v231 = vld [vmem:[%s207 + $0x10] sm:$0xf]
      %v232 = vld [vmem:[%s207 + $0x18] sm:$0xf]
      %v233 = vld [vmem:[%s207 + $0x1c] sm:$0xf]
      %v234 = vld [vmem:[%s207 + $0x24] sm:$0xf]
      %v235 = vld [vmem:[%s207 + $0x28] sm:$0xf]
      %v236 = vld [vmem:[%s207 + $0x30] sm:$0xf]
      %v237 = vld [vmem:[%s207 + $0x34] sm:$0xf]
      %v238 = vld [vmem:[%s207 + $0x3c] sm:$0xf]
      %v239 = vld [vmem:[%s207 + $0x40] sm:$0xf]
      %v240 = vld [vmem:[%s207 + $0x48] sm:$0xf]
      %v241 = vld [vmem:[%s207 + $0x4c] sm:$0xf]
      %v242 = vld [vmem:[%s207 + $0x54] sm:$0xf]
      %v243 = vld [vmem:[%s207 + $0x58] sm:$0xf]
      %v244 = vld [vmem:[%s207 + $0x60] sm:$0xf]
      %v245 = vld [vmem:[%s207 + $0x64] sm:$0xf]
      %v246 = vld [vmem:[%s207 + $0x6c] sm:$0xf]
      %v247 = vld [vmem:[%s207 + $0x70] sm:$0xf]
      %v248 = vld [vmem:[%s207 + $0x78] sm:$0xf]
      %v249 = vld [vmem:[%s207 + $0x7c] sm:$0xf]
      %v250 = vld [vmem:[%s207 + $0x84] sm:$0xf]
      %v251 = vld [vmem:[%s207 + $0x88] sm:$0xf]
      %v252 = vld [vmem:[%s207 + $0x90] sm:$0xf]
      %v253 = vld [vmem:[%s207 + $0x94] sm:$0xf]
      %v254 = vld [vmem:[%s207 + $0x9c] sm:$0xf]
      %v255 = vld [vmem:[%s207 + $0xa0] sm:$0xf]
      %v256 = vld [vmem:[%s207 + $0xa8] sm:$0xf]
      %v257 = vld [vmem:[%s207 + $0xac] sm:$0xf]
      %v258 = vld [vmem:[%s207 + $0xb4] sm:$0xf]
      %v259 = vld [vmem:[%s207 + $0xb8] sm:$0xf]
      %v260 = vld [vmem:[%s211] sm:$0xf]
      %v261 = vld [vmem:[%s211 + $0x4] sm:$0xf]
      %v262 = vld [vmem:[%s211 + $0x8] sm:$0xf]
      %v263 = vld [vmem:[%s211 + $0xc] sm:$0xf]
      %v264 = vld [vmem:[%s211 + $0x10] sm:$0xf]
      %v265 = vld [vmem:[%s211 + $0x14] sm:$0xf]
      %v266 = vld [vmem:[%s211 + $0x18] sm:$0xf]
      %v267 = vld [vmem:[%s211 + $0x1c] sm:$0xf]
      %v268 = vld [vmem:[%s211 + $0x20] sm:$0xf]
      %v269 = vld [vmem:[%s211 + $0x24] sm:$0xf]
      %v270 = vld [vmem:[%s211 + $0x28] sm:$0xf]
      %v271 = vld [vmem:[%s211 + $0x2c] sm:$0xf]
      %v272 = vld [vmem:[%s211 + $0x30] sm:$0xf]
      %v273 = vld [vmem:[%s211 + $0x34] sm:$0xf]
      %v274 = vld [vmem:[%s211 + $0x38] sm:$0xf]
      %v275 = vld [vmem:[%s211 + $0x3c] sm:$0xf]
      %v276 = vld [vmem:[%s207 + $0x8] sm:$0x1]
      %v277 = vld [vmem:[%s207 + $0x14] sm:$0x1]
      %v278 = vld [vmem:[%s207 + $0x20] sm:$0x1]
      %v279 = vld [vmem:[%s207 + $0x2c] sm:$0x1]
      %v280 = vld [vmem:[%s207 + $0x38] sm:$0x1]
      %v281 = vld [vmem:[%s207 + $0x44] sm:$0x1]
      %v282 = vld [vmem:[%s207 + $0x50] sm:$0x1]
      %v283 = vld [vmem:[%s207 + $0x5c] sm:$0x1]
      %v284 = vld [vmem:[%s207 + $0x68] sm:$0x1]
      %v285 = vld [vmem:[%s207 + $0x74] sm:$0x1]
      %v286 = vld [vmem:[%s207 + $0x80] sm:$0x1]
      %v287 = vld [vmem:[%s207 + $0x8c] sm:$0x1]
      %v288 = vld [vmem:[%s207 + $0x98] sm:$0x1]
      %v289 = vld [vmem:[%s207 + $0xa4] sm:$0x1]
      %v290 = vld [vmem:[%s207 + $0xb0] sm:$0x1]
      %v291 = vld [vmem:[%s207 + $0xbc] sm:$0x1]
      %vm292 = vsmask.f32 3328
      %vm293 = vsmask.f32 7440
      %vm294 = vmor %vm292, %vm293
      %v296 = vshrl.u32 %v228, 16
      %v298 = vrot.slane %v296, 4
      %v299 = vshll.u32 %v228, 16
      %v301 = vrot.slane %v299, 5
      %v302 = vor.u32 %v298, %v301
      %v303 = vrot.slane %v302, 4
      %v305 = vshll.u32 %v229, 16
      %v307 = vrot.slane %v305, 5
      %v308 = vsel %vm294, %v303, %v307
      %v309 = vshrl.u32 %v229, 16
      %v311 = vrot.slane %v309, 4
      %v312 = vor.u32 %v311, %v307
      %v313 = vrot.slane %v312, 4
      %v315 = vshll.u32 %v276, 16
      %v317 = vrot.slane %v315, 5
      %v318 = vsel %vm294, %v313, %v317
      %v320 = vshrl.u32 %v230, 16
      %v322 = vrot.slane %v320, 4
      %v323 = vshll.u32 %v230, 16
      %v325 = vrot.slane %v323, 5
      %v326 = vor.u32 %v322, %v325
      %v327 = vrot.slane %v326, 4
      %v329 = vshll.u32 %v231, 16
      %v331 = vrot.slane %v329, 5
      %v332 = vsel %vm294, %v327, %v331
      %v333 = vshrl.u32 %v231, 16
      %v335 = vrot.slane %v333, 4
      %v336 = vor.u32 %v335, %v331
      %v337 = vrot.slane %v336, 4
      %v339 = vshll.u32 %v277, 16
      %v341 = vrot.slane %v339, 5
      %v342 = vsel %vm294, %v337, %v341
      %v344 = vshrl.u32 %v232, 16
      %v346 = vrot.slane %v344, 4
      %v347 = vshll.u32 %v232, 16
      %v349 = vrot.slane %v347, 5
      %v350 = vor.u32 %v346, %v349
      %v351 = vrot.slane %v350, 4
      %v353 = vshll.u32 %v233, 16
      %v355 = vrot.slane %v353, 5
      %v356 = vsel %vm294, %v351, %v355
      %v357 = vshrl.u32 %v233, 16
      %v359 = vrot.slane %v357, 4
      %v360 = vor.u32 %v359, %v355
      %v361 = vrot.slane %v360, 4
      %v363 = vshll.u32 %v278, 16
      %v365 = vrot.slane %v363, 5
      %v366 = vsel %vm294, %v361, %v365
      %v368 = vshrl.u32 %v234, 16
      %v370 = vrot.slane %v368, 4
      %v371 = vshll.u32 %v234, 16
      %v373 = vrot.slane %v371, 5
      %v374 = vor.u32 %v370, %v373
      %v375 = vrot.slane %v374, 4
      %v377 = vshll.u32 %v235, 16
      %v379 = vrot.slane %v377, 5
      %v380 = vsel %vm294, %v375, %v379
      %v381 = vshrl.u32 %v235, 16
      %v383 = vrot.slane %v381, 4
      %v384 = vor.u32 %v383, %v379
      %v385 = vrot.slane %v384, 4
      %v387 = vshll.u32 %v279, 16
      %v389 = vrot.slane %v387, 5
      %v390 = vsel %vm294, %v385, %v389
      %v392 = vshrl.u32 %v236, 16
      %v394 = vrot.slane %v392, 4
      %v395 = vshll.u32 %v236, 16
      %v397 = vrot.slane %v395, 5
      %v398 = vor.u32 %v394, %v397
      %v399 = vrot.slane %v398, 4
      %v401 = vshll.u32 %v237, 16
      %v403 = vrot.slane %v401, 5
      %v404 = vsel %vm294, %v399, %v403
      %v405 = vshrl.u32 %v237, 16
      %v407 = vrot.slane %v405, 4
      %v408 = vor.u32 %v407, %v403
      %v409 = vrot.slane %v408, 4
      %v411 = vshll.u32 %v280, 16
      %v413 = vrot.slane %v411, 5
      %v414 = vsel %vm294, %v409, %v413
      %v416 = vshrl.u32 %v238, 16
      %v418 = vrot.slane %v416, 4
      %v419 = vshll.u32 %v238, 16
      %v421 = vrot.slane %v419, 5
      %v422 = vor.u32 %v418, %v421
      %v423 = vrot.slane %v422, 4
      %v425 = vshll.u32 %v239, 16
      %v427 = vrot.slane %v425, 5
      %v428 = vsel %vm294, %v423, %v427
      %v429 = vshrl.u32 %v239, 16
      %v431 = vrot.slane %v429, 4
      %v432 = vor.u32 %v431, %v427
      %v433 = vrot.slane %v432, 4
      %v435 = vshll.u32 %v281, 16
      %v437 = vrot.slane %v435, 5
      %v438 = vsel %vm294, %v433, %v437
      %v440 = vshrl.u32 %v240, 16
      %v442 = vrot.slane %v440, 4
      %v443 = vshll.u32 %v240, 16
      %v445 = vrot.slane %v443, 5
      %v446 = vor.u32 %v442, %v445
      %v447 = vrot.slane %v446, 4
      %v449 = vshll.u32 %v241, 16
      %v451 = vrot.slane %v449, 5
      %v452 = vsel %vm294, %v447, %v451
      %v453 = vshrl.u32 %v241, 16
      %v455 = vrot.slane %v453, 4
      %v456 = vor.u32 %v455, %v451
      %v457 = vrot.slane %v456, 4
      %v459 = vshll.u32 %v282, 16
      %v461 = vrot.slane %v459, 5
      %v462 = vsel %vm294, %v457, %v461
      %v464 = vshrl.u32 %v242, 16
      %v466 = vrot.slane %v464, 4
      %v467 = vshll.u32 %v242, 16
      %v469 = vrot.slane %v467, 5
      %v470 = vor.u32 %v466, %v469
      %v471 = vrot.slane %v470, 4
      %v473 = vshll.u32 %v243, 16
      %v475 = vrot.slane %v473, 5
      %v476 = vsel %vm294, %v471, %v475
      %v477 = vshrl.u32 %v243, 16
      %v479 = vrot.slane %v477, 4
      %v480 = vor.u32 %v479, %v475
      %v481 = vrot.slane %v480, 4
      %v483 = vshll.u32 %v283, 16
      %v485 = vrot.slane %v483, 5
      %v486 = vsel %vm294, %v481, %v485
      %v488 = vshrl.u32 %v244, 16
      %v490 = vrot.slane %v488, 4
      %v491 = vshll.u32 %v244, 16
      %v493 = vrot.slane %v491, 5
      %v494 = vor.u32 %v490, %v493
      %v495 = vrot.slane %v494, 4
      %v497 = vshll.u32 %v245, 16
      %v499 = vrot.slane %v497, 5
      %v500 = vsel %vm294, %v495, %v499
      %v501 = vshrl.u32 %v245, 16
      %v503 = vrot.slane %v501, 4
      %v504 = vor.u32 %v503, %v499
      %v505 = vrot.slane %v504, 4
      %v507 = vshll.u32 %v284, 16
      %v509 = vrot.slane %v507, 5
      %v510 = vsel %vm294, %v505, %v509
      %v512 = vshrl.u32 %v246, 16
      %v514 = vrot.slane %v512, 4
      %v515 = vshll.u32 %v246, 16
      %v517 = vrot.slane %v515, 5
      %v518 = vor.u32 %v514, %v517
      %v519 = vrot.slane %v518, 4
      %v521 = vshll.u32 %v247, 16
      %v523 = vrot.slane %v521, 5
      %v524 = vsel %vm294, %v519, %v523
      %v525 = vshrl.u32 %v247, 16
      %v527 = vrot.slane %v525, 4
      %v528 = vor.u32 %v527, %v523
      %v529 = vrot.slane %v528, 4
      %v531 = vshll.u32 %v285, 16
      %v533 = vrot.slane %v531, 5
      %v534 = vsel %vm294, %v529, %v533
      %v536 = vshrl.u32 %v248, 16
      %v538 = vrot.slane %v536, 4
      %v539 = vshll.u32 %v248, 16
      %v541 = vrot.slane %v539, 5
      %v542 = vor.u32 %v538, %v541
      %v543 = vrot.slane %v542, 4
      %v545 = vshll.u32 %v249, 16
      %v547 = vrot.slane %v545, 5
      %v548 = vsel %vm294, %v543, %v547
      %v549 = vshrl.u32 %v249, 16
      %v551 = vrot.slane %v549, 4
      %v552 = vor.u32 %v551, %v547
      %v553 = vrot.slane %v552, 4
      %v555 = vshll.u32 %v286, 16
      %v557 = vrot.slane %v555, 5
      %v558 = vsel %vm294, %v553, %v557
      %v560 = vshrl.u32 %v250, 16
      %v562 = vrot.slane %v560, 4
      %v563 = vshll.u32 %v250, 16
      %v565 = vrot.slane %v563, 5
      %v566 = vor.u32 %v562, %v565
      %v567 = vrot.slane %v566, 4
      %v569 = vshll.u32 %v251, 16
      %v571 = vrot.slane %v569, 5
      %v572 = vsel %vm294, %v567, %v571
      %v573 = vshrl.u32 %v251, 16
      %v575 = vrot.slane %v573, 4
      %v576 = vor.u32 %v575, %v571
      %v577 = vrot.slane %v576, 4
      %v579 = vshll.u32 %v287, 16
      %v581 = vrot.slane %v579, 5
      %v582 = vsel %vm294, %v577, %v581
      %v584 = vshrl.u32 %v252, 16
      %v586 = vrot.slane %v584, 4
      %v587 = vshll.u32 %v252, 16
      %v589 = vrot.slane %v587, 5
      %v590 = vor.u32 %v586, %v589
      %v591 = vrot.slane %v590, 4
      %v593 = vshll.u32 %v253, 16
      %v595 = vrot.slane %v593, 5
      %v596 = vsel %vm294, %v591, %v595
      %v597 = vshrl.u32 %v253, 16
      %v599 = vrot.slane %v597, 4
      %v600 = vor.u32 %v599, %v595
      %v601 = vrot.slane %v600, 4
      %v603 = vshll.u32 %v288, 16
      %v605 = vrot.slane %v603, 5
      %v606 = vsel %vm294, %v601, %v605
      %v608 = vshrl.u32 %v254, 16
      %v610 = vrot.slane %v608, 4
      %v611 = vshll.u32 %v254, 16
      %v613 = vrot.slane %v611, 5
      %v614 = vor.u32 %v610, %v613
      %v615 = vrot.slane %v614, 4
      %v617 = vshll.u32 %v255, 16
      %v619 = vrot.slane %v617, 5
      %v620 = vsel %vm294, %v615, %v619
      %v621 = vshrl.u32 %v255, 16
      %v623 = vrot.slane %v621, 4
      %v624 = vor.u32 %v623, %v619
      %v625 = vrot.slane %v624, 4
      %v627 = vshll.u32 %v289, 16
      %v629 = vrot.slane %v627, 5
      %v630 = vsel %vm294, %v625, %v629
      %v632 = vshrl.u32 %v256, 16
      %v634 = vrot.slane %v632, 4
      %v635 = vshll.u32 %v256, 16
      %v637 = vrot.slane %v635, 5
      %v638 = vor.u32 %v634, %v637
      %v639 = vrot.slane %v638, 4
      %v641 = vshll.u32 %v257, 16
      %v643 = vrot.slane %v641, 5
      %v644 = vsel %vm294, %v639, %v643
      %v645 = vshrl.u32 %v257, 16
      %v647 = vrot.slane %v645, 4
      %v648 = vor.u32 %v647, %v643
      %v649 = vrot.slane %v648, 4
      %v651 = vshll.u32 %v290, 16
      %v653 = vrot.slane %v651, 5
      %v654 = vsel %vm294, %v649, %v653
      %v656 = vshrl.u32 %v258, 16
      %v658 = vrot.slane %v656, 4
      %v659 = vshll.u32 %v258, 16
      %v661 = vrot.slane %v659, 5
      %v662 = vor.u32 %v658, %v661
      %v663 = vrot.slane %v662, 4
      %v665 = vshll.u32 %v259, 16
      %v667 = vrot.slane %v665, 5
      %v668 = vsel %vm294, %v663, %v667
      %v669 = vshrl.u32 %v259, 16
      %v671 = vrot.slane %v669, 4
      %v672 = vor.u32 %v671, %v667
      %v673 = vrot.slane %v672, 4
      %v675 = vshll.u32 %v291, 16
      %v677 = vrot.slane %v675, 5
      %v678 = vsel %vm294, %v673, %v677
      %s679 = scalar_lea.vmem %s211, 64
      %v680 = vld [vmem:[%s679] sm:$0xf]
      %v681 = vld [vmem:[%s679 + $0x4] sm:$0xf]
      %v682 = vld [vmem:[%s679 + $0x8] sm:$0xf]
      %v683 = vld [vmem:[%s679 + $0xc] sm:$0xf]
      %v684 = vld [vmem:[%s679 + $0x10] sm:$0xf]
      %v685 = vld [vmem:[%s679 + $0x14] sm:$0xf]
      %v686 = vld [vmem:[%s679 + $0x18] sm:$0xf]
      %v687 = vld [vmem:[%s679 + $0x1c] sm:$0xf]
      %v688 = vld [vmem:[%s679 + $0x20] sm:$0xf]
      %v689 = vld [vmem:[%s679 + $0x24] sm:$0xf]
      %v690 = vld [vmem:[%s679 + $0x28] sm:$0xf]
      %v691 = vld [vmem:[%s679 + $0x2c] sm:$0xf]
      %v692 = vld [vmem:[%s679 + $0x30] sm:$0xf]
      %v693 = vld [vmem:[%s679 + $0x34] sm:$0xf]
      %v694 = vld [vmem:[%s679 + $0x38] sm:$0xf]
      %v695 = vld [vmem:[%s679 + $0x3c] sm:$0xf]
      %v696 = vunpack.c.l.b16 %v308
      %v697 = vunpack.c.l.b16 %v318
      %v698 = vunpack.c.l.b16 %v332
      %v699 = vunpack.c.l.b16 %v342
      %v700 = vunpack.c.l.b16 %v356
      %v701 = vunpack.c.l.b16 %v366
      %v702 = vunpack.c.l.b16 %v380
      %v703 = vunpack.c.l.b16 %v390
      %v704 = vunpack.c.l.b16 %v404
      %v705 = vunpack.c.l.b16 %v414
      %v706 = vunpack.c.l.b16 %v428
      %v707 = vunpack.c.l.b16 %v438
      %v708 = vunpack.c.l.b16 %v452
      %v709 = vunpack.c.l.b16 %v462
      %v710 = vunpack.c.l.b16 %v476
      %v711 = vunpack.c.l.b16 %v486
      %v712 = vunpack.c.l.b16 %v500
      %v713 = vunpack.c.l.b16 %v510
      %v714 = vunpack.c.l.b16 %v524
      %v715 = vunpack.c.l.b16 %v534
      %v716 = vunpack.c.l.b16 %v548
      %v717 = vunpack.c.l.b16 %v558
      %v718 = vunpack.c.l.b16 %v572
      %v719 = vunpack.c.l.b16 %v582
      %v720 = vunpack.c.l.b16 %v596
      %v721 = vunpack.c.l.b16 %v606
      %v722 = vunpack.c.l.b16 %v620
      %v723 = vunpack.c.l.b16 %v630
      %v724 = vunpack.c.l.b16 %v644
      %v725 = vunpack.c.l.b16 %v654
      %v726 = vunpack.c.l.b16 %v668
      %v727 = vunpack.c.l.b16 %v678
      %v728 = vpack.c.b16 %v697, %v696
      %v729 = vpack.c.b16 %v699, %v698
      %v730 = vpack.c.b16 %v701, %v700
      %v731 = vpack.c.b16 %v703, %v702
      %v732 = vpack.c.b16 %v705, %v704
      %v733 = vpack.c.b16 %v707, %v706
      %v734 = vpack.c.b16 %v709, %v708
      %v735 = vpack.c.b16 %v711, %v710
      %v736 = vpack.c.b16 %v713, %v712
      %v737 = vpack.c.b16 %v715, %v714
      %v738 = vpack.c.b16 %v717, %v716
      %v739 = vpack.c.b16 %v719, %v718
      %v740 = vpack.c.b16 %v721, %v720
      %v741 = vpack.c.b16 %v723, %v722
      %v742 = vpack.c.b16 %v725, %v724
      %v743 = vpack.c.b16 %v727, %v726
      %v776 = vunpack.c.l.b16 %v680
      %v777 = vunpack.c.l.b16 %v681
      %v778 = vunpack.c.l.b16 %v682
      %v779 = vunpack.c.l.b16 %v683
      %v780 = vunpack.c.l.b16 %v684
      %v781 = vunpack.c.l.b16 %v685
      %v782 = vunpack.c.l.b16 %v686
      %v783 = vunpack.c.l.b16 %v687
      %v784 = vunpack.c.l.b16 %v688
      %v785 = vunpack.c.l.b16 %v689
      %v786 = vunpack.c.l.b16 %v690
      %v787 = vunpack.c.l.b16 %v691
      %v788 = vunpack.c.l.b16 %v692
      %v789 = vunpack.c.l.b16 %v693
      %v790 = vunpack.c.l.b16 %v694
      %v791 = vunpack.c.l.b16 %v695
      %v792 = vpack.c.b16 %v777, %v776
      %v793 = vpack.c.b16 %v779, %v778
      %v794 = vpack.c.b16 %v781, %v780
      %v795 = vpack.c.b16 %v783, %v782
      %v796 = vpack.c.b16 %v785, %v784
      %v797 = vpack.c.b16 %v787, %v786
      %v798 = vpack.c.b16 %v789, %v788
      %v799 = vpack.c.b16 %v791, %v790
      %808 = vmatprep.subr.bf16.mxu0 0
      %809 = vmatpush1.bf16.msra.mxu0 %v792
      %810 = vmatprep.subr.bf16.mxu0 0
      %811 = vmatpush1.bf16.msra.mxu0 %v793
      %812 = vmatprep.subr.bf16.mxu0 0
      %813 = vmatpush1.bf16.msra.mxu0 %v794
      %814 = vmatprep.subr.bf16.mxu0 0
      %815 = vmatpush1.bf16.msra.mxu0 %v795
      %816 = vmatprep.subr.bf16.mxu0 0
      %817 = vmatpush1.bf16.msra.mxu0 %v796
      %818 = vmatprep.subr.bf16.mxu0 0
      %819 = vmatpush1.bf16.msra.mxu0 %v797
      %820 = vmatprep.subr.bf16.mxu0 0
      %821 = vmatpush1.bf16.msra.mxu0 %v798
      %822 = vmatprep.subr.bf16.mxu0 0
      %823 = vmatpush1.bf16.msra.mxu0 %v799
      %824 = vmatprep.subr.bf16.mxu0 0
      %825 = vmatpush1.bf16.msra.mxu0 0
      %826 = vmatprep.subr.bf16.mxu0 0
      %827 = vmatpush1.bf16.msra.mxu0 0
      %828 = vmatprep.subr.bf16.mxu0 0
      %829 = vmatpush1.bf16.msra.mxu0 0
      %830 = vmatprep.subr.bf16.mxu0 0
      %831 = vmatpush1.bf16.msra.mxu0 0
      %832 = vmatprep.subr.bf16.mxu0 0
      %833 = vmatpush1.bf16.msra.mxu0 0
      %834 = vmatprep.subr.bf16.mxu0 0
      %835 = vmatpush1.bf16.msra.mxu0 0
      %836 = vmatprep.subr.bf16.mxu0 0
      %837 = vmatpush1.bf16.msra.mxu0 0
      %838 = vmatprep.subr.bf16.mxu0 0
      %839 = vmatpush1.bf16.msra.mxu0 0
      %840 = vmatprep.mubr.bf16.mxu0 0
      %841 = vmatmul.mubr.bf16.gmra.mrb[0].mxu0 %v728
      %v842 = vpop.f32.mrb[0].mxu0
      %v843 = vadd.f32 0.0, %v842
      %v844 = vpop.f32.mrb[0].mxu0
      %v845 = vpop.f32.mrb[0].mxu0
      %v846 = vadd.f32 0.0, %v845
      %v847 = vpop.f32.mrb[0].mxu0
      %848 = vmatprep.mubr.bf16.mxu0 0
      %849 = vmatmul.mubr.bf16.gmra.mrb[0].mxu0 %v729
      %v850 = vpop.f32.mrb[0].mxu0
      %v851 = vadd.f32 0.0, %v850
      %v852 = vpop.f32.mrb[0].mxu0
      %v853 = vpop.f32.mrb[0].mxu0
      %v854 = vadd.f32 0.0, %v853
      %v855 = vpop.f32.mrb[0].mxu0
      %856 = vmatprep.mubr.bf16.mxu0 0
      %857 = vmatmul.mubr.bf16.gmra.mrb[0].mxu0 %v730
      %v858 = vpop.f32.mrb[0].mxu0
      %v859 = vadd.f32 0.0, %v858
      %v860 = vpop.f32.mrb[0].mxu0
      %v861 = vpop.f32.mrb[0].mxu0
      %v862 = vadd.f32 0.0, %v861
      %v863 = vpop.f32.mrb[0].mxu0
      %864 = vmatprep.mubr.bf16.mxu0 0
      %865 = vmatmul.mubr.bf16.gmra.mrb[0].mxu0 %v731
      %v866 = vpop.f32.mrb[0].mxu0
      %v867 = vadd.f32 0.0, %v866
      %v868 = vpop.f32.mrb[0].mxu0
      %v869 = vpop.f32.mrb[0].mxu0
      %v870 = vadd.f32 0.0, %v869
      %v871 = vpop.f32.mrb[0].mxu0
      %872 = vmatprep.mubr.bf16.mxu0 0
      %873 = vmatmul.mubr.bf16.gmra.mrb[0].mxu0 %v732
      %v874 = vpop.f32.mrb[0].mxu0
      %v875 = vadd.f32 0.0, %v874
      %v876 = vpop.f32.mrb[0].mxu0
      %v877 = vpop.f32.mrb[0].mxu0
      %v878 = vadd.f32 0.0, %v877
      %v879 = vpop.f32.mrb[0].mxu0
      %880 = vmatprep.mubr.bf16.mxu0 0
      %881 = vmatmul.mubr.bf16.gmra.mrb[0].mxu0 %v733
      %v882 = vpop.f32.mrb[0].mxu0
      %v883 = vadd.f32 0.0, %v882
      %v884 = vpop.f32.mrb[0].mxu0
      %v885 = vpop.f32.mrb[0].mxu0
      %v886 = vadd.f32 0.0, %v885
      %v887 = vpop.f32.mrb[0].mxu0
      %888 = vmatprep.mubr.bf16.mxu0 0
      %889 = vmatmul.mubr.bf16.gmra.mrb[0].mxu0 %v734
      %v890 = vpop.f32.mrb[0].mxu0
      %v891 = vadd.f32 0.0, %v890
      %v892 = vpop.f32.mrb[0].mxu0
      %v893 = vpop.f32.mrb[0].mxu0
      %v894 = vadd.f32 0.0, %v893
      %v895 = vpop.f32.mrb[0].mxu0
      %896 = vmatprep.mubr.bf16.mxu0 0
      %897 = vmatmul.mubr.bf16.gmra.mrb[0].mxu0 %v735
      %v898 = vpop.f32.mrb[0].mxu0
      %v899 = vadd.f32 0.0, %v898
      %v900 = vpop.f32.mrb[0].mxu0
      %v901 = vpop.f32.mrb[0].mxu0
      %v902 = vadd.f32 0.0, %v901
      %v903 = vpop.f32.mrb[0].mxu0
      %904 = vmatprep.mubr.bf16.mxu0 0
      %905 = vmatmul.mubr.bf16.gmra.mrb[0].mxu0 %v736
      %v906 = vpop.f32.mrb[0].mxu0
      %v907 = vadd.f32 0.0, %v906
      %v908 = vpop.f32.mrb[0].mxu0
      %v909 = vpop.f32.mrb[0].mxu0
      %v910 = vadd.f32 0.0, %v909
      %v911 = vpop.f32.mrb[0].mxu0
      %912 = vmatprep.mubr.bf16.mxu0 0
      %913 = vmatmul.mubr.bf16.gmra.mrb[0].mxu0 %v737
      %v914 = vpop.f32.mrb[0].mxu0
      %v915 = vadd.f32 0.0, %v914
      %v916 = vpop.f32.mrb[0].mxu0
      %v917 = vpop.f32.mrb[0].mxu0
      %v918 = vadd.f32 0.0, %v917
      %v919 = vpop.f32.mrb[0].mxu0
      %920 = vmatprep.mubr.bf16.mxu0 0
      %921 = vmatmul.mubr.bf16.gmra.mrb[0].mxu0 %v738
      %v922 = vpop.f32.mrb[0].mxu0
      %v923 = vadd.f32 0.0, %v922
      %v924 = vpop.f32.mrb[0].mxu0
      %v925 = vpop.f32.mrb[0].mxu0
      %v926 = vadd.f32 0.0, %v925
      %v927 = vpop.f32.mrb[0].mxu0
      %928 = vmatprep.mubr.bf16.mxu0 0
      %929 = vmatmul.mubr.bf16.gmra.mrb[0].mxu0 %v739
      %v930 = vpop.f32.mrb[0].mxu0
      %v931 = vadd.f32 0.0, %v930
      %v932 = vpop.f32.mrb[0].mxu0
      %v933 = vpop.f32.mrb[0].mxu0
      %v934 = vadd.f32 0.0, %v933
      %v935 = vpop.f32.mrb[0].mxu0
      %936 = vmatprep.mubr.bf16.mxu0 0
      %937 = vmatmul.mubr.bf16.gmra.mrb[0].mxu0 %v740
      %v938 = vpop.f32.mrb[0].mxu0
      %v939 = vadd.f32 0.0, %v938
      %v940 = vpop.f32.mrb[0].mxu0
      %v941 = vpop.f32.mrb[0].mxu0
      %v942 = vadd.f32 0.0, %v941
      %v943 = vpop.f32.mrb[0].mxu0
      %944 = vmatprep.mubr.bf16.mxu0 0
      %945 = vmatmul.mubr.bf16.gmra.mrb[0].mxu0 %v741
      %v946 = vpop.f32.mrb[0].mxu0
      %v947 = vadd.f32 0.0, %v946
      %v948 = vpop.f32.mrb[0].mxu0
      %v949 = vpop.f32.mrb[0].mxu0
      %v950 = vadd.f32 0.0, %v949
      %v951 = vpop.f32.mrb[0].mxu0
      %952 = vmatprep.mubr.bf16.mxu0 0
      %953 = vmatmul.mubr.bf16.gmra.mrb[0].mxu0 %v742
      %v954 = vpop.f32.mrb[0].mxu0
      %v955 = vadd.f32 0.0, %v954
      %v956 = vpop.f32.mrb[0].mxu0
      %v957 = vpop.f32.mrb[0].mxu0
      %v958 = vadd.f32 0.0, %v957
      %v959 = vpop.f32.mrb[0].mxu0
      %960 = vmatprep.mubr.bf16.mxu0 0
      %961 = vmatmul.mubr.bf16.gmra.mrb[0].mxu0 %v743
      %v962 = vpop.f32.mrb[0].mxu0
      %v963 = vadd.f32 0.0, %v962
      %v964 = vpop.f32.mrb[0].mxu0
      %v965 = vpop.f32.mrb[0].mxu0
      %v966 = vadd.f32 0.0, %v965
      %v967 = vpop.f32.mrb[0].mxu0
      %968 = vdwg.mxu0
      %v1001 = vunpack.c.l.b16 %v228
      %v1002 = vunpack.c.l.b16 %v229
      %v1003 = vunpack.c.l.b16 %v230
      %v1004 = vunpack.c.l.b16 %v231
      %v1005 = vunpack.c.l.b16 %v232
      %v1006 = vunpack.c.l.b16 %v233
      %v1007 = vunpack.c.l.b16 %v234
      %v1008 = vunpack.c.l.b16 %v235
      %v1009 = vunpack.c.l.b16 %v236
      %v1010 = vunpack.c.l.b16 %v237
      %v1011 = vunpack.c.l.b16 %v238
      %v1012 = vunpack.c.l.b16 %v239
      %v1013 = vunpack.c.l.b16 %v240
      %v1014 = vunpack.c.l.b16 %v241
      %v1015 = vunpack.c.l.b16 %v242
      %v1016 = vunpack.c.l.b16 %v243
      %v1017 = vunpack.c.l.b16 %v244
      %v1018 = vunpack.c.l.b16 %v245
      %v1019 = vunpack.c.l.b16 %v246
      %v1020 = vunpack.c.l.b16 %v247
      %v1021 = vunpack.c.l.b16 %v248
      %v1022 = vunpack.c.l.b16 %v249
      %v1023 = vunpack.c.l.b16 %v250
      %v1024 = vunpack.c.l.b16 %v251
      %v1025 = vunpack.c.l.b16 %v252
      %v1026 = vunpack.c.l.b16 %v253
      %v1027 = vunpack.c.l.b16 %v254
      %v1028 = vunpack.c.l.b16 %v255
      %v1029 = vunpack.c.l.b16 %v256
      %v1030 = vunpack.c.l.b16 %v257
      %v1031 = vunpack.c.l.b16 %v258
      %v1032 = vunpack.c.l.b16 %v259
      %v1033 = vpack.c.b16 %v1002, %v1001
      %v1034 = vpack.c.b16 %v1004, %v1003
      %v1035 = vpack.c.b16 %v1006, %v1005
      %v1036 = vpack.c.b16 %v1008, %v1007
      %v1037 = vpack.c.b16 %v1010, %v1009
      %v1038 = vpack.c.b16 %v1012, %v1011
      %v1039 = vpack.c.b16 %v1014, %v1013
      %v1040 = vpack.c.b16 %v1016, %v1015
      %v1041 = vpack.c.b16 %v1018, %v1017
      %v1042 = vpack.c.b16 %v1020, %v1019
      %v1043 = vpack.c.b16 %v1022, %v1021
      %v1044 = vpack.c.b16 %v1024, %v1023
      %v1045 = vpack.c.b16 %v1026, %v1025
      %v1046 = vpack.c.b16 %v1028, %v1027
      %v1047 = vpack.c.b16 %v1030, %v1029
      %v1048 = vpack.c.b16 %v1032, %v1031
      %v1081 = vunpack.c.l.b16 %v260
      %v1082 = vunpack.c.l.b16 %v261
      %v1083 = vunpack.c.l.b16 %v262
      %v1084 = vunpack.c.l.b16 %v263
      %v1085 = vunpack.c.l.b16 %v264
      %v1086 = vunpack.c.l.b16 %v265
      %v1087 = vunpack.c.l.b16 %v266
      %v1088 = vunpack.c.l.b16 %v267
      %v1089 = vunpack.c.l.b16 %v268
      %v1090 = vunpack.c.l.b16 %v269
      %v1091 = vunpack.c.l.b16 %v270
      %v1092 = vunpack.c.l.b16 %v271
      %v1093 = vunpack.c.l.b16 %v272
      %v1094 = vunpack.c.l.b16 %v273
      %v1095 = vunpack.c.l.b16 %v274
      %v1096 = vunpack.c.l.b16 %v275
      %v1097 = vpack.c.b16 %v1082, %v1081
      %v1098 = vpack.c.b16 %v1084, %v1083
      %v1099 = vpack.c.b16 %v1086, %v1085
      %v1100 = vpack.c.b16 %v1088, %v1087
      %v1101 = vpack.c.b16 %v1090, %v1089
      %v1102 = vpack.c.b16 %v1092, %v1091
      %v1103 = vpack.c.b16 %v1094, %v1093
      %v1104 = vpack.c.b16 %v1096, %v1095
      %1113 = vmatprep.subr.bf16.mxu0 0
      %1114 = vmatpush1.bf16.msra.mxu0 %v1097
      %1115 = vmatprep.subr.bf16.mxu0 0
      %1116 = vmatpush1.bf16.msra.mxu0 %v1098
      %1117 = vmatprep.subr.bf16.mxu0 0
      %1118 = vmatpush1.bf16.msra.mxu0 %v1099
      %1119 = vmatprep.subr.bf16.mxu0 0
      %1120 = vmatpush1.bf16.msra.mxu0 %v1100
      %1121 = vmatprep.subr.bf16.mxu0 0
      %1122 = vmatpush1.bf16.msra.mxu0 %v1101
      %1123 = vmatprep.subr.bf16.mxu0 0
      %1124 = vmatpush1.bf16.msra.mxu0 %v1102
      %1125 = vmatprep.subr.bf16.mxu0 0
      %1126 = vmatpush1.bf16.msra.mxu0 %v1103
      %1127 = vmatprep.subr.bf16.mxu0 0
      %1128 = vmatpush1.bf16.msra.mxu0 %v1104
      %1129 = vmatprep.subr.bf16.mxu0 0
      %1130 = vmatpush1.bf16.msra.mxu0 0
      %1131 = vmatprep.subr.bf16.mxu0 0
      %1132 = vmatpush1.bf16.msra.mxu0 0
      %1133 = vmatprep.subr.bf16.mxu0 0
      %1134 = vmatpush1.bf16.msra.mxu0 0
      %1135 = vmatprep.subr.bf16.mxu0 0
      %1136 = vmatpush1.bf16.msra.mxu0 0
      %1137 = vmatprep.subr.bf16.mxu0 0
      %1138 = vmatpush1.bf16.msra.mxu0 0
      %1139 = vmatprep.subr.bf16.mxu0 0
      %1140 = vmatpush1.bf16.msra.mxu0 0
      %1141 = vmatprep.subr.bf16.mxu0 0
      %1142 = vmatpush1.bf16.msra.mxu0 0
      %1143 = vmatprep.subr.bf16.mxu0 0
      %1144 = vmatpush1.bf16.msra.mxu0 0
      %1145 = vmatprep.mubr.bf16.mxu0 0
      %1146 = vmatmul.mubr.bf16.gmra.mrb[0].mxu0 %v1033
      %v1147 = vpop.f32.mrb[0].mxu0
      %v1148 = vadd.f32 %v843, %v1147
      %v1149 = vpop.f32.mrb[0].mxu0
      %v1150 = vpop.f32.mrb[0].mxu0
      %v1151 = vadd.f32 %v846, %v1150
      %v1152 = vpop.f32.mrb[0].mxu0
      %1153 = vmatprep.mubr.bf16.mxu0 0
      %1154 = vmatmul.mubr.bf16.gmra.mrb[0].mxu0 %v1034
      %v1155 = vpop.f32.mrb[0].mxu0
      %v1156 = vadd.f32 %v851, %v1155
      %v1157 = vpop.f32.mrb[0].mxu0
      %v1158 = vpop.f32.mrb[0].mxu0
      %v1159 = vadd.f32 %v854, %v1158
      %v1160 = vpop.f32.mrb[0].mxu0
      %1161 = vmatprep.mubr.bf16.mxu0 0
      %1162 = vmatmul.mubr.bf16.gmra.mrb[0].mxu0 %v1035
      %v1163 = vpop.f32.mrb[0].mxu0
      %v1164 = vadd.f32 %v859, %v1163
      %v1165 = vpop.f32.mrb[0].mxu0
      %v1166 = vpop.f32.mrb[0].mxu0
      %v1167 = vadd.f32 %v862, %v1166
      %v1168 = vpop.f32.mrb[0].mxu0
      %1169 = vmatprep.mubr.bf16.mxu0 0
      %1170 = vmatmul.mubr.bf16.gmra.mrb[0].mxu0 %v1036
      %v1171 = vpop.f32.mrb[0].mxu0
      %v1172 = vadd.f32 %v867, %v1171
      %v1173 = vpop.f32.mrb[0].mxu0
      %v1174 = vpop.f32.mrb[0].mxu0
      %v1175 = vadd.f32 %v870, %v1174
      %v1176 = vpop.f32.mrb[0].mxu0
      %1177 = vmatprep.mubr.bf16.mxu0 0
      %1178 = vmatmul.mubr.bf16.gmra.mrb[0].mxu0 %v1037
      %v1179 = vpop.f32.mrb[0].mxu0
      %v1180 = vadd.f32 %v875, %v1179
      %v1181 = vpop.f32.mrb[0].mxu0
      %v1182 = vpop.f32.mrb[0].mxu0
      %v1183 = vadd.f32 %v878, %v1182
      %v1184 = vpop.f32.mrb[0].mxu0
      %1185 = vmatprep.mubr.bf16.mxu0 0
      %1186 = vmatmul.mubr.bf16.gmra.mrb[0].mxu0 %v1038
      %v1187 = vpop.f32.mrb[0].mxu0
      %v1188 = vadd.f32 %v883, %v1187
      %v1189 = vpop.f32.mrb[0].mxu0
      %v1190 = vpop.f32.mrb[0].mxu0
      %v1191 = vadd.f32 %v886, %v1190
      %v1192 = vpop.f32.mrb[0].mxu0
      %1193 = vmatprep.mubr.bf16.mxu0 0
      %1194 = vmatmul.mubr.bf16.gmra.mrb[0].mxu0 %v1039
      %v1195 = vpop.f32.mrb[0].mxu0
      %v1196 = vadd.f32 %v891, %v1195
      %v1197 = vpop.f32.mrb[0].mxu0
      %v1198 = vpop.f32.mrb[0].mxu0
      %v1199 = vadd.f32 %v894, %v1198
      %v1200 = vpop.f32.mrb[0].mxu0
      %1201 = vmatprep.mubr.bf16.mxu0 0
      %1202 = vmatmul.mubr.bf16.gmra.mrb[0].mxu0 %v1040
      %v1203 = vpop.f32.mrb[0].mxu0
      %v1204 = vadd.f32 %v899, %v1203
      %v1205 = vpop.f32.mrb[0].mxu0
      %v1206 = vpop.f32.mrb[0].mxu0
      %v1207 = vadd.f32 %v902, %v1206
      %v1208 = vpop.f32.mrb[0].mxu0
      %1209 = vmatprep.mubr.bf16.mxu0 0
      %1210 = vmatmul.mubr.bf16.gmra.mrb[0].mxu0 %v1041
      %v1211 = vpop.f32.mrb[0].mxu0
      %v1212 = vadd.f32 %v907, %v1211
      %v1213 = vpop.f32.mrb[0].mxu0
      %v1214 = vpop.f32.mrb[0].mxu0
      %v1215 = vadd.f32 %v910, %v1214
      %v1216 = vpop.f32.mrb[0].mxu0
      %1217 = vmatprep.mubr.bf16.mxu0 0
      %1218 = vmatmul.mubr.bf16.gmra.mrb[0].mxu0 %v1042
      %v1219 = vpop.f32.mrb[0].mxu0
      %v1220 = vadd.f32 %v915, %v1219
      %v1221 = vpop.f32.mrb[0].mxu0
      %v1222 = vpop.f32.mrb[0].mxu0
      %v1223 = vadd.f32 %v918, %v1222
      %v1224 = vpop.f32.mrb[0].mxu0
      %1225 = vmatprep.mubr.bf16.mxu0 0
      %1226 = vmatmul.mubr.bf16.gmra.mrb[0].mxu0 %v1043
      %v1227 = vpop.f32.mrb[0].mxu0
      %v1228 = vadd.f32 %v923, %v1227
      %v1229 = vpop.f32.mrb[0].mxu0
      %v1230 = vpop.f32.mrb[0].mxu0
      %v1231 = vadd.f32 %v926, %v1230
      %v1232 = vpop.f32.mrb[0].mxu0
      %1233 = vmatprep.mubr.bf16.mxu0 0
      %1234 = vmatmul.mubr.bf16.gmra.mrb[0].mxu0 %v1044
      %v1235 = vpop.f32.mrb[0].mxu0
      %v1236 = vadd.f32 %v931, %v1235
      %v1237 = vpop.f32.mrb[0].mxu0
      %v1238 = vpop.f32.mrb[0].mxu0
      %v1239 = vadd.f32 %v934, %v1238
      %v1240 = vpop.f32.mrb[0].mxu0
      %1241 = vmatprep.mubr.bf16.mxu0 0
      %1242 = vmatmul.mubr.bf16.gmra.mrb[0].mxu0 %v1045
      %v1243 = vpop.f32.mrb[0].mxu0
      %v1244 = vadd.f32 %v939, %v1243
      %v1245 = vpop.f32.mrb[0].mxu0
      %v1246 = vpop.f32.mrb[0].mxu0
      %v1247 = vadd.f32 %v942, %v1246
      %v1248 = vpop.f32.mrb[0].mxu0
      %1249 = vmatprep.mubr.bf16.mxu0 0
      %1250 = vmatmul.mubr.bf16.gmra.mrb[0].mxu0 %v1046
      %v1251 = vpop.f32.mrb[0].mxu0
      %v1252 = vadd.f32 %v947, %v1251
      %v1253 = vpop.f32.mrb[0].mxu0
      %v1254 = vpop.f32.mrb[0].mxu0
      %v1255 = vadd.f32 %v950, %v1254
      %v1256 = vpop.f32.mrb[0].mxu0
      %1257 = vmatprep.mubr.bf16.mxu0 0
      %1258 = vmatmul.mubr.bf16.gmra.mrb[0].mxu0 %v1047
      %v1259 = vpop.f32.mrb[0].mxu0
      %v1260 = vadd.f32 %v955, %v1259
      %v1261 = vpop.f32.mrb[0].mxu0
      %v1262 = vpop.f32.mrb[0].mxu0
      %v1263 = vadd.f32 %v958, %v1262
      %v1264 = vpop.f32.mrb[0].mxu0
      %1265 = vmatprep.mubr.bf16.mxu0 0
      %1266 = vmatmul.mubr.bf16.gmra.mrb[0].mxu0 %v1048
      %v1267 = vpop.f32.mrb[0].mxu0
      %v1268 = vadd.f32 %v963, %v1267
      %v1269 = vpop.f32.mrb[0].mxu0
      %v1270 = vpop.f32.mrb[0].mxu0
      %v1271 = vadd.f32 %v966, %v1270
      %v1272 = vpop.f32.mrb[0].mxu0
      %1273 = vdwg.mxu0
      %v1274 = vld [vmem:[%s207] sm:$0xe]
      %v1275 = vld [vmem:[%s207 + $0xc] sm:$0xe]
      %v1276 = vld [vmem:[%s207 + $0x18] sm:$0xe]
      %v1277 = vld [vmem:[%s207 + $0x24] sm:$0xe]
      %v1278 = vld [vmem:[%s207 + $0x30] sm:$0xe]
      %v1279 = vld [vmem:[%s207 + $0x3c] sm:$0xe]
      %v1280 = vld [vmem:[%s207 + $0x48] sm:$0xe]
      %v1281 = vld [vmem:[%s207 + $0x54] sm:$0xe]
      %v1282 = vld [vmem:[%s207 + $0x60] sm:$0xe]
      %v1283 = vld [vmem:[%s207 + $0x6c] sm:$0xe]
      %v1284 = vld [vmem:[%s207 + $0x78] sm:$0xe]
      %v1285 = vld [vmem:[%s207 + $0x84] sm:$0xe]
      %v1286 = vld [vmem:[%s207 + $0x90] sm:$0xe]
      %v1287 = vld [vmem:[%s207 + $0x9c] sm:$0xe]
      %v1288 = vld [vmem:[%s207 + $0xa8] sm:$0xe]
      %v1289 = vld [vmem:[%s207 + $0xb4] sm:$0xe]
      %vm1322 = vcmask 1042432
      %vm1323 = vcmask 1046532
      %vm1324 = vmor %vm1322, %vm1323
      %v1325 = vrot.slane %v1274, 5
      %v1326 = vrot.slane %v1325, 4
      %v1327 = vrot.slane %v229, 5
      %v1328 = vsel %vm1324, %v1326, %v1327
      %v1329 = vrot.slane %v1327, 4
      %v1330 = vrot.slane %v276, 5
      %v1331 = vsel %vm1324, %v1329, %v1330
      %v1332 = vrot.slane %v1275, 5
      %v1333 = vrot.slane %v1332, 4
      %v1334 = vrot.slane %v231, 5
      %v1335 = vsel %vm1324, %v1333, %v1334
      %v1336 = vrot.slane %v1334, 4
      %v1337 = vrot.slane %v277, 5
      %v1338 = vsel %vm1324, %v1336, %v1337
      %v1339 = vrot.slane %v1276, 5
      %v1340 = vrot.slane %v1339, 4
      %v1341 = vrot.slane %v233, 5
      %v1342 = vsel %vm1324, %v1340, %v1341
      %v1343 = vrot.slane %v1341, 4
      %v1344 = vrot.slane %v278, 5
      %v1345 = vsel %vm1324, %v1343, %v1344
      %v1346 = vrot.slane %v1277, 5
      %v1347 = vrot.slane %v1346, 4
      %v1348 = vrot.slane %v235, 5
      %v1349 = vsel %vm1324, %v1347, %v1348
      %v1350 = vrot.slane %v1348, 4
      %v1351 = vrot.slane %v279, 5
      %v1352 = vsel %vm1324, %v1350, %v1351
      %v1353 = vrot.slane %v1278, 5
      %v1354 = vrot.slane %v1353, 4
      %v1355 = vrot.slane %v237, 5
      %v1356 = vsel %vm1324, %v1354, %v1355
      %v1357 = vrot.slane %v1355, 4
      %v1358 = vrot.slane %v280, 5
      %v1359 = vsel %vm1324, %v1357, %v1358
      %v1360 = vrot.slane %v1279, 5
      %v1361 = vrot.slane %v1360, 4
      %v1362 = vrot.slane %v239, 5
      %v1363 = vsel %vm1324, %v1361, %v1362
      %v1364 = vrot.slane %v1362, 4
      %v1365 = vrot.slane %v281, 5
      %v1366 = vsel %vm1324, %v1364, %v1365
      %v1367 = vrot.slane %v1280, 5
      %v1368 = vrot.slane %v1367, 4
      %v1369 = vrot.slane %v241, 5
      %v1370 = vsel %vm1324, %v1368, %v1369
      %v1371 = vrot.slane %v1369, 4
      %v1372 = vrot.slane %v282, 5
      %v1373 = vsel %vm1324, %v1371, %v1372
      %v1374 = vrot.slane %v1281, 5
      %v1375 = vrot.slane %v1374, 4
      %v1376 = vrot.slane %v243, 5
      %v1377 = vsel %vm1324, %v1375, %v1376
      %v1378 = vrot.slane %v1376, 4
      %v1379 = vrot.slane %v283, 5
      %v1380 = vsel %vm1324, %v1378, %v1379
      %v1381 = vrot.slane %v1282, 5
      %v1382 = vrot.slane %v1381, 4
      %v1383 = vrot.slane %v245, 5
      %v1384 = vsel %vm1324, %v1382, %v1383
      %v1385 = vrot.slane %v1383, 4
      %v1386 = vrot.slane %v284, 5
      %v1387 = vsel %vm1324, %v1385, %v1386
      %v1388 = vrot.slane %v1283, 5
      %v1389 = vrot.slane %v1388, 4
      %v1390 = vrot.slane %v247, 5
      %v1391 = vsel %vm1324, %v1389, %v1390
      %v1392 = vrot.slane %v1390, 4
      %v1393 = vrot.slane %v285, 5
      %v1394 = vsel %vm1324, %v1392, %v1393
      %v1395 = vrot.slane %v1284, 5
      %v1396 = vrot.slane %v1395, 4
      %v1397 = vrot.slane %v249, 5
      %v1398 = vsel %vm1324, %v1396, %v1397
      %v1399 = vrot.slane %v1397, 4
      %v1400 = vrot.slane %v286, 5
      %v1401 = vsel %vm1324, %v1399, %v1400
      %v1402 = vrot.slane %v1285, 5
      %v1403 = vrot.slane %v1402, 4
      %v1404 = vrot.slane %v251, 5
      %v1405 = vsel %vm1324, %v1403, %v1404
      %v1406 = vrot.slane %v1404, 4
      %v1407 = vrot.slane %v287, 5
      %v1408 = vsel %vm1324, %v1406, %v1407
      %v1409 = vrot.slane %v1286, 5
      %v1410 = vrot.slane %v1409, 4
      %v1411 = vrot.slane %v253, 5
      %v1412 = vsel %vm1324, %v1410, %v1411
      %v1413 = vrot.slane %v1411, 4
      %v1414 = vrot.slane %v288, 5
      %v1415 = vsel %vm1324, %v1413, %v1414
      %v1416 = vrot.slane %v1287, 5
      %v1417 = vrot.slane %v1416, 4
      %v1418 = vrot.slane %v255, 5
      %v1419 = vsel %vm1324, %v1417, %v1418
      %v1420 = vrot.slane %v1418, 4
      %v1421 = vrot.slane %v289, 5
      %v1422 = vsel %vm1324, %v1420, %v1421
      %v1423 = vrot.slane %v1288, 5
      %v1424 = vrot.slane %v1423, 4
      %v1425 = vrot.slane %v257, 5
      %v1426 = vsel %vm1324, %v1424, %v1425
      %v1427 = vrot.slane %v1425, 4
      %v1428 = vrot.slane %v290, 5
      %v1429 = vsel %vm1324, %v1427, %v1428
      %v1430 = vrot.slane %v1289, 5
      %v1431 = vrot.slane %v1430, 4
      %v1432 = vrot.slane %v259, 5
      %v1433 = vsel %vm1324, %v1431, %v1432
      %v1434 = vrot.slane %v1432, 4
      %v1435 = vrot.slane %v291, 5
      %v1436 = vsel %vm1324, %v1434, %v1435
      %s1437 = scalar_lea.vmem %s211, 128
      %v1438 = vld [vmem:[%s1437] sm:$0xf]
      %v1439 = vld [vmem:[%s1437 + $0x4] sm:$0xf]
      %v1440 = vld [vmem:[%s1437 + $0x8] sm:$0xf]
      %v1441 = vld [vmem:[%s1437 + $0xc] sm:$0xf]
      %v1442 = vld [vmem:[%s1437 + $0x10] sm:$0xf]
      %v1443 = vld [vmem:[%s1437 + $0x14] sm:$0xf]
      %v1444 = vld [vmem:[%s1437 + $0x18] sm:$0xf]
      %v1445 = vld [vmem:[%s1437 + $0x1c] sm:$0xf]
      %v1446 = vld [vmem:[%s1437 + $0x20] sm:$0xf]
      %v1447 = vld [vmem:[%s1437 + $0x24] sm:$0xf]
      %v1448 = vld [vmem:[%s1437 + $0x28] sm:$0xf]
      %v1449 = vld [vmem:[%s1437 + $0x2c] sm:$0xf]
      %v1450 = vld [vmem:[%s1437 + $0x30] sm:$0xf]
      %v1451 = vld [vmem:[%s1437 + $0x34] sm:$0xf]
      %v1452 = vld [vmem:[%s1437 + $0x38] sm:$0xf]
      %v1453 = vld [vmem:[%s1437 + $0x3c] sm:$0xf]
      %v1454 = vunpack.c.l.b16 %v1328
      %v1455 = vunpack.c.l.b16 %v1331
      %v1456 = vunpack.c.l.b16 %v1335
      %v1457 = vunpack.c.l.b16 %v1338
      %v1458 = vunpack.c.l.b16 %v1342
      %v1459 = vunpack.c.l.b16 %v1345
      %v1460 = vunpack.c.l.b16 %v1349
      %v1461 = vunpack.c.l.b16 %v1352
      %v1462 = vunpack.c.l.b16 %v1356
      %v1463 = vunpack.c.l.b16 %v1359
      %v1464 = vunpack.c.l.b16 %v1363
      %v1465 = vunpack.c.l.b16 %v1366
      %v1466 = vunpack.c.l.b16 %v1370
      %v1467 = vunpack.c.l.b16 %v1373
      %v1468 = vunpack.c.l.b16 %v1377
      %v1469 = vunpack.c.l.b16 %v1380
      %v1470 = vunpack.c.l.b16 %v1384
      %v1471 = vunpack.c.l.b16 %v1387
      %v1472 = vunpack.c.l.b16 %v1391
      %v1473 = vunpack.c.l.b16 %v1394
      %v1474 = vunpack.c.l.b16 %v1398
      %v1475 = vunpack.c.l.b16 %v1401
      %v1476 = vunpack.c.l.b16 %v1405
      %v1477 = vunpack.c.l.b16 %v1408
      %v1478 = vunpack.c.l.b16 %v1412
      %v1479 = vunpack.c.l.b16 %v1415
      %v1480 = vunpack.c.l.b16 %v1419
      %v1481 = vunpack.c.l.b16 %v1422
      %v1482 = vunpack.c.l.b16 %v1426
      %v1483 = vunpack.c.l.b16 %v1429
      %v1484 = vunpack.c.l.b16 %v1433
      %v1485 = vunpack.c.l.b16 %v1436
      %v1486 = vpack.c.b16 %v1455, %v1454
      %v1487 = vpack.c.b16 %v1457, %v1456
      %v1488 = vpack.c.b16 %v1459, %v1458
      %v1489 = vpack.c.b16 %v1461, %v1460
      %v1490 = vpack.c.b16 %v1463, %v1462
      %v1491 = vpack.c.b16 %v1465, %v1464
      %v1492 = vpack.c.b16 %v1467, %v1466
      %v1493 = vpack.c.b16 %v1469, %v1468
      %v1494 = vpack.c.b16 %v1471, %v1470
      %v1495 = vpack.c.b16 %v1473, %v1472
      %v1496 = vpack.c.b16 %v1475, %v1474
      %v1497 = vpack.c.b16 %v1477, %v1476
      %v1498 = vpack.c.b16 %v1479, %v1478
      %v1499 = vpack.c.b16 %v1481, %v1480
      %v1500 = vpack.c.b16 %v1483, %v1482
      %v1501 = vpack.c.b16 %v1485, %v1484
      %v1534 = vunpack.c.l.b16 %v1438
      %v1535 = vunpack.c.l.b16 %v1439
      %v1536 = vunpack.c.l.b16 %v1440
      %v1537 = vunpack.c.l.b16 %v1441
      %v1538 = vunpack.c.l.b16 %v1442
      %v1539 = vunpack.c.l.b16 %v1443
      %v1540 = vunpack.c.l.b16 %v1444
      %v1541 = vunpack.c.l.b16 %v1445
      %v1542 = vunpack.c.l.b16 %v1446
      %v1543 = vunpack.c.l.b16 %v1447
      %v1544 = vunpack.c.l.b16 %v1448
      %v1545 = vunpack.c.l.b16 %v1449
      %v1546 = vunpack.c.l.b16 %v1450
      %v1547 = vunpack.c.l.b16 %v1451
      %v1548 = vunpack.c.l.b16 %v1452
      %v1549 = vunpack.c.l.b16 %v1453
      %v1550 = vpack.c.b16 %v1535, %v1534
      %v1551 = vpack.c.b16 %v1537, %v1536
      %v1552 = vpack.c.b16 %v1539, %v1538
      %v1553 = vpack.c.b16 %v1541, %v1540
      %v1554 = vpack.c.b16 %v1543, %v1542
      %v1555 = vpack.c.b16 %v1545, %v1544
      %v1556 = vpack.c.b16 %v1547, %v1546
      %v1557 = vpack.c.b16 %v1549, %v1548
      %1566 = vmatprep.subr.bf16.mxu0 0
      %1567 = vmatpush1.bf16.msra.mxu0 %v1550
      %1568 = vmatprep.subr.bf16.mxu0 0
      %1569 = vmatpush1.bf16.msra.mxu0 %v1551
      %1570 = vmatprep.subr.bf16.mxu0 0
      %1571 = vmatpush1.bf16.msra.mxu0 %v1552
      %1572 = vmatprep.subr.bf16.mxu0 0
      %1573 = vmatpush1.bf16.msra.mxu0 %v1553
      %1574 = vmatprep.subr.bf16.mxu0 0
      %1575 = vmatpush1.bf16.msra.mxu0 %v1554
      %1576 = vmatprep.subr.bf16.mxu0 0
      %1577 = vmatpush1.bf16.msra.mxu0 %v1555
      %1578 = vmatprep.subr.bf16.mxu0 0
      %1579 = vmatpush1.bf16.msra.mxu0 %v1556
      %1580 = vmatprep.subr.bf16.mxu0 0
      %1581 = vmatpush1.bf16.msra.mxu0 %v1557
      %1582 = vmatprep.subr.bf16.mxu0 0
      %1583 = vmatpush1.bf16.msra.mxu0 0
      %1584 = vmatprep.subr.bf16.mxu0 0
      %1585 = vmatpush1.bf16.msra.mxu0 0
      %1586 = vmatprep.subr.bf16.mxu0 0
      %1587 = vmatpush1.bf16.msra.mxu0 0
      %1588 = vmatprep.subr.bf16.mxu0 0
      %1589 = vmatpush1.bf16.msra.mxu0 0
      %1590 = vmatprep.subr.bf16.mxu0 0
      %1591 = vmatpush1.bf16.msra.mxu0 0
      %1592 = vmatprep.subr.bf16.mxu0 0
      %1593 = vmatpush1.bf16.msra.mxu0 0
      %1594 = vmatprep.subr.bf16.mxu0 0
      %1595 = vmatpush1.bf16.msra.mxu0 0
      %1596 = vmatprep.subr.bf16.mxu0 0
      %1597 = vmatpush1.bf16.msra.mxu0 0
      %1598 = vmatprep.mubr.bf16.mxu0 0
      %1599 = vmatmul.mubr.bf16.gmra.mrb[0].mxu0 %v1486
      %v1600 = vpop.f32.mrb[0].mxu0
      %v1601 = vadd.f32 0.0, %v1600
      %v1602 = vpop.f32.mrb[0].mxu0
      %v1603 = vpop.f32.mrb[0].mxu0
      %v1604 = vadd.f32 0.0, %v1603
      %v1605 = vpop.f32.mrb[0].mxu0
      %1606 = vmatprep.mubr.bf16.mxu0 0
      %1607 = vmatmul.mubr.bf16.gmra.mrb[0].mxu0 %v1487
      %v1608 = vpop.f32.mrb[0].mxu0
      %v1609 = vadd.f32 0.0, %v1608
      %v1610 = vpop.f32.mrb[0].mxu0
      %v1611 = vpop.f32.mrb[0].mxu0
      %v1612 = vadd.f32 0.0, %v1611
      %v1613 = vpop.f32.mrb[0].mxu0
      %1614 = vmatprep.mubr.bf16.mxu0 0
      %1615 = vmatmul.mubr.bf16.gmra.mrb[0].mxu0 %v1488
      %v1616 = vpop.f32.mrb[0].mxu0
      %v1617 = vadd.f32 0.0, %v1616
      %v1618 = vpop.f32.mrb[0].mxu0
      %v1619 = vpop.f32.mrb[0].mxu0
      %v1620 = vadd.f32 0.0, %v1619
      %v1621 = vpop.f32.mrb[0].mxu0
      %1622 = vmatprep.mubr.bf16.mxu0 0
      %1623 = vmatmul.mubr.bf16.gmra.mrb[0].mxu0 %v1489
      %v1624 = vpop.f32.mrb[0].mxu0
      %v1625 = vadd.f32 0.0, %v1624
      %v1626 = vpop.f32.mrb[0].mxu0
      %v1627 = vpop.f32.mrb[0].mxu0
      %v1628 = vadd.f32 0.0, %v1627
      %v1629 = vpop.f32.mrb[0].mxu0
      %1630 = vmatprep.mubr.bf16.mxu0 0
      %1631 = vmatmul.mubr.bf16.gmra.mrb[0].mxu0 %v1490
      %v1632 = vpop.f32.mrb[0].mxu0
      %v1633 = vadd.f32 0.0, %v1632
      %v1634 = vpop.f32.mrb[0].mxu0
      %v1635 = vpop.f32.mrb[0].mxu0
      %v1636 = vadd.f32 0.0, %v1635
      %v1637 = vpop.f32.mrb[0].mxu0
      %1638 = vmatprep.mubr.bf16.mxu0 0
      %1639 = vmatmul.mubr.bf16.gmra.mrb[0].mxu0 %v1491
      %v1640 = vpop.f32.mrb[0].mxu0
      %v1641 = vadd.f32 0.0, %v1640
      %v1642 = vpop.f32.mrb[0].mxu0
      %v1643 = vpop.f32.mrb[0].mxu0
      %v1644 = vadd.f32 0.0, %v1643
      %v1645 = vpop.f32.mrb[0].mxu0
      %1646 = vmatprep.mubr.bf16.mxu0 0
      %1647 = vmatmul.mubr.bf16.gmra.mrb[0].mxu0 %v1492
      %v1648 = vpop.f32.mrb[0].mxu0
      %v1649 = vadd.f32 0.0, %v1648
      %v1650 = vpop.f32.mrb[0].mxu0
      %v1651 = vpop.f32.mrb[0].mxu0
      %v1652 = vadd.f32 0.0, %v1651
      %v1653 = vpop.f32.mrb[0].mxu0
      %1654 = vmatprep.mubr.bf16.mxu0 0
      %1655 = vmatmul.mubr.bf16.gmra.mrb[0].mxu0 %v1493
      %v1656 = vpop.f32.mrb[0].mxu0
      %v1657 = vadd.f32 0.0, %v1656
      %v1658 = vpop.f32.mrb[0].mxu0
      %v1659 = vpop.f32.mrb[0].mxu0
      %v1660 = vadd.f32 0.0, %v1659
      %v1661 = vpop.f32.mrb[0].mxu0
      %1662 = vmatprep.mubr.bf16.mxu0 0
      %1663 = vmatmul.mubr.bf16.gmra.mrb[0].mxu0 %v1494
      %v1664 = vpop.f32.mrb[0].mxu0
      %v1665 = vadd.f32 0.0, %v1664
      %v1666 = vpop.f32.mrb[0].mxu0
      %v1667 = vpop.f32.mrb[0].mxu0
      %v1668 = vadd.f32 0.0, %v1667
      %v1669 = vpop.f32.mrb[0].mxu0
      %1670 = vmatprep.mubr.bf16.mxu0 0
      %1671 = vmatmul.mubr.bf16.gmra.mrb[0].mxu0 %v1495
      %v1672 = vpop.f32.mrb[0].mxu0
      %v1673 = vadd.f32 0.0, %v1672
      %v1674 = vpop.f32.mrb[0].mxu0
      %v1675 = vpop.f32.mrb[0].mxu0
      %v1676 = vadd.f32 0.0, %v1675
      %v1677 = vpop.f32.mrb[0].mxu0
      %1678 = vmatprep.mubr.bf16.mxu0 0
      %1679 = vmatmul.mubr.bf16.gmra.mrb[0].mxu0 %v1496
      %v1680 = vpop.f32.mrb[0].mxu0
      %v1681 = vadd.f32 0.0, %v1680
      %v1682 = vpop.f32.mrb[0].mxu0
      %v1683 = vpop.f32.mrb[0].mxu0
      %v1684 = vadd.f32 0.0, %v1683
      %v1685 = vpop.f32.mrb[0].mxu0
      %1686 = vmatprep.mubr.bf16.mxu0 0
      %1687 = vmatmul.mubr.bf16.gmra.mrb[0].mxu0 %v1497
      %v1688 = vpop.f32.mrb[0].mxu0
      %v1689 = vadd.f32 0.0, %v1688
      %v1690 = vpop.f32.mrb[0].mxu0
      %v1691 = vpop.f32.mrb[0].mxu0
      %v1692 = vadd.f32 0.0, %v1691
      %v1693 = vpop.f32.mrb[0].mxu0
      %1694 = vmatprep.mubr.bf16.mxu0 0
      %1695 = vmatmul.mubr.bf16.gmra.mrb[0].mxu0 %v1498
      %v1696 = vpop.f32.mrb[0].mxu0
      %v1697 = vadd.f32 0.0, %v1696
      %v1698 = vpop.f32.mrb[0].mxu0
      %v1699 = vpop.f32.mrb[0].mxu0
      %v1700 = vadd.f32 0.0, %v1699
      %v1701 = vpop.f32.mrb[0].mxu0
      %1702 = vmatprep.mubr.bf16.mxu0 0
      %1703 = vmatmul.mubr.bf16.gmra.mrb[0].mxu0 %v1499
      %v1704 = vpop.f32.mrb[0].mxu0
      %v1705 = vadd.f32 0.0, %v1704
      %v1706 = vpop.f32.mrb[0].mxu0
      %v1707 = vpop.f32.mrb[0].mxu0
      %v1708 = vadd.f32 0.0, %v1707
      %v1709 = vpop.f32.mrb[0].mxu0
      %1710 = vmatprep.mubr.bf16.mxu0 0
      %1711 = vmatmul.mubr.bf16.gmra.mrb[0].mxu0 %v1500
      %v1712 = vpop.f32.mrb[0].mxu0
      %v1713 = vadd.f32 0.0, %v1712
      %v1714 = vpop.f32.mrb[0].mxu0
      %v1715 = vpop.f32.mrb[0].mxu0
      %v1716 = vadd.f32 0.0, %v1715
      %v1717 = vpop.f32.mrb[0].mxu0
      %1718 = vmatprep.mubr.bf16.mxu0 0
      %1719 = vmatmul.mubr.bf16.gmra.mrb[0].mxu0 %v1501
      %v1720 = vpop.f32.mrb[0].mxu0
      %v1721 = vadd.f32 0.0, %v1720
      %v1722 = vpop.f32.mrb[0].mxu0
      %v1723 = vpop.f32.mrb[0].mxu0
      %v1724 = vadd.f32 0.0, %v1723
      %v1725 = vpop.f32.mrb[0].mxu0
      %1726 = vdwg.mxu0
      %v1727 = vadd.f32 %v1148, %v1601
      %v1728 = vadd.f32 %v1151, %v1604
      %v1729 = vadd.f32 %v1156, %v1609
      %v1730 = vadd.f32 %v1159, %v1612
      %v1731 = vadd.f32 %v1164, %v1617
      %v1732 = vadd.f32 %v1167, %v1620
      %v1733 = vadd.f32 %v1172, %v1625
      %v1734 = vadd.f32 %v1175, %v1628
      %v1735 = vadd.f32 %v1180, %v1633
      %v1736 = vadd.f32 %v1183, %v1636
      %v1737 = vadd.f32 %v1188, %v1641
      %v1738 = vadd.f32 %v1191, %v1644
      %v1739 = vadd.f32 %v1196, %v1649
      %v1740 = vadd.f32 %v1199, %v1652
      %v1741 = vadd.f32 %v1204, %v1657
      %v1742 = vadd.f32 %v1207, %v1660
      %v1743 = vadd.f32 %v1212, %v1665
      %v1744 = vadd.f32 %v1215, %v1668
      %v1745 = vadd.f32 %v1220, %v1673
      %v1746 = vadd.f32 %v1223, %v1676
      %v1747 = vadd.f32 %v1228, %v1681
      %v1748 = vadd.f32 %v1231, %v1684
      %v1749 = vadd.f32 %v1236, %v1689
      %v1750 = vadd.f32 %v1239, %v1692
      %v1751 = vadd.f32 %v1244, %v1697
      %v1752 = vadd.f32 %v1247, %v1700
      %v1753 = vadd.f32 %v1252, %v1705
      %v1754 = vadd.f32 %v1255, %v1708
      %v1755 = vadd.f32 %v1260, %v1713
      %v1756 = vadd.f32 %v1263, %v1716
      %v1757 = vadd.f32 %v1268, %v1721
      %v1758 = vadd.f32 %v1271, %v1724
      %s1759 = scalar_lea.vmem %s207, 12
      %v1760 = vld [vmem:[%s1759] sm:$0xf]
      %v1761 = vld [vmem:[%s1759 + $0x4] sm:$0xf]
      %v1762 = vld [vmem:[%s1759 + $0xc] sm:$0xf]
      %v1763 = vld [vmem:[%s1759 + $0x10] sm:$0xf]
      %v1764 = vld [vmem:[%s1759 + $0x18] sm:$0xf]
      %v1765 = vld [vmem:[%s1759 + $0x1c] sm:$0xf]
      %v1766 = vld [vmem:[%s1759 + $0x24] sm:$0xf]
      %v1767 = vld [vmem:[%s1759 + $0x28] sm:$0xf]
      %v1768 = vld [vmem:[%s1759 + $0x30] sm:$0xf]
      %v1769 = vld [vmem:[%s1759 + $0x34] sm:$0xf]
      %v1770 = vld [vmem:[%s1759 + $0x3c] sm:$0xf]
      %v1771 = vld [vmem:[%s1759 + $0x40] sm:$0xf]
      %v1772 = vld [vmem:[%s1759 + $0x48] sm:$0xf]
      %v1773 = vld [vmem:[%s1759 + $0x4c] sm:$0xf]
      %v1774 = vld [vmem:[%s1759 + $0x54] sm:$0xf]
      %v1775 = vld [vmem:[%s1759 + $0x58] sm:$0xf]
      %v1776 = vld [vmem:[%s1759 + $0x60] sm:$0xf]
      %v1777 = vld [vmem:[%s1759 + $0x64] sm:$0xf]
      %v1778 = vld [vmem:[%s1759 + $0x6c] sm:$0xf]
      %v1779 = vld [vmem:[%s1759 + $0x70] sm:$0xf]
      %v1780 = vld [vmem:[%s1759 + $0x78] sm:$0xf]
      %v1781 = vld [vmem:[%s1759 + $0x7c] sm:$0xf]
      %v1782 = vld [vmem:[%s1759 + $0x84] sm:$0xf]
      %v1783 = vld [vmem:[%s1759 + $0x88] sm:$0xf]
      %v1784 = vld [vmem:[%s1759 + $0x90] sm:$0xf]
      %v1785 = vld [vmem:[%s1759 + $0x94] sm:$0xf]
      %v1786 = vld [vmem:[%s1759 + $0x9c] sm:$0xf]
      %v1787 = vld [vmem:[%s1759 + $0xa0] sm:$0xf]
      %v1788 = vld [vmem:[%s1759 + $0xa8] sm:$0xf]
      %v1789 = vld [vmem:[%s1759 + $0xac] sm:$0xf]
      %v1790 = vld [vmem:[%s1759 + $0xb4] sm:$0xf]
      %v1791 = vld [vmem:[%s1759 + $0xb8] sm:$0xf]
      %s1792 = scalar_lea.vmem %s211, 192
      %v1793 = vld [vmem:[%s1792] sm:$0xf]
      %v1794 = vld [vmem:[%s1792 + $0x4] sm:$0xf]
      %v1795 = vld [vmem:[%s1792 + $0x8] sm:$0xf]
      %v1796 = vld [vmem:[%s1792 + $0xc] sm:$0xf]
      %v1797 = vld [vmem:[%s1792 + $0x10] sm:$0xf]
      %v1798 = vld [vmem:[%s1792 + $0x14] sm:$0xf]
      %v1799 = vld [vmem:[%s1792 + $0x18] sm:$0xf]
      %v1800 = vld [vmem:[%s1792 + $0x1c] sm:$0xf]
      %v1801 = vld [vmem:[%s1792 + $0x20] sm:$0xf]
      %v1802 = vld [vmem:[%s1792 + $0x24] sm:$0xf]
      %v1803 = vld [vmem:[%s1792 + $0x28] sm:$0xf]
      %v1804 = vld [vmem:[%s1792 + $0x2c] sm:$0xf]
      %v1805 = vld [vmem:[%s1792 + $0x30] sm:$0xf]
      %v1806 = vld [vmem:[%s1792 + $0x34] sm:$0xf]
      %v1807 = vld [vmem:[%s1792 + $0x38] sm:$0xf]
      %v1808 = vld [vmem:[%s1792 + $0x3c] sm:$0xf]
      %v1841 = vunpack.c.l.b16 %v1760
      %v1842 = vunpack.c.l.b16 %v1761
      %v1843 = vunpack.c.l.b16 %v1762
      %v1844 = vunpack.c.l.b16 %v1763
      %v1845 = vunpack.c.l.b16 %v1764
      %v1846 = vunpack.c.l.b16 %v1765
      %v1847 = vunpack.c.l.b16 %v1766
      %v1848 = vunpack.c.l.b16 %v1767
      %v1849 = vunpack.c.l.b16 %v1768
      %v1850 = vunpack.c.l.b16 %v1769
      %v1851 = vunpack.c.l.b16 %v1770
      %v1852 = vunpack.c.l.b16 %v1771
      %v1853 = vunpack.c.l.b16 %v1772
      %v1854 = vunpack.c.l.b16 %v1773
      %v1855 = vunpack.c.l.b16 %v1774
      %v1856 = vunpack.c.l.b16 %v1775
      %v1857 = vunpack.c.l.b16 %v1776
      %v1858 = vunpack.c.l.b16 %v1777
      %v1859 = vunpack.c.l.b16 %v1778
      %v1860 = vunpack.c.l.b16 %v1779
      %v1861 = vunpack.c.l.b16 %v1780
      %v1862 = vunpack.c.l.b16 %v1781
      %v1863 = vunpack.c.l.b16 %v1782
      %v1864 = vunpack.c.l.b16 %v1783
      %v1865 = vunpack.c.l.b16 %v1784
      %v1866 = vunpack.c.l.b16 %v1785
      %v1867 = vunpack.c.l.b16 %v1786
      %v1868 = vunpack.c.l.b16 %v1787
      %v1869 = vunpack.c.l.b16 %v1788
      %v1870 = vunpack.c.l.b16 %v1789
      %v1871 = vunpack.c.l.b16 %v1790
      %v1872 = vunpack.c.l.b16 %v1791
      %v1873 = vpack.c.b16 %v1842, %v1841
      %v1874 = vpack.c.b16 %v1844, %v1843
      %v1875 = vpack.c.b16 %v1846, %v1845
      %v1876 = vpack.c.b16 %v1848, %v1847
      %v1877 = vpack.c.b16 %v1850, %v1849
      %v1878 = vpack.c.b16 %v1852, %v1851
      %v1879 = vpack.c.b16 %v1854, %v1853
      %v1880 = vpack.c.b16 %v1856, %v1855
      %v1881 = vpack.c.b16 %v1858, %v1857
      %v1882 = vpack.c.b16 %v1860, %v1859
      %v1883 = vpack.c.b16 %v1862, %v1861
      %v1884 = vpack.c.b16 %v1864, %v1863
      %v1885 = vpack.c.b16 %v1866, %v1865
      %v1886 = vpack.c.b16 %v1868, %v1867
      %v1887 = vpack.c.b16 %v1870, %v1869
      %v1888 = vpack.c.b16 %v1872, %v1871
      %v1921 = vunpack.c.l.b16 %v1793
      %v1922 = vunpack.c.l.b16 %v1794
      %v1923 = vunpack.c.l.b16 %v1795
      %v1924 = vunpack.c.l.b16 %v1796
      %v1925 = vunpack.c.l.b16 %v1797
      %v1926 = vunpack.c.l.b16 %v1798
      %v1927 = vunpack.c.l.b16 %v1799
      %v1928 = vunpack.c.l.b16 %v1800
      %v1929 = vunpack.c.l.b16 %v1801
      %v1930 = vunpack.c.l.b16 %v1802
      %v1931 = vunpack.c.l.b16 %v1803
      %v1932 = vunpack.c.l.b16 %v1804
      %v1933 = vunpack.c.l.b16 %v1805
      %v1934 = vunpack.c.l.b16 %v1806
      %v1935 = vunpack.c.l.b16 %v1807
      %v1936 = vunpack.c.l.b16 %v1808
      %v1937 = vpack.c.b16 %v1922, %v1921
      %v1938 = vpack.c.b16 %v1924, %v1923
      %v1939 = vpack.c.b16 %v1926, %v1925
      %v1940 = vpack.c.b16 %v1928, %v1927
      %v1941 = vpack.c.b16 %v1930, %v1929
      %v1942 = vpack.c.b16 %v1932, %v1931
      %v1943 = vpack.c.b16 %v1934, %v1933
      %v1944 = vpack.c.b16 %v1936, %v1935
      %1953 = vmatprep.subr.bf16.mxu0 0
      %1954 = vmatpush1.bf16.msra.mxu0 %v1937
      %1955 = vmatprep.subr.bf16.mxu0 0
      %1956 = vmatpush1.bf16.msra.mxu0 %v1938
      %1957 = vmatprep.subr.bf16.mxu0 0
      %1958 = vmatpush1.bf16.msra.mxu0 %v1939
      %1959 = vmatprep.subr.bf16.mxu0 0
      %1960 = vmatpush1.bf16.msra.mxu0 %v1940
      %1961 = vmatprep.subr.bf16.mxu0 0
      %1962 = vmatpush1.bf16.msra.mxu0 %v1941
      %1963 = vmatprep.subr.bf16.mxu0 0
      %1964 = vmatpush1.bf16.msra.mxu0 %v1942
      %1965 = vmatprep.subr.bf16.mxu0 0
      %1966 = vmatpush1.bf16.msra.mxu0 %v1943
      %1967 = vmatprep.subr.bf16.mxu0 0
      %1968 = vmatpush1.bf16.msra.mxu0 %v1944
      %1969 = vmatprep.subr.bf16.mxu0 0
      %1970 = vmatpush1.bf16.msra.mxu0 0
      %1971 = vmatprep.subr.bf16.mxu0 0
      %1972 = vmatpush1.bf16.msra.mxu0 0
      %1973 = vmatprep.subr.bf16.mxu0 0
      %1974 = vmatpush1.bf16.msra.mxu0 0
      %1975 = vmatprep.subr.bf16.mxu0 0
      %1976 = vmatpush1.bf16.msra.mxu0 0
      %1977 = vmatprep.subr.bf16.mxu0 0
      %1978 = vmatpush1.bf16.msra.mxu0 0
      %1979 = vmatprep.subr.bf16.mxu0 0
      %1980 = vmatpush1.bf16.msra.mxu0 0
      %1981 = vmatprep.subr.bf16.mxu0 0
      %1982 = vmatpush1.bf16.msra.mxu0 0
      %1983 = vmatprep.subr.bf16.mxu0 0
      %1984 = vmatpush1.bf16.msra.mxu0 0
      %1985 = vmatprep.mubr.bf16.mxu0 0
      %1986 = vmatmul.mubr.bf16.gmra.mrb[0].mxu0 %v1873
      %v1987 = vpop.f32.mrb[0].mxu0
      %v1988 = vadd.f32 0.0, %v1987
      %v1989 = vpop.f32.mrb[0].mxu0
      %v1990 = vpop.f32.mrb[0].mxu0
      %v1991 = vadd.f32 0.0, %v1990
      %v1992 = vpop.f32.mrb[0].mxu0
      %1993 = vmatprep.mubr.bf16.mxu0 0
      %1994 = vmatmul.mubr.bf16.gmra.mrb[0].mxu0 %v1874
      %v1995 = vpop.f32.mrb[0].mxu0
      %v1996 = vadd.f32 0.0, %v1995
      %v1997 = vpop.f32.mrb[0].mxu0
      %v1998 = vpop.f32.mrb[0].mxu0
      %v1999 = vadd.f32 0.0, %v1998
      %v2000 = vpop.f32.mrb[0].mxu0
      %2001 = vmatprep.mubr.bf16.mxu0 0
      %2002 = vmatmul.mubr.bf16.gmra.mrb[0].mxu0 %v1875
      %v2003 = vpop.f32.mrb[0].mxu0
      %v2004 = vadd.f32 0.0, %v2003
      %v2005 = vpop.f32.mrb[0].mxu0
      %v2006 = vpop.f32.mrb[0].mxu0
      %v2007 = vadd.f32 0.0, %v2006
      %v2008 = vpop.f32.mrb[0].mxu0
      %2009 = vmatprep.mubr.bf16.mxu0 0
      %2010 = vmatmul.mubr.bf16.gmra.mrb[0].mxu0 %v1876
      %v2011 = vpop.f32.mrb[0].mxu0
      %v2012 = vadd.f32 0.0, %v2011
      %v2013 = vpop.f32.mrb[0].mxu0
      %v2014 = vpop.f32.mrb[0].mxu0
      %v2015 = vadd.f32 0.0, %v2014
      %v2016 = vpop.f32.mrb[0].mxu0
      %2017 = vmatprep.mubr.bf16.mxu0 0
      %2018 = vmatmul.mubr.bf16.gmra.mrb[0].mxu0 %v1877
      %v2019 = vpop.f32.mrb[0].mxu0
      %v2020 = vadd.f32 0.0, %v2019
      %v2021 = vpop.f32.mrb[0].mxu0
      %v2022 = vpop.f32.mrb[0].mxu0
      %v2023 = vadd.f32 0.0, %v2022
      %v2024 = vpop.f32.mrb[0].mxu0
      %2025 = vmatprep.mubr.bf16.mxu0 0
      %2026 = vmatmul.mubr.bf16.gmra.mrb[0].mxu0 %v1878
      %v2027 = vpop.f32.mrb[0].mxu0
      %v2028 = vadd.f32 0.0, %v2027
      %v2029 = vpop.f32.mrb[0].mxu0
      %v2030 = vpop.f32.mrb[0].mxu0
      %v2031 = vadd.f32 0.0, %v2030
      %v2032 = vpop.f32.mrb[0].mxu0
      %2033 = vmatprep.mubr.bf16.mxu0 0
      %2034 = vmatmul.mubr.bf16.gmra.mrb[0].mxu0 %v1879
      %v2035 = vpop.f32.mrb[0].mxu0
      %v2036 = vadd.f32 0.0, %v2035
      %v2037 = vpop.f32.mrb[0].mxu0
      %v2038 = vpop.f32.mrb[0].mxu0
      %v2039 = vadd.f32 0.0, %v2038
      %v2040 = vpop.f32.mrb[0].mxu0
      %2041 = vmatprep.mubr.bf16.mxu0 0
      %2042 = vmatmul.mubr.bf16.gmra.mrb[0].mxu0 %v1880
      %v2043 = vpop.f32.mrb[0].mxu0
      %v2044 = vadd.f32 0.0, %v2043
      %v2045 = vpop.f32.mrb[0].mxu0
      %v2046 = vpop.f32.mrb[0].mxu0
      %v2047 = vadd.f32 0.0, %v2046
      %v2048 = vpop.f32.mrb[0].mxu0
      %2049 = vmatprep.mubr.bf16.mxu0 0
      %2050 = vmatmul.mubr.bf16.gmra.mrb[0].mxu0 %v1881
      %v2051 = vpop.f32.mrb[0].mxu0
      %v2052 = vadd.f32 0.0, %v2051
      %v2053 = vpop.f32.mrb[0].mxu0
      %v2054 = vpop.f32.mrb[0].mxu0
      %v2055 = vadd.f32 0.0, %v2054
      %v2056 = vpop.f32.mrb[0].mxu0
      %2057 = vmatprep.mubr.bf16.mxu0 0
      %2058 = vmatmul.mubr.bf16.gmra.mrb[0].mxu0 %v1882
      %v2059 = vpop.f32.mrb[0].mxu0
      %v2060 = vadd.f32 0.0, %v2059
      %v2061 = vpop.f32.mrb[0].mxu0
      %v2062 = vpop.f32.mrb[0].mxu0
      %v2063 = vadd.f32 0.0, %v2062
      %v2064 = vpop.f32.mrb[0].mxu0
      %2065 = vmatprep.mubr.bf16.mxu0 0
      %2066 = vmatmul.mubr.bf16.gmra.mrb[0].mxu0 %v1883
      %v2067 = vpop.f32.mrb[0].mxu0
      %v2068 = vadd.f32 0.0, %v2067
      %v2069 = vpop.f32.mrb[0].mxu0
      %v2070 = vpop.f32.mrb[0].mxu0
      %v2071 = vadd.f32 0.0, %v2070
      %v2072 = vpop.f32.mrb[0].mxu0
      %2073 = vmatprep.mubr.bf16.mxu0 0
      %2074 = vmatmul.mubr.bf16.gmra.mrb[0].mxu0 %v1884
      %v2075 = vpop.f32.mrb[0].mxu0
      %v2076 = vadd.f32 0.0, %v2075
      %v2077 = vpop.f32.mrb[0].mxu0
      %v2078 = vpop.f32.mrb[0].mxu0
      %v2079 = vadd.f32 0.0, %v2078
      %v2080 = vpop.f32.mrb[0].mxu0
      %2081 = vmatprep.mubr.bf16.mxu0 0
      %2082 = vmatmul.mubr.bf16.gmra.mrb[0].mxu0 %v1885
      %v2083 = vpop.f32.mrb[0].mxu0
      %v2084 = vadd.f32 0.0, %v2083
      %v2085 = vpop.f32.mrb[0].mxu0
      %v2086 = vpop.f32.mrb[0].mxu0
      %v2087 = vadd.f32 0.0, %v2086
      %v2088 = vpop.f32.mrb[0].mxu0
      %2089 = vmatprep.mubr.bf16.mxu0 0
      %2090 = vmatmul.mubr.bf16.gmra.mrb[0].mxu0 %v1886
      %v2091 = vpop.f32.mrb[0].mxu0
      %v2092 = vadd.f32 0.0, %v2091
      %v2093 = vpop.f32.mrb[0].mxu0
      %v2094 = vpop.f32.mrb[0].mxu0
      %v2095 = vadd.f32 0.0, %v2094
      %v2096 = vpop.f32.mrb[0].mxu0
      %2097 = vmatprep.mubr.bf16.mxu0 0
      %2098 = vmatmul.mubr.bf16.gmra.mrb[0].mxu0 %v1887
      %v2099 = vpop.f32.mrb[0].mxu0
      %v2100 = vadd.f32 0.0, %v2099
      %v2101 = vpop.f32.mrb[0].mxu0
      %v2102 = vpop.f32.mrb[0].mxu0
      %v2103 = vadd.f32 0.0, %v2102
      %v2104 = vpop.f32.mrb[0].mxu0
      %2105 = vmatprep.mubr.bf16.mxu0 0
      %2106 = vmatmul.mubr.bf16.gmra.mrb[0].mxu0 %v1888
      %v2107 = vpop.f32.mrb[0].mxu0
      %v2108 = vadd.f32 0.0, %v2107
      %v2109 = vpop.f32.mrb[0].mxu0
      %v2110 = vpop.f32.mrb[0].mxu0
      %v2111 = vadd.f32 0.0, %v2110
      %v2112 = vpop.f32.mrb[0].mxu0
      %2113 = vdwg.mxu0
      %v2114 = vadd.f32 %v1727, %v1988
      %v2115 = vadd.f32 %v1728, %v1991
      %v2116 = vadd.f32 %v1729, %v1996
      %v2117 = vadd.f32 %v1730, %v1999
      %v2118 = vadd.f32 %v1731, %v2004
      %v2119 = vadd.f32 %v1732, %v2007
      %v2120 = vadd.f32 %v1733, %v2012
      %v2121 = vadd.f32 %v1734, %v2015
      %v2122 = vadd.f32 %v1735, %v2020
      %v2123 = vadd.f32 %v1736, %v2023
      %v2124 = vadd.f32 %v1737, %v2028
      %v2125 = vadd.f32 %v1738, %v2031
      %v2126 = vadd.f32 %v1739, %v2036
      %v2127 = vadd.f32 %v1740, %v2039
      %v2128 = vadd.f32 %v1741, %v2044
      %v2129 = vadd.f32 %v1742, %v2047
      %v2130 = vadd.f32 %v1743, %v2052
      %v2131 = vadd.f32 %v1744, %v2055
      %v2132 = vadd.f32 %v1745, %v2060
      %v2133 = vadd.f32 %v1746, %v2063
      %v2134 = vadd.f32 %v1747, %v2068
      %v2135 = vadd.f32 %v1748, %v2071
      %v2136 = vadd.f32 %v1749, %v2076
      %v2137 = vadd.f32 %v1750, %v2079
      %v2138 = vadd.f32 %v1751, %v2084
      %v2139 = vadd.f32 %v1752, %v2087
      %v2140 = vadd.f32 %v1753, %v2092
      %v2141 = vadd.f32 %v1754, %v2095
      %v2142 = vadd.f32 %v1755, %v2100
      %v2143 = vadd.f32 %v1756, %v2103
      %v2144 = vadd.f32 %v1757, %v2108
      %v2145 = vadd.f32 %v1758, %v2111
      %v2146 = vld [vmem:[%s1759] sm:$0xf]
      %v2147 = vld [vmem:[%s1759 + $0x4] sm:$0xf]
      %v2148 = vld [vmem:[%s1759 + $0x8] sm:$0x1]
      %v2149 = vld [vmem:[%s1759 + $0xc] sm:$0xf]
      %v2150 = vld [vmem:[%s1759 + $0x10] sm:$0xf]
      %v2151 = vld [vmem:[%s1759 + $0x14] sm:$0x1]
      %v2152 = vld [vmem:[%s1759 + $0x18] sm:$0xf]
      %v2153 = vld [vmem:[%s1759 + $0x1c] sm:$0xf]
      %v2154 = vld [vmem:[%s1759 + $0x20] sm:$0x1]
      %v2155 = vld [vmem:[%s1759 + $0x24] sm:$0xf]
      %v2156 = vld [vmem:[%s1759 + $0x28] sm:$0xf]
      %v2157 = vld [vmem:[%s1759 + $0x2c] sm:$0x1]
      %v2158 = vld [vmem:[%s1759 + $0x30] sm:$0xf]
      %v2159 = vld [vmem:[%s1759 + $0x34] sm:$0xf]
      %v2160 = vld [vmem:[%s1759 + $0x38] sm:$0x1]
      %v2161 = vld [vmem:[%s1759 + $0x3c] sm:$0xf]
      %v2162 = vld [vmem:[%s1759 + $0x40] sm:$0xf]
      %v2163 = vld [vmem:[%s1759 + $0x44] sm:$0x1]
      %v2164 = vld [vmem:[%s1759 + $0x48] sm:$0xf]
      %v2165 = vld [vmem:[%s1759 + $0x4c] sm:$0xf]
      %v2166 = vld [vmem:[%s1759 + $0x50] sm:$0x1]
      %v2167 = vld [vmem:[%s1759 + $0x54] sm:$0xf]
      %v2168 = vld [vmem:[%s1759 + $0x58] sm:$0xf]
      %v2169 = vld [vmem:[%s1759 + $0x5c] sm:$0x1]
      %v2170 = vld [vmem:[%s1759 + $0x60] sm:$0xf]
      %v2171 = vld [vmem:[%s1759 + $0x64] sm:$0xf]
      %v2172 = vld [vmem:[%s1759 + $0x68] sm:$0x1]
      %v2173 = vld [vmem:[%s1759 + $0x6c] sm:$0xf]
      %v2174 = vld [vmem:[%s1759 + $0x70] sm:$0xf]
      %v2175 = vld [vmem:[%s1759 + $0x74] sm:$0x1]
      %v2176 = vld [vmem:[%s1759 + $0x78] sm:$0xf]
      %v2177 = vld [vmem:[%s1759 + $0x7c] sm:$0xf]
      %v2178 = vld [vmem:[%s1759 + $0x80] sm:$0x1]
      %v2179 = vld [vmem:[%s1759 + $0x84] sm:$0xf]
      %v2180 = vld [vmem:[%s1759 + $0x88] sm:$0xf]
      %v2181 = vld [vmem:[%s1759 + $0x8c] sm:$0x1]
      %v2182 = vld [vmem:[%s1759 + $0x90] sm:$0xf]
      %v2183 = vld [vmem:[%s1759 + $0x94] sm:$0xf]
      %v2184 = vld [vmem:[%s1759 + $0x98] sm:$0x1]
      %v2185 = vld [vmem:[%s1759 + $0x9c] sm:$0xf]
      %v2186 = vld [vmem:[%s1759 + $0xa0] sm:$0xf]
      %v2187 = vld [vmem:[%s1759 + $0xa4] sm:$0x1]
      %v2188 = vld [vmem:[%s1759 + $0xa8] sm:$0xf]
      %v2189 = vld [vmem:[%s1759 + $0xac] sm:$0xf]
      %v2190 = vld [vmem:[%s1759 + $0xb0] sm:$0x1]
      %v2191 = vld [vmem:[%s1759 + $0xb4] sm:$0xf]
      %v2192 = vld [vmem:[%s1759 + $0xb8] sm:$0xf]
      %v2193 = vld [vmem:[%s1759 + $0xbc] sm:$0x1]
      %v2195 = vshrl.u32 %v2146, 16
      %v2197 = vrot.slane %v2195, 4
      %v2198 = vshll.u32 %v2146, 16
      %v2200 = vrot.slane %v2198, 5
      %v2201 = vor.u32 %v2197, %v2200
      %v2202 = vrot.slane %v2201, 4
      %v2204 = vshll.u32 %v2147, 16
      %v2206 = vrot.slane %v2204, 5
      %v2207 = vsel %vm294, %v2202, %v2206
      %v2208 = vshrl.u32 %v2147, 16
      %v2210 = vrot.slane %v2208, 4
      %v2211 = vor.u32 %v2210, %v2206
      %v2212 = vrot.slane %v2211, 4
      %v2214 = vshll.u32 %v2148, 16
      %v2216 = vrot.slane %v2214, 5
      %v2217 = vsel %vm294, %v2212, %v2216
      %v2219 = vshrl.u32 %v2149, 16
      %v2221 = vrot.slane %v2219, 4
      %v2222 = vshll.u32 %v2149, 16
      %v2224 = vrot.slane %v2222, 5
      %v2225 = vor.u32 %v2221, %v2224
      %v2226 = vrot.slane %v2225, 4
      %v2228 = vshll.u32 %v2150, 16
      %v2230 = vrot.slane %v2228, 5
      %v2231 = vsel %vm294, %v2226, %v2230
      %v2232 = vshrl.u32 %v2150, 16
      %v2234 = vrot.slane %v2232, 4
      %v2235 = vor.u32 %v2234, %v2230
      %v2236 = vrot.slane %v2235, 4
      %v2238 = vshll.u32 %v2151, 16
      %v2240 = vrot.slane %v2238, 5
      %v2241 = vsel %vm294, %v2236, %v2240
      %v2243 = vshrl.u32 %v2152, 16
      %v2245 = vrot.slane %v2243, 4
      %v2246 = vshll.u32 %v2152, 16
      %v2248 = vrot.slane %v2246, 5
      %v2249 = vor.u32 %v2245, %v2248
      %v2250 = vrot.slane %v2249, 4
      %v2252 = vshll.u32 %v2153, 16
      %v2254 = vrot.slane %v2252, 5
      %v2255 = vsel %vm294, %v2250, %v2254
      %v2256 = vshrl.u32 %v2153, 16
      %v2258 = vrot.slane %v2256, 4
      %v2259 = vor.u32 %v2258, %v2254
      %v2260 = vrot.slane %v2259, 4
      %v2262 = vshll.u32 %v2154, 16
      %v2264 = vrot.slane %v2262, 5
      %v2265 = vsel %vm294, %v2260, %v2264
      %v2267 = vshrl.u32 %v2155, 16
      %v2269 = vrot.slane %v2267, 4
      %v2270 = vshll.u32 %v2155, 16
      %v2272 = vrot.slane %v2270, 5
      %v2273 = vor.u32 %v2269, %v2272
      %v2274 = vrot.slane %v2273, 4
      %v2276 = vshll.u32 %v2156, 16
      %v2278 = vrot.slane %v2276, 5
      %v2279 = vsel %vm294, %v2274, %v2278
      %v2280 = vshrl.u32 %v2156, 16
      %v2282 = vrot.slane %v2280, 4
      %v2283 = vor.u32 %v2282, %v2278
      %v2284 = vrot.slane %v2283, 4
      %v2286 = vshll.u32 %v2157, 16
      %v2288 = vrot.slane %v2286, 5
      %v2289 = vsel %vm294, %v2284, %v2288
      %v2291 = vshrl.u32 %v2158, 16
      %v2293 = vrot.slane %v2291, 4
      %v2294 = vshll.u32 %v2158, 16
      %v2296 = vrot.slane %v2294, 5
      %v2297 = vor.u32 %v2293, %v2296
      %v2298 = vrot.slane %v2297, 4
      %v2300 = vshll.u32 %v2159, 16
      %v2302 = vrot.slane %v2300, 5
      %v2303 = vsel %vm294, %v2298, %v2302
      %v2304 = vshrl.u32 %v2159, 16
      %v2306 = vrot.slane %v2304, 4
      %v2307 = vor.u32 %v2306, %v2302
      %v2308 = vrot.slane %v2307, 4
      %v2310 = vshll.u32 %v2160, 16
      %v2312 = vrot.slane %v2310, 5
      %v2313 = vsel %vm294, %v2308, %v2312
      %v2315 = vshrl.u32 %v2161, 16
      %v2317 = vrot.slane %v2315, 4
      %v2318 = vshll.u32 %v2161, 16
      %v2320 = vrot.slane %v2318, 5
      %v2321 = vor.u32 %v2317, %v2320
      %v2322 = vrot.slane %v2321, 4
      %v2324 = vshll.u32 %v2162, 16
      %v2326 = vrot.slane %v2324, 5
      %v2327 = vsel %vm294, %v2322, %v2326
      %v2328 = vshrl.u32 %v2162, 16
      %v2330 = vrot.slane %v2328, 4
      %v2331 = vor.u32 %v2330, %v2326
      %v2332 = vrot.slane %v2331, 4
      %v2334 = vshll.u32 %v2163, 16
      %v2336 = vrot.slane %v2334, 5
      %v2337 = vsel %vm294, %v2332, %v2336
      %v2339 = vshrl.u32 %v2164, 16
      %v2341 = vrot.slane %v2339, 4
      %v2342 = vshll.u32 %v2164, 16
      %v2344 = vrot.slane %v2342, 5
      %v2345 = vor.u32 %v2341, %v2344
      %v2346 = vrot.slane %v2345, 4
      %v2348 = vshll.u32 %v2165, 16
      %v2350 = vrot.slane %v2348, 5
      %v2351 = vsel %vm294, %v2346, %v2350
      %v2352 = vshrl.u32 %v2165, 16
      %v2354 = vrot.slane %v2352, 4
      %v2355 = vor.u32 %v2354, %v2350
      %v2356 = vrot.slane %v2355, 4
      %v2358 = vshll.u32 %v2166, 16
      %v2360 = vrot.slane %v2358, 5
      %v2361 = vsel %vm294, %v2356, %v2360
      %v2363 = vshrl.u32 %v2167, 16
      %v2365 = vrot.slane %v2363, 4
      %v2366 = vshll.u32 %v2167, 16
      %v2368 = vrot.slane %v2366, 5
      %v2369 = vor.u32 %v2365, %v2368
      %v2370 = vrot.slane %v2369, 4
      %v2372 = vshll.u32 %v2168, 16
      %v2374 = vrot.slane %v2372, 5
      %v2375 = vsel %vm294, %v2370, %v2374
      %v2376 = vshrl.u32 %v2168, 16
      %v2378 = vrot.slane %v2376, 4
      %v2379 = vor.u32 %v2378, %v2374
      %v2380 = vrot.slane %v2379, 4
      %v2382 = vshll.u32 %v2169, 16
      %v2384 = vrot.slane %v2382, 5
      %v2385 = vsel %vm294, %v2380, %v2384
      %v2387 = vshrl.u32 %v2170, 16
      %v2389 = vrot.slane %v2387, 4
      %v2390 = vshll.u32 %v2170, 16
      %v2392 = vrot.slane %v2390, 5
      %v2393 = vor.u32 %v2389, %v2392
      %v2394 = vrot.slane %v2393, 4
      %v2396 = vshll.u32 %v2171, 16
      %v2398 = vrot.slane %v2396, 5
      %v2399 = vsel %vm294, %v2394, %v2398
      %v2400 = vshrl.u32 %v2171, 16
      %v2402 = vrot.slane %v2400, 4
      %v2403 = vor.u32 %v2402, %v2398
      %v2404 = vrot.slane %v2403, 4
      %v2406 = vshll.u32 %v2172, 16
      %v2408 = vrot.slane %v2406, 5
      %v2409 = vsel %vm294, %v2404, %v2408
      %v2411 = vshrl.u32 %v2173, 16
      %v2413 = vrot.slane %v2411, 4
      %v2414 = vshll.u32 %v2173, 16
      %v2416 = vrot.slane %v2414, 5
      %v2417 = vor.u32 %v2413, %v2416
      %v2418 = vrot.slane %v2417, 4
      %v2420 = vshll.u32 %v2174, 16
      %v2422 = vrot.slane %v2420, 5
      %v2423 = vsel %vm294, %v2418, %v2422
      %v2424 = vshrl.u32 %v2174, 16
      %v2426 = vrot.slane %v2424, 4
      %v2427 = vor.u32 %v2426, %v2422
      %v2428 = vrot.slane %v2427, 4
      %v2430 = vshll.u32 %v2175, 16
      %v2432 = vrot.slane %v2430, 5
      %v2433 = vsel %vm294, %v2428, %v2432
      %v2435 = vshrl.u32 %v2176, 16
      %v2437 = vrot.slane %v2435, 4
      %v2438 = vshll.u32 %v2176, 16
      %v2440 = vrot.slane %v2438, 5
      %v2441 = vor.u32 %v2437, %v2440
      %v2442 = vrot.slane %v2441, 4
      %v2444 = vshll.u32 %v2177, 16
      %v2446 = vrot.slane %v2444, 5
      %v2447 = vsel %vm294, %v2442, %v2446
      %v2448 = vshrl.u32 %v2177, 16
      %v2450 = vrot.slane %v2448, 4
      %v2451 = vor.u32 %v2450, %v2446
      %v2452 = vrot.slane %v2451, 4
      %v2454 = vshll.u32 %v2178, 16
      %v2456 = vrot.slane %v2454, 5
      %v2457 = vsel %vm294, %v2452, %v2456
      %v2459 = vshrl.u32 %v2179, 16
      %v2461 = vrot.slane %v2459, 4
      %v2462 = vshll.u32 %v2179, 16
      %v2464 = vrot.slane %v2462, 5
      %v2465 = vor.u32 %v2461, %v2464
      %v2466 = vrot.slane %v2465, 4
      %v2468 = vshll.u32 %v2180, 16
      %v2470 = vrot.slane %v2468, 5
      %v2471 = vsel %vm294, %v2466, %v2470
      %v2472 = vshrl.u32 %v2180, 16
      %v2474 = vrot.slane %v2472, 4
      %v2475 = vor.u32 %v2474, %v2470
      %v2476 = vrot.slane %v2475, 4
      %v2478 = vshll.u32 %v2181, 16
      %v2480 = vrot.slane %v2478, 5
      %v2481 = vsel %vm294, %v2476, %v2480
      %v2483 = vshrl.u32 %v2182, 16
      %v2485 = vrot.slane %v2483, 4
      %v2486 = vshll.u32 %v2182, 16
      %v2488 = vrot.slane %v2486, 5
      %v2489 = vor.u32 %v2485, %v2488
      %v2490 = vrot.slane %v2489, 4
      %v2492 = vshll.u32 %v2183, 16
      %v2494 = vrot.slane %v2492, 5
      %v2495 = vsel %vm294, %v2490, %v2494
      %v2496 = vshrl.u32 %v2183, 16
      %v2498 = vrot.slane %v2496, 4
      %v2499 = vor.u32 %v2498, %v2494
      %v2500 = vrot.slane %v2499, 4
      %v2502 = vshll.u32 %v2184, 16
      %v2504 = vrot.slane %v2502, 5
      %v2505 = vsel %vm294, %v2500, %v2504
      %v2507 = vshrl.u32 %v2185, 16
      %v2509 = vrot.slane %v2507, 4
      %v2510 = vshll.u32 %v2185, 16
      %v2512 = vrot.slane %v2510, 5
      %v2513 = vor.u32 %v2509, %v2512
      %v2514 = vrot.slane %v2513, 4
      %v2516 = vshll.u32 %v2186, 16
      %v2518 = vrot.slane %v2516, 5
      %v2519 = vsel %vm294, %v2514, %v2518
      %v2520 = vshrl.u32 %v2186, 16
      %v2522 = vrot.slane %v2520, 4
      %v2523 = vor.u32 %v2522, %v2518
      %v2524 = vrot.slane %v2523, 4
      %v2526 = vshll.u32 %v2187, 16
      %v2528 = vrot.slane %v2526, 5
      %v2529 = vsel %vm294, %v2524, %v2528
      %v2531 = vshrl.u32 %v2188, 16
      %v2533 = vrot.slane %v2531, 4
      %v2534 = vshll.u32 %v2188, 16
      %v2536 = vrot.slane %v2534, 5
      %v2537 = vor.u32 %v2533, %v2536
      %v2538 = vrot.slane %v2537, 4
      %v2540 = vshll.u32 %v2189, 16
      %v2542 = vrot.slane %v2540, 5
      %v2543 = vsel %vm294, %v2538, %v2542
      %v2544 = vshrl.u32 %v2189, 16
      %v2546 = vrot.slane %v2544, 4
      %v2547 = vor.u32 %v2546, %v2542
      %v2548 = vrot.slane %v2547, 4
      %v2550 = vshll.u32 %v2190, 16
      %v2552 = vrot.slane %v2550, 5
      %v2553 = vsel %vm294, %v2548, %v2552
      %v2555 = vshrl.u32 %v2191, 16
      %v2557 = vrot.slane %v2555, 4
      %v2558 = vshll.u32 %v2191, 16
      %v2560 = vrot.slane %v2558, 5
      %v2561 = vor.u32 %v2557, %v2560
      %v2562 = vrot.slane %v2561, 4
      %v2564 = vshll.u32 %v2192, 16
      %v2566 = vrot.slane %v2564, 5
      %v2567 = vsel %vm294, %v2562, %v2566
      %v2568 = vshrl.u32 %v2192, 16
      %v2570 = vrot.slane %v2568, 4
      %v2571 = vor.u32 %v2570, %v2566
      %v2572 = vrot.slane %v2571, 4
      %v2574 = vshll.u32 %v2193, 16
      %v2576 = vrot.slane %v2574, 5
      %v2577 = vsel %vm294, %v2572, %v2576
      %s2578 = scalar_lea.vmem %s211, 256
      %v2579 = vld [vmem:[%s2578] sm:$0xf]
      %v2580 = vld [vmem:[%s2578 + $0x4] sm:$0xf]
      %v2581 = vld [vmem:[%s2578 + $0x8] sm:$0xf]
      %v2582 = vld [vmem:[%s2578 + $0xc] sm:$0xf]
      %v2583 = vld [vmem:[%s2578 + $0x10] sm:$0xf]
      %v2584 = vld [vmem:[%s2578 + $0x14] sm:$0xf]
      %v2585 = vld [vmem:[%s2578 + $0x18] sm:$0xf]
      %v2586 = vld [vmem:[%s2578 + $0x1c] sm:$0xf]
      %v2587 = vld [vmem:[%s2578 + $0x20] sm:$0xf]
      %v2588 = vld [vmem:[%s2578 + $0x24] sm:$0xf]
      %v2589 = vld [vmem:[%s2578 + $0x28] sm:$0xf]
      %v2590 = vld [vmem:[%s2578 + $0x2c] sm:$0xf]
      %v2591 = vld [vmem:[%s2578 + $0x30] sm:$0xf]
      %v2592 = vld [vmem:[%s2578 + $0x34] sm:$0xf]
      %v2593 = vld [vmem:[%s2578 + $0x38] sm:$0xf]
      %v2594 = vld [vmem:[%s2578 + $0x3c] sm:$0xf]
      %v2595 = vunpack.c.l.b16 %v2207
      %v2596 = vunpack.c.l.b16 %v2217
      %v2597 = vunpack.c.l.b16 %v2231
      %v2598 = vunpack.c.l.b16 %v2241
      %v2599 = vunpack.c.l.b16 %v2255
      %v2600 = vunpack.c.l.b16 %v2265
      %v2601 = vunpack.c.l.b16 %v2279
      %v2602 = vunpack.c.l.b16 %v2289
      %v2603 = vunpack.c.l.b16 %v2303
      %v2604 = vunpack.c.l.b16 %v2313
      %v2605 = vunpack.c.l.b16 %v2327
      %v2606 = vunpack.c.l.b16 %v2337
      %v2607 = vunpack.c.l.b16 %v2351
      %v2608 = vunpack.c.l.b16 %v2361
      %v2609 = vunpack.c.l.b16 %v2375
      %v2610 = vunpack.c.l.b16 %v2385
      %v2611 = vunpack.c.l.b16 %v2399
      %v2612 = vunpack.c.l.b16 %v2409
      %v2613 = vunpack.c.l.b16 %v2423
      %v2614 = vunpack.c.l.b16 %v2433
      %v2615 = vunpack.c.l.b16 %v2447
      %v2616 = vunpack.c.l.b16 %v2457
      %v2617 = vunpack.c.l.b16 %v2471
      %v2618 = vunpack.c.l.b16 %v2481
      %v2619 = vunpack.c.l.b16 %v2495
      %v2620 = vunpack.c.l.b16 %v2505
      %v2621 = vunpack.c.l.b16 %v2519
      %v2622 = vunpack.c.l.b16 %v2529
      %v2623 = vunpack.c.l.b16 %v2543
      %v2624 = vunpack.c.l.b16 %v2553
      %v2625 = vunpack.c.l.b16 %v2567
      %v2626 = vunpack.c.l.b16 %v2577
      %v2627 = vpack.c.b16 %v2596, %v2595
      %v2628 = vpack.c.b16 %v2598, %v2597
      %v2629 = vpack.c.b16 %v2600, %v2599
      %v2630 = vpack.c.b16 %v2602, %v2601
      %v2631 = vpack.c.b16 %v2604, %v2603
      %v2632 = vpack.c.b16 %v2606, %v2605
      %v2633 = vpack.c.b16 %v2608, %v2607
      %v2634 = vpack.c.b16 %v2610, %v2609
      %v2635 = vpack.c.b16 %v2612, %v2611
      %v2636 = vpack.c.b16 %v2614, %v2613
      %v2637 = vpack.c.b16 %v2616, %v2615
      %v2638 = vpack.c.b16 %v2618, %v2617
      %v2639 = vpack.c.b16 %v2620, %v2619
      %v2640 = vpack.c.b16 %v2622, %v2621
      %v2641 = vpack.c.b16 %v2624, %v2623
      %v2642 = vpack.c.b16 %v2626, %v2625
      %v2675 = vunpack.c.l.b16 %v2579
      %v2676 = vunpack.c.l.b16 %v2580
      %v2677 = vunpack.c.l.b16 %v2581
      %v2678 = vunpack.c.l.b16 %v2582
      %v2679 = vunpack.c.l.b16 %v2583
      %v2680 = vunpack.c.l.b16 %v2584
      %v2681 = vunpack.c.l.b16 %v2585
      %v2682 = vunpack.c.l.b16 %v2586
      %v2683 = vunpack.c.l.b16 %v2587
      %v2684 = vunpack.c.l.b16 %v2588
      %v2685 = vunpack.c.l.b16 %v2589
      %v2686 = vunpack.c.l.b16 %v2590
      %v2687 = vunpack.c.l.b16 %v2591
      %v2688 = vunpack.c.l.b16 %v2592
      %v2689 = vunpack.c.l.b16 %v2593
      %v2690 = vunpack.c.l.b16 %v2594
      %v2691 = vpack.c.b16 %v2676, %v2675
      %v2692 = vpack.c.b16 %v2678, %v2677
      %v2693 = vpack.c.b16 %v2680, %v2679
      %v2694 = vpack.c.b16 %v2682, %v2681
      %v2695 = vpack.c.b16 %v2684, %v2683
      %v2696 = vpack.c.b16 %v2686, %v2685
      %v2697 = vpack.c.b16 %v2688, %v2687
      %v2698 = vpack.c.b16 %v2690, %v2689
      %2707 = vmatprep.subr.bf16.mxu0 0
      %2708 = vmatpush1.bf16.msra.mxu0 %v2691
      %2709 = vmatprep.subr.bf16.mxu0 0
      %2710 = vmatpush1.bf16.msra.mxu0 %v2692
      %2711 = vmatprep.subr.bf16.mxu0 0
      %2712 = vmatpush1.bf16.msra.mxu0 %v2693
      %2713 = vmatprep.subr.bf16.mxu0 0
      %2714 = vmatpush1.bf16.msra.mxu0 %v2694
      %2715 = vmatprep.subr.bf16.mxu0 0
      %2716 = vmatpush1.bf16.msra.mxu0 %v2695
      %2717 = vmatprep.subr.bf16.mxu0 0
      %2718 = vmatpush1.bf16.msra.mxu0 %v2696
      %2719 = vmatprep.subr.bf16.mxu0 0
      %2720 = vmatpush1.bf16.msra.mxu0 %v2697
      %2721 = vmatprep.subr.bf16.mxu0 0
      %2722 = vmatpush1.bf16.msra.mxu0 %v2698
      %2723 = vmatprep.subr.bf16.mxu0 0
      %2724 = vmatpush1.bf16.msra.mxu0 0
      %2725 = vmatprep.subr.bf16.mxu0 0
      %2726 = vmatpush1.bf16.msra.mxu0 0
      %2727 = vmatprep.subr.bf16.mxu0 0
      %2728 = vmatpush1.bf16.msra.mxu0 0
      %2729 = vmatprep.subr.bf16.mxu0 0
      %2730 = vmatpush1.bf16.msra.mxu0 0
      %2731 = vmatprep.subr.bf16.mxu0 0
      %2732 = vmatpush1.bf16.msra.mxu0 0
      %2733 = vmatprep.subr.bf16.mxu0 0
      %2734 = vmatpush1.bf16.msra.mxu0 0
      %2735 = vmatprep.subr.bf16.mxu0 0
      %2736 = vmatpush1.bf16.msra.mxu0 0
      %2737 = vmatprep.subr.bf16.mxu0 0
      %2738 = vmatpush1.bf16.msra.mxu0 0
      %2739 = vmatprep.mubr.bf16.mxu0 0
      %2740 = vmatmul.mubr.bf16.gmra.mrb[0].mxu0 %v2627
      %v2741 = vpop.f32.mrb[0].mxu0
      %v2742 = vadd.f32 0.0, %v2741
      %v2743 = vpop.f32.mrb[0].mxu0
      %v2744 = vpop.f32.mrb[0].mxu0
      %v2745 = vadd.f32 0.0, %v2744
      %v2746 = vpop.f32.mrb[0].mxu0
      %2747 = vmatprep.mubr.bf16.mxu0 0
      %2748 = vmatmul.mubr.bf16.gmra.mrb[0].mxu0 %v2628
      %v2749 = vpop.f32.mrb[0].mxu0
      %v2750 = vadd.f32 0.0, %v2749
      %v2751 = vpop.f32.mrb[0].mxu0
      %v2752 = vpop.f32.mrb[0].mxu0
      %v2753 = vadd.f32 0.0, %v2752
      %v2754 = vpop.f32.mrb[0].mxu0
      %2755 = vmatprep.mubr.bf16.mxu0 0
      %2756 = vmatmul.mubr.bf16.gmra.mrb[0].mxu0 %v2629
      %v2757 = vpop.f32.mrb[0].mxu0
      %v2758 = vadd.f32 0.0, %v2757
      %v2759 = vpop.f32.mrb[0].mxu0
      %v2760 = vpop.f32.mrb[0].mxu0
      %v2761 = vadd.f32 0.0, %v2760
      %v2762 = vpop.f32.mrb[0].mxu0
      %2763 = vmatprep.mubr.bf16.mxu0 0
      %2764 = vmatmul.mubr.bf16.gmra.mrb[0].mxu0 %v2630
      %v2765 = vpop.f32.mrb[0].mxu0
      %v2766 = vadd.f32 0.0, %v2765
      %v2767 = vpop.f32.mrb[0].mxu0
      %v2768 = vpop.f32.mrb[0].mxu0
      %v2769 = vadd.f32 0.0, %v2768
      %v2770 = vpop.f32.mrb[0].mxu0
      %2771 = vmatprep.mubr.bf16.mxu0 0
      %2772 = vmatmul.mubr.bf16.gmra.mrb[0].mxu0 %v2631
      %v2773 = vpop.f32.mrb[0].mxu0
      %v2774 = vadd.f32 0.0, %v2773
      %v2775 = vpop.f32.mrb[0].mxu0
      %v2776 = vpop.f32.mrb[0].mxu0
      %v2777 = vadd.f32 0.0, %v2776
      %v2778 = vpop.f32.mrb[0].mxu0
      %2779 = vmatprep.mubr.bf16.mxu0 0
      %2780 = vmatmul.mubr.bf16.gmra.mrb[0].mxu0 %v2632
      %v2781 = vpop.f32.mrb[0].mxu0
      %v2782 = vadd.f32 0.0, %v2781
      %v2783 = vpop.f32.mrb[0].mxu0
      %v2784 = vpop.f32.mrb[0].mxu0
      %v2785 = vadd.f32 0.0, %v2784
      %v2786 = vpop.f32.mrb[0].mxu0
      %2787 = vmatprep.mubr.bf16.mxu0 0
      %2788 = vmatmul.mubr.bf16.gmra.mrb[0].mxu0 %v2633
      %v2789 = vpop.f32.mrb[0].mxu0
      %v2790 = vadd.f32 0.0, %v2789
      %v2791 = vpop.f32.mrb[0].mxu0
      %v2792 = vpop.f32.mrb[0].mxu0
      %v2793 = vadd.f32 0.0, %v2792
      %v2794 = vpop.f32.mrb[0].mxu0
      %2795 = vmatprep.mubr.bf16.mxu0 0
      %2796 = vmatmul.mubr.bf16.gmra.mrb[0].mxu0 %v2634
      %v2797 = vpop.f32.mrb[0].mxu0
      %v2798 = vadd.f32 0.0, %v2797
      %v2799 = vpop.f32.mrb[0].mxu0
      %v2800 = vpop.f32.mrb[0].mxu0
      %v2801 = vadd.f32 0.0, %v2800
      %v2802 = vpop.f32.mrb[0].mxu0
      %2803 = vmatprep.mubr.bf16.mxu0 0
      %2804 = vmatmul.mubr.bf16.gmra.mrb[0].mxu0 %v2635
      %v2805 = vpop.f32.mrb[0].mxu0
      %v2806 = vadd.f32 0.0, %v2805
      %v2807 = vpop.f32.mrb[0].mxu0
      %v2808 = vpop.f32.mrb[0].mxu0
      %v2809 = vadd.f32 0.0, %v2808
      %v2810 = vpop.f32.mrb[0].mxu0
      %2811 = vmatprep.mubr.bf16.mxu0 0
      %2812 = vmatmul.mubr.bf16.gmra.mrb[0].mxu0 %v2636
      %v2813 = vpop.f32.mrb[0].mxu0
      %v2814 = vadd.f32 0.0, %v2813
      %v2815 = vpop.f32.mrb[0].mxu0
      %v2816 = vpop.f32.mrb[0].mxu0
      %v2817 = vadd.f32 0.0, %v2816
      %v2818 = vpop.f32.mrb[0].mxu0
      %2819 = vmatprep.mubr.bf16.mxu0 0
      %2820 = vmatmul.mubr.bf16.gmra.mrb[0].mxu0 %v2637
      %v2821 = vpop.f32.mrb[0].mxu0
      %v2822 = vadd.f32 0.0, %v2821
      %v2823 = vpop.f32.mrb[0].mxu0
      %v2824 = vpop.f32.mrb[0].mxu0
      %v2825 = vadd.f32 0.0, %v2824
      %v2826 = vpop.f32.mrb[0].mxu0
      %2827 = vmatprep.mubr.bf16.mxu0 0
      %2828 = vmatmul.mubr.bf16.gmra.mrb[0].mxu0 %v2638
      %v2829 = vpop.f32.mrb[0].mxu0
      %v2830 = vadd.f32 0.0, %v2829
      %v2831 = vpop.f32.mrb[0].mxu0
      %v2832 = vpop.f32.mrb[0].mxu0
      %v2833 = vadd.f32 0.0, %v2832
      %v2834 = vpop.f32.mrb[0].mxu0
      %2835 = vmatprep.mubr.bf16.mxu0 0
      %2836 = vmatmul.mubr.bf16.gmra.mrb[0].mxu0 %v2639
      %v2837 = vpop.f32.mrb[0].mxu0
      %v2838 = vadd.f32 0.0, %v2837
      %v2839 = vpop.f32.mrb[0].mxu0
      %v2840 = vpop.f32.mrb[0].mxu0
      %v2841 = vadd.f32 0.0, %v2840
      %v2842 = vpop.f32.mrb[0].mxu0
      %2843 = vmatprep.mubr.bf16.mxu0 0
      %2844 = vmatmul.mubr.bf16.gmra.mrb[0].mxu0 %v2640
      %v2845 = vpop.f32.mrb[0].mxu0
      %v2846 = vadd.f32 0.0, %v2845
      %v2847 = vpop.f32.mrb[0].mxu0
      %v2848 = vpop.f32.mrb[0].mxu0
      %v2849 = vadd.f32 0.0, %v2848
      %v2850 = vpop.f32.mrb[0].mxu0
      %2851 = vmatprep.mubr.bf16.mxu0 0
      %2852 = vmatmul.mubr.bf16.gmra.mrb[0].mxu0 %v2641
      %v2853 = vpop.f32.mrb[0].mxu0
      %v2854 = vadd.f32 0.0, %v2853
      %v2855 = vpop.f32.mrb[0].mxu0
      %v2856 = vpop.f32.mrb[0].mxu0
      %v2857 = vadd.f32 0.0, %v2856
      %v2858 = vpop.f32.mrb[0].mxu0
      %2859 = vmatprep.mubr.bf16.mxu0 0
      %2860 = vmatmul.mubr.bf16.gmra.mrb[0].mxu0 %v2642
      %v2861 = vpop.f32.mrb[0].mxu0
      %v2862 = vadd.f32 0.0, %v2861
      %v2863 = vpop.f32.mrb[0].mxu0
      %v2864 = vpop.f32.mrb[0].mxu0
      %v2865 = vadd.f32 0.0, %v2864
      %v2866 = vpop.f32.mrb[0].mxu0
      %2867 = vdwg.mxu0
      %v2868 = vadd.f32 %v2114, %v2742
      %v2869 = vadd.f32 %v2115, %v2745
      %v2870 = vadd.f32 %v2116, %v2750
      %v2871 = vadd.f32 %v2117, %v2753
      %v2872 = vadd.f32 %v2118, %v2758
      %v2873 = vadd.f32 %v2119, %v2761
      %v2874 = vadd.f32 %v2120, %v2766
      %v2875 = vadd.f32 %v2121, %v2769
      %v2876 = vadd.f32 %v2122, %v2774
      %v2877 = vadd.f32 %v2123, %v2777
      %v2878 = vadd.f32 %v2124, %v2782
      %v2879 = vadd.f32 %v2125, %v2785
      %v2880 = vadd.f32 %v2126, %v2790
      %v2881 = vadd.f32 %v2127, %v2793
      %v2882 = vadd.f32 %v2128, %v2798
      %v2883 = vadd.f32 %v2129, %v2801
      %v2884 = vadd.f32 %v2130, %v2806
      %v2885 = vadd.f32 %v2131, %v2809
      %v2886 = vadd.f32 %v2132, %v2814
      %v2887 = vadd.f32 %v2133, %v2817
      %v2888 = vadd.f32 %v2134, %v2822
      %v2889 = vadd.f32 %v2135, %v2825
      %v2890 = vadd.f32 %v2136, %v2830
      %v2891 = vadd.f32 %v2137, %v2833
      %v2892 = vadd.f32 %v2138, %v2838
      %v2893 = vadd.f32 %v2139, %v2841
      %v2894 = vadd.f32 %v2140, %v2846
      %v2895 = vadd.f32 %v2141, %v2849
      %v2896 = vadd.f32 %v2142, %v2854
      %v2897 = vadd.f32 %v2143, %v2857
      %v2898 = vadd.f32 %v2144, %v2862
      %v2899 = vadd.f32 %v2145, %v2865
      %v2900 = vld [vmem:[%s1759] sm:$0xe]
      %v2901 = vld [vmem:[%s1759 + $0xc] sm:$0xe]
      %v2902 = vld [vmem:[%s1759 + $0x18] sm:$0xe]
      %v2903 = vld [vmem:[%s1759 + $0x24] sm:$0xe]
      %v2904 = vld [vmem:[%s1759 + $0x30] sm:$0xe]
      %v2905 = vld [vmem:[%s1759 + $0x3c] sm:$0xe]
      %v2906 = vld [vmem:[%s1759 + $0x48] sm:$0xe]
      %v2907 = vld [vmem:[%s1759 + $0x54] sm:$0xe]
      %v2908 = vld [vmem:[%s1759 + $0x60] sm:$0xe]
      %v2909 = vld [vmem:[%s1759 + $0x6c] sm:$0xe]
      %v2910 = vld [vmem:[%s1759 + $0x78] sm:$0xe]
      %v2911 = vld [vmem:[%s1759 + $0x84] sm:$0xe]
      %v2912 = vld [vmem:[%s1759 + $0x90] sm:$0xe]
      %v2913 = vld [vmem:[%s1759 + $0x9c] sm:$0xe]
      %v2914 = vld [vmem:[%s1759 + $0xa8] sm:$0xe]
      %v2915 = vld [vmem:[%s1759 + $0xb4] sm:$0xe]
      %v2964 = vrot.slane %v2900, 5
      %v2965 = vrot.slane %v2964, 4
      %v2966 = vrot.slane %v2147, 5
      %v2967 = vsel %vm1324, %v2965, %v2966
      %v2968 = vrot.slane %v2966, 4
      %v2969 = vrot.slane %v2148, 5
      %v2970 = vsel %vm1324, %v2968, %v2969
      %v2971 = vrot.slane %v2901, 5
      %v2972 = vrot.slane %v2971, 4
      %v2973 = vrot.slane %v2150, 5
      %v2974 = vsel %vm1324, %v2972, %v2973
      %v2975 = vrot.slane %v2973, 4
      %v2976 = vrot.slane %v2151, 5
      %v2977 = vsel %vm1324, %v2975, %v2976
      %v2978 = vrot.slane %v2902, 5
      %v2979 = vrot.slane %v2978, 4
      %v2980 = vrot.slane %v2153, 5
      %v2981 = vsel %vm1324, %v2979, %v2980
      %v2982 = vrot.slane %v2980, 4
      %v2983 = vrot.slane %v2154, 5
      %v2984 = vsel %vm1324, %v2982, %v2983
      %v2985 = vrot.slane %v2903, 5
      %v2986 = vrot.slane %v2985, 4
      %v2987 = vrot.slane %v2156, 5
      %v2988 = vsel %vm1324, %v2986, %v2987
      %v2989 = vrot.slane %v2987, 4
      %v2990 = vrot.slane %v2157, 5
      %v2991 = vsel %vm1324, %v2989, %v2990
      %v2992 = vrot.slane %v2904, 5
      %v2993 = vrot.slane %v2992, 4
      %v2994 = vrot.slane %v2159, 5
      %v2995 = vsel %vm1324, %v2993, %v2994
      %v2996 = vrot.slane %v2994, 4
      %v2997 = vrot.slane %v2160, 5
      %v2998 = vsel %vm1324, %v2996, %v2997
      %v2999 = vrot.slane %v2905, 5
      %v3000 = vrot.slane %v2999, 4
      %v3001 = vrot.slane %v2162, 5
      %v3002 = vsel %vm1324, %v3000, %v3001
      %v3003 = vrot.slane %v3001, 4
      %v3004 = vrot.slane %v2163, 5
      %v3005 = vsel %vm1324, %v3003, %v3004
      %v3006 = vrot.slane %v2906, 5
      %v3007 = vrot.slane %v3006, 4
      %v3008 = vrot.slane %v2165, 5
      %v3009 = vsel %vm1324, %v3007, %v3008
      %v3010 = vrot.slane %v3008, 4
      %v3011 = vrot.slane %v2166, 5
      %v3012 = vsel %vm1324, %v3010, %v3011
      %v3013 = vrot.slane %v2907, 5
      %v3014 = vrot.slane %v3013, 4
      %v3015 = vrot.slane %v2168, 5
      %v3016 = vsel %vm1324, %v3014, %v3015
      %v3017 = vrot.slane %v3015, 4
      %v3018 = vrot.slane %v2169, 5
      %v3019 = vsel %vm1324, %v3017, %v3018
      %v3020 = vrot.slane %v2908, 5
      %v3021 = vrot.slane %v3020, 4
      %v3022 = vrot.slane %v2171, 5
      %v3023 = vsel %vm1324, %v3021, %v3022
      %v3024 = vrot.slane %v3022, 4
      %v3025 = vrot.slane %v2172, 5
      %v3026 = vsel %vm1324, %v3024, %v3025
      %v3027 = vrot.slane %v2909, 5
      %v3028 = vrot.slane %v3027, 4
      %v3029 = vrot.slane %v2174, 5
      %v3030 = vsel %vm1324, %v3028, %v3029
      %v3031 = vrot.slane %v3029, 4
      %v3032 = vrot.slane %v2175, 5
      %v3033 = vsel %vm1324, %v3031, %v3032
      %v3034 = vrot.slane %v2910, 5
      %v3035 = vrot.slane %v3034, 4
      %v3036 = vrot.slane %v2177, 5
      %v3037 = vsel %vm1324, %v3035, %v3036
      %v3038 = vrot.slane %v3036, 4
      %v3039 = vrot.slane %v2178, 5
      %v3040 = vsel %vm1324, %v3038, %v3039
      %v3041 = vrot.slane %v2911, 5
      %v3042 = vrot.slane %v3041, 4
      %v3043 = vrot.slane %v2180, 5
      %v3044 = vsel %vm1324, %v3042, %v3043
      %v3045 = vrot.slane %v3043, 4
      %v3046 = vrot.slane %v2181, 5
      %v3047 = vsel %vm1324, %v3045, %v3046
      %v3048 = vrot.slane %v2912, 5
      %v3049 = vrot.slane %v3048, 4
      %v3050 = vrot.slane %v2183, 5
      %v3051 = vsel %vm1324, %v3049, %v3050
      %v3052 = vrot.slane %v3050, 4
      %v3053 = vrot.slane %v2184, 5
      %v3054 = vsel %vm1324, %v3052, %v3053
      %v3055 = vrot.slane %v2913, 5
      %v3056 = vrot.slane %v3055, 4
      %v3057 = vrot.slane %v2186, 5
      %v3058 = vsel %vm1324, %v3056, %v3057
      %v3059 = vrot.slane %v3057, 4
      %v3060 = vrot.slane %v2187, 5
      %v3061 = vsel %vm1324, %v3059, %v3060
      %v3062 = vrot.slane %v2914, 5
      %v3063 = vrot.slane %v3062, 4
      %v3064 = vrot.slane %v2189, 5
      %v3065 = vsel %vm1324, %v3063, %v3064
      %v3066 = vrot.slane %v3064, 4
      %v3067 = vrot.slane %v2190, 5
      %v3068 = vsel %vm1324, %v3066, %v3067
      %v3069 = vrot.slane %v2915, 5
      %v3070 = vrot.slane %v3069, 4
      %v3071 = vrot.slane %v2192, 5
      %v3072 = vsel %vm1324, %v3070, %v3071
      %v3073 = vrot.slane %v3071, 4
      %v3074 = vrot.slane %v2193, 5
      %v3075 = vsel %vm1324, %v3073, %v3074
      %s3076 = scalar_lea.vmem %s211, 320
      %v3077 = vld [vmem:[%s3076] sm:$0xf]
      %v3078 = vld [vmem:[%s3076 + $0x4] sm:$0xf]
      %v3079 = vld [vmem:[%s3076 + $0x8] sm:$0xf]
      %v3080 = vld [vmem:[%s3076 + $0xc] sm:$0xf]
      %v3081 = vld [vmem:[%s3076 + $0x10] sm:$0xf]
      %v3082 = vld [vmem:[%s3076 + $0x14] sm:$0xf]
      %v3083 = vld [vmem:[%s3076 + $0x18] sm:$0xf]
      %v3084 = vld [vmem:[%s3076 + $0x1c] sm:$0xf]
      %v3085 = vld [vmem:[%s3076 + $0x20] sm:$0xf]
      %v3086 = vld [vmem:[%s3076 + $0x24] sm:$0xf]
      %v3087 = vld [vmem:[%s3076 + $0x28] sm:$0xf]
      %v3088 = vld [vmem:[%s3076 + $0x2c] sm:$0xf]
      %v3089 = vld [vmem:[%s3076 + $0x30] sm:$0xf]
      %v3090 = vld [vmem:[%s3076 + $0x34] sm:$0xf]
      %v3091 = vld [vmem:[%s3076 + $0x38] sm:$0xf]
      %v3092 = vld [vmem:[%s3076 + $0x3c] sm:$0xf]
      %v3093 = vunpack.c.l.b16 %v2967
      %v3094 = vunpack.c.l.b16 %v2970
      %v3095 = vunpack.c.l.b16 %v2974
      %v3096 = vunpack.c.l.b16 %v2977
      %v3097 = vunpack.c.l.b16 %v2981
      %v3098 = vunpack.c.l.b16 %v2984
      %v3099 = vunpack.c.l.b16 %v2988
      %v3100 = vunpack.c.l.b16 %v2991
      %v3101 = vunpack.c.l.b16 %v2995
      %v3102 = vunpack.c.l.b16 %v2998
      %v3103 = vunpack.c.l.b16 %v3002
      %v3104 = vunpack.c.l.b16 %v3005
      %v3105 = vunpack.c.l.b16 %v3009
      %v3106 = vunpack.c.l.b16 %v3012
      %v3107 = vunpack.c.l.b16 %v3016
      %v3108 = vunpack.c.l.b16 %v3019
      %v3109 = vunpack.c.l.b16 %v3023
      %v3110 = vunpack.c.l.b16 %v3026
      %v3111 = vunpack.c.l.b16 %v3030
      %v3112 = vunpack.c.l.b16 %v3033
      %v3113 = vunpack.c.l.b16 %v3037
      %v3114 = vunpack.c.l.b16 %v3040
      %v3115 = vunpack.c.l.b16 %v3044
      %v3116 = vunpack.c.l.b16 %v3047
      %v3117 = vunpack.c.l.b16 %v3051
      %v3118 = vunpack.c.l.b16 %v3054
      %v3119 = vunpack.c.l.b16 %v3058
      %v3120 = vunpack.c.l.b16 %v3061
      %v3121 = vunpack.c.l.b16 %v3065
      %v3122 = vunpack.c.l.b16 %v3068
      %v3123 = vunpack.c.l.b16 %v3072
      %v3124 = vunpack.c.l.b16 %v3075
      %v3125 = vpack.c.b16 %v3094, %v3093
      %v3126 = vpack.c.b16 %v3096, %v3095
      %v3127 = vpack.c.b16 %v3098, %v3097
      %v3128 = vpack.c.b16 %v3100, %v3099
      %v3129 = vpack.c.b16 %v3102, %v3101
      %v3130 = vpack.c.b16 %v3104, %v3103
      %v3131 = vpack.c.b16 %v3106, %v3105
      %v3132 = vpack.c.b16 %v3108, %v3107
      %v3133 = vpack.c.b16 %v3110, %v3109
      %v3134 = vpack.c.b16 %v3112, %v3111
      %v3135 = vpack.c.b16 %v3114, %v3113
      %v3136 = vpack.c.b16 %v3116, %v3115
      %v3137 = vpack.c.b16 %v3118, %v3117
      %v3138 = vpack.c.b16 %v3120, %v3119
      %v3139 = vpack.c.b16 %v3122, %v3121
      %v3140 = vpack.c.b16 %v3124, %v3123
      %v3173 = vunpack.c.l.b16 %v3077
      %v3174 = vunpack.c.l.b16 %v3078
      %v3175 = vunpack.c.l.b16 %v3079
      %v3176 = vunpack.c.l.b16 %v3080
      %v3177 = vunpack.c.l.b16 %v3081
      %v3178 = vunpack.c.l.b16 %v3082
      %v3179 = vunpack.c.l.b16 %v3083
      %v3180 = vunpack.c.l.b16 %v3084
      %v3181 = vunpack.c.l.b16 %v3085
      %v3182 = vunpack.c.l.b16 %v3086
      %v3183 = vunpack.c.l.b16 %v3087
      %v3184 = vunpack.c.l.b16 %v3088
      %v3185 = vunpack.c.l.b16 %v3089
      %v3186 = vunpack.c.l.b16 %v3090
      %v3187 = vunpack.c.l.b16 %v3091
      %v3188 = vunpack.c.l.b16 %v3092
      %v3189 = vpack.c.b16 %v3174, %v3173
      %v3190 = vpack.c.b16 %v3176, %v3175
      %v3191 = vpack.c.b16 %v3178, %v3177
      %v3192 = vpack.c.b16 %v3180, %v3179
      %v3193 = vpack.c.b16 %v3182, %v3181
      %v3194 = vpack.c.b16 %v3184, %v3183
      %v3195 = vpack.c.b16 %v3186, %v3185
      %v3196 = vpack.c.b16 %v3188, %v3187
      %3205 = vmatprep.subr.bf16.mxu0 0
      %3206 = vmatpush1.bf16.msra.mxu0 %v3189
      %3207 = vmatprep.subr.bf16.mxu0 0
      %3208 = vmatpush1.bf16.msra.mxu0 %v3190
      %3209 = vmatprep.subr.bf16.mxu0 0
      %3210 = vmatpush1.bf16.msra.mxu0 %v3191
      %3211 = vmatprep.subr.bf16.mxu0 0
      %3212 = vmatpush1.bf16.msra.mxu0 %v3192
      %3213 = vmatprep.subr.bf16.mxu0 0
      %3214 = vmatpush1.bf16.msra.mxu0 %v3193
      %3215 = vmatprep.subr.bf16.mxu0 0
      %3216 = vmatpush1.bf16.msra.mxu0 %v3194
      %3217 = vmatprep.subr.bf16.mxu0 0
      %3218 = vmatpush1.bf16.msra.mxu0 %v3195
      %3219 = vmatprep.subr.bf16.mxu0 0
      %3220 = vmatpush1.bf16.msra.mxu0 %v3196
      %3221 = vmatprep.subr.bf16.mxu0 0
      %3222 = vmatpush1.bf16.msra.mxu0 0
      %3223 = vmatprep.subr.bf16.mxu0 0
      %3224 = vmatpush1.bf16.msra.mxu0 0
      %3225 = vmatprep.subr.bf16.mxu0 0
      %3226 = vmatpush1.bf16.msra.mxu0 0
      %3227 = vmatprep.subr.bf16.mxu0 0
      %3228 = vmatpush1.bf16.msra.mxu0 0
      %3229 = vmatprep.subr.bf16.mxu0 0
      %3230 = vmatpush1.bf16.msra.mxu0 0
      %3231 = vmatprep.subr.bf16.mxu0 0
      %3232 = vmatpush1.bf16.msra.mxu0 0
      %3233 = vmatprep.subr.bf16.mxu0 0
      %3234 = vmatpush1.bf16.msra.mxu0 0
      %3235 = vmatprep.subr.bf16.mxu0 0
      %3236 = vmatpush1.bf16.msra.mxu0 0
      %3237 = vmatprep.mubr.bf16.mxu0 0
      %3238 = vmatmul.mubr.bf16.gmra.mrb[0].mxu0 %v3125
      %v3239 = vpop.f32.mrb[0].mxu0
      %v3240 = vadd.f32 0.0, %v3239
      %v3241 = vpop.f32.mrb[0].mxu0
      %v3242 = vpop.f32.mrb[0].mxu0
      %v3243 = vadd.f32 0.0, %v3242
      %v3244 = vpop.f32.mrb[0].mxu0
      %3245 = vmatprep.mubr.bf16.mxu0 0
      %3246 = vmatmul.mubr.bf16.gmra.mrb[0].mxu0 %v3126
      %v3247 = vpop.f32.mrb[0].mxu0
      %v3248 = vadd.f32 0.0, %v3247
      %v3249 = vpop.f32.mrb[0].mxu0
      %v3250 = vpop.f32.mrb[0].mxu0
      %v3251 = vadd.f32 0.0, %v3250
      %v3252 = vpop.f32.mrb[0].mxu0
      %3253 = vmatprep.mubr.bf16.mxu0 0
      %3254 = vmatmul.mubr.bf16.gmra.mrb[0].mxu0 %v3127
      %v3255 = vpop.f32.mrb[0].mxu0
      %v3256 = vadd.f32 0.0, %v3255
      %v3257 = vpop.f32.mrb[0].mxu0
      %v3258 = vpop.f32.mrb[0].mxu0
      %v3259 = vadd.f32 0.0, %v3258
      %v3260 = vpop.f32.mrb[0].mxu0
      %3261 = vmatprep.mubr.bf16.mxu0 0
      %3262 = vmatmul.mubr.bf16.gmra.mrb[0].mxu0 %v3128
      %v3263 = vpop.f32.mrb[0].mxu0
      %v3264 = vadd.f32 0.0, %v3263
      %v3265 = vpop.f32.mrb[0].mxu0
      %v3266 = vpop.f32.mrb[0].mxu0
      %v3267 = vadd.f32 0.0, %v3266
      %v3268 = vpop.f32.mrb[0].mxu0
      %3269 = vmatprep.mubr.bf16.mxu0 0
      %3270 = vmatmul.mubr.bf16.gmra.mrb[0].mxu0 %v3129
      %v3271 = vpop.f32.mrb[0].mxu0
      %v3272 = vadd.f32 0.0, %v3271
      %v3273 = vpop.f32.mrb[0].mxu0
      %v3274 = vpop.f32.mrb[0].mxu0
      %v3275 = vadd.f32 0.0, %v3274
      %v3276 = vpop.f32.mrb[0].mxu0
      %3277 = vmatprep.mubr.bf16.mxu0 0
      %3278 = vmatmul.mubr.bf16.gmra.mrb[0].mxu0 %v3130
      %v3279 = vpop.f32.mrb[0].mxu0
      %v3280 = vadd.f32 0.0, %v3279
      %v3281 = vpop.f32.mrb[0].mxu0
      %v3282 = vpop.f32.mrb[0].mxu0
      %v3283 = vadd.f32 0.0, %v3282
      %v3284 = vpop.f32.mrb[0].mxu0
      %3285 = vmatprep.mubr.bf16.mxu0 0
      %3286 = vmatmul.mubr.bf16.gmra.mrb[0].mxu0 %v3131
      %v3287 = vpop.f32.mrb[0].mxu0
      %v3288 = vadd.f32 0.0, %v3287
      %v3289 = vpop.f32.mrb[0].mxu0
      %v3290 = vpop.f32.mrb[0].mxu0
      %v3291 = vadd.f32 0.0, %v3290
      %v3292 = vpop.f32.mrb[0].mxu0
      %3293 = vmatprep.mubr.bf16.mxu0 0
      %3294 = vmatmul.mubr.bf16.gmra.mrb[0].mxu0 %v3132
      %v3295 = vpop.f32.mrb[0].mxu0
      %v3296 = vadd.f32 0.0, %v3295
      %v3297 = vpop.f32.mrb[0].mxu0
      %v3298 = vpop.f32.mrb[0].mxu0
      %v3299 = vadd.f32 0.0, %v3298
      %v3300 = vpop.f32.mrb[0].mxu0
      %3301 = vmatprep.mubr.bf16.mxu0 0
      %3302 = vmatmul.mubr.bf16.gmra.mrb[0].mxu0 %v3133
      %v3303 = vpop.f32.mrb[0].mxu0
      %v3304 = vadd.f32 0.0, %v3303
      %v3305 = vpop.f32.mrb[0].mxu0
      %v3306 = vpop.f32.mrb[0].mxu0
      %v3307 = vadd.f32 0.0, %v3306
      %v3308 = vpop.f32.mrb[0].mxu0
      %3309 = vmatprep.mubr.bf16.mxu0 0
      %3310 = vmatmul.mubr.bf16.gmra.mrb[0].mxu0 %v3134
      %v3311 = vpop.f32.mrb[0].mxu0
      %v3312 = vadd.f32 0.0, %v3311
      %v3313 = vpop.f32.mrb[0].mxu0
      %v3314 = vpop.f32.mrb[0].mxu0
      %v3315 = vadd.f32 0.0, %v3314
      %v3316 = vpop.f32.mrb[0].mxu0
      %3317 = vmatprep.mubr.bf16.mxu0 0
      %3318 = vmatmul.mubr.bf16.gmra.mrb[0].mxu0 %v3135
      %v3319 = vpop.f32.mrb[0].mxu0
      %v3320 = vadd.f32 0.0, %v3319
      %v3321 = vpop.f32.mrb[0].mxu0
      %v3322 = vpop.f32.mrb[0].mxu0
      %v3323 = vadd.f32 0.0, %v3322
      %v3324 = vpop.f32.mrb[0].mxu0
      %3325 = vmatprep.mubr.bf16.mxu0 0
      %3326 = vmatmul.mubr.bf16.gmra.mrb[0].mxu0 %v3136
      %v3327 = vpop.f32.mrb[0].mxu0
      %v3328 = vadd.f32 0.0, %v3327
      %v3329 = vpop.f32.mrb[0].mxu0
      %v3330 = vpop.f32.mrb[0].mxu0
      %v3331 = vadd.f32 0.0, %v3330
      %v3332 = vpop.f32.mrb[0].mxu0
      %3333 = vmatprep.mubr.bf16.mxu0 0
      %3334 = vmatmul.mubr.bf16.gmra.mrb[0].mxu0 %v3137
      %v3335 = vpop.f32.mrb[0].mxu0
      %v3336 = vadd.f32 0.0, %v3335
      %v3337 = vpop.f32.mrb[0].mxu0
      %v3338 = vpop.f32.mrb[0].mxu0
      %v3339 = vadd.f32 0.0, %v3338
      %v3340 = vpop.f32.mrb[0].mxu0
      %3341 = vmatprep.mubr.bf16.mxu0 0
      %3342 = vmatmul.mubr.bf16.gmra.mrb[0].mxu0 %v3138
      %v3343 = vpop.f32.mrb[0].mxu0
      %v3344 = vadd.f32 0.0, %v3343
      %v3345 = vpop.f32.mrb[0].mxu0
      %v3346 = vpop.f32.mrb[0].mxu0
      %v3347 = vadd.f32 0.0, %v3346
      %v3348 = vpop.f32.mrb[0].mxu0
      %3349 = vmatprep.mubr.bf16.mxu0 0
      %3350 = vmatmul.mubr.bf16.gmra.mrb[0].mxu0 %v3139
      %v3351 = vpop.f32.mrb[0].mxu0
      %v3352 = vadd.f32 0.0, %v3351
      %v3353 = vpop.f32.mrb[0].mxu0
      %v3354 = vpop.f32.mrb[0].mxu0
      %v3355 = vadd.f32 0.0, %v3354
      %v3356 = vpop.f32.mrb[0].mxu0
      %3357 = vmatprep.mubr.bf16.mxu0 0
      %3358 = vmatmul.mubr.bf16.gmra.mrb[0].mxu0 %v3140
      %v3359 = vpop.f32.mrb[0].mxu0
      %v3360 = vadd.f32 0.0, %v3359
      %v3361 = vpop.f32.mrb[0].mxu0
      %v3362 = vpop.f32.mrb[0].mxu0
      %v3363 = vadd.f32 0.0, %v3362
      %v3364 = vpop.f32.mrb[0].mxu0
      %3365 = vdwg.mxu0
      %v3366 = vadd.f32 %v2868, %v3240
      %v3367 = vadd.f32 %v2869, %v3243
      %v3368 = vadd.f32 %v2870, %v3248
      %v3369 = vadd.f32 %v2871, %v3251
      %v3370 = vadd.f32 %v2872, %v3256
      %v3371 = vadd.f32 %v2873, %v3259
      %v3372 = vadd.f32 %v2874, %v3264
      %v3373 = vadd.f32 %v2875, %v3267
      %v3374 = vadd.f32 %v2876, %v3272
      %v3375 = vadd.f32 %v2877, %v3275
      %v3376 = vadd.f32 %v2878, %v3280
      %v3377 = vadd.f32 %v2879, %v3283
      %v3378 = vadd.f32 %v2880, %v3288
      %v3379 = vadd.f32 %v2881, %v3291
      %v3380 = vadd.f32 %v2882, %v3296
      %v3381 = vadd.f32 %v2883, %v3299
      %v3382 = vadd.f32 %v2884, %v3304
      %v3383 = vadd.f32 %v2885, %v3307
      %v3384 = vadd.f32 %v2886, %v3312
      %v3385 = vadd.f32 %v2887, %v3315
      %v3386 = vadd.f32 %v2888, %v3320
      %v3387 = vadd.f32 %v2889, %v3323
      %v3388 = vadd.f32 %v2890, %v3328
      %v3389 = vadd.f32 %v2891, %v3331
      %v3390 = vadd.f32 %v2892, %v3336
      %v3391 = vadd.f32 %v2893, %v3339
      %v3392 = vadd.f32 %v2894, %v3344
      %v3393 = vadd.f32 %v2895, %v3347
      %v3394 = vadd.f32 %v2896, %v3352
      %v3395 = vadd.f32 %v2897, %v3355
      %v3396 = vadd.f32 %v2898, %v3360
      %v3397 = vadd.f32 %v2899, %v3363
      %s3398 = scalar_lea.vmem %s207, 24
      %v3399 = vld [vmem:[%s3398] sm:$0xf]
      %v3400 = vld [vmem:[%s3398 + $0x4] sm:$0xf]
      %v3401 = vld [vmem:[%s3398 + $0xc] sm:$0xf]
      %v3402 = vld [vmem:[%s3398 + $0x10] sm:$0xf]
      %v3403 = vld [vmem:[%s3398 + $0x18] sm:$0xf]
      %v3404 = vld [vmem:[%s3398 + $0x1c] sm:$0xf]
      %v3405 = vld [vmem:[%s3398 + $0x24] sm:$0xf]
      %v3406 = vld [vmem:[%s3398 + $0x28] sm:$0xf]
      %v3407 = vld [vmem:[%s3398 + $0x30] sm:$0xf]
      %v3408 = vld [vmem:[%s3398 + $0x34] sm:$0xf]
      %v3409 = vld [vmem:[%s3398 + $0x3c] sm:$0xf]
      %v3410 = vld [vmem:[%s3398 + $0x40] sm:$0xf]
      %v3411 = vld [vmem:[%s3398 + $0x48] sm:$0xf]
      %v3412 = vld [vmem:[%s3398 + $0x4c] sm:$0xf]
      %v3413 = vld [vmem:[%s3398 + $0x54] sm:$0xf]
      %v3414 = vld [vmem:[%s3398 + $0x58] sm:$0xf]
      %v3415 = vld [vmem:[%s3398 + $0x60] sm:$0xf]
      %v3416 = vld [vmem:[%s3398 + $0x64] sm:$0xf]
      %v3417 = vld [vmem:[%s3398 + $0x6c] sm:$0xf]
      %v3418 = vld [vmem:[%s3398 + $0x70] sm:$0xf]
      %v3419 = vld [vmem:[%s3398 + $0x78] sm:$0xf]
      %v3420 = vld [vmem:[%s3398 + $0x7c] sm:$0xf]
      %v3421 = vld [vmem:[%s3398 + $0x84] sm:$0xf]
      %v3422 = vld [vmem:[%s3398 + $0x88] sm:$0xf]
      %v3423 = vld [vmem:[%s3398 + $0x90] sm:$0xf]
      %v3424 = vld [vmem:[%s3398 + $0x94] sm:$0xf]
      %v3425 = vld [vmem:[%s3398 + $0x9c] sm:$0xf]
      %v3426 = vld [vmem:[%s3398 + $0xa0] sm:$0xf]
      %v3427 = vld [vmem:[%s3398 + $0xa8] sm:$0xf]
      %v3428 = vld [vmem:[%s3398 + $0xac] sm:$0xf]
      %v3429 = vld [vmem:[%s3398 + $0xb4] sm:$0xf]
      %v3430 = vld [vmem:[%s3398 + $0xb8] sm:$0xf]
      %s3431 = scalar_lea.vmem %s211, 384
      %v3432 = vld [vmem:[%s3431] sm:$0xf]
      %v3433 = vld [vmem:[%s3431 + $0x4] sm:$0xf]
      %v3434 = vld [vmem:[%s3431 + $0x8] sm:$0xf]
      %v3435 = vld [vmem:[%s3431 + $0xc] sm:$0xf]
      %v3436 = vld [vmem:[%s3431 + $0x10] sm:$0xf]
      %v3437 = vld [vmem:[%s3431 + $0x14] sm:$0xf]
      %v3438 = vld [vmem:[%s3431 + $0x18] sm:$0xf]
      %v3439 = vld [vmem:[%s3431 + $0x1c] sm:$0xf]
      %v3440 = vld [vmem:[%s3431 + $0x20] sm:$0xf]
      %v3441 = vld [vmem:[%s3431 + $0x24] sm:$0xf]
      %v3442 = vld [vmem:[%s3431 + $0x28] sm:$0xf]
      %v3443 = vld [vmem:[%s3431 + $0x2c] sm:$0xf]
      %v3444 = vld [vmem:[%s3431 + $0x30] sm:$0xf]
      %v3445 = vld [vmem:[%s3431 + $0x34] sm:$0xf]
      %v3446 = vld [vmem:[%s3431 + $0x38] sm:$0xf]
      %v3447 = vld [vmem:[%s3431 + $0x3c] sm:$0xf]
      %v3480 = vunpack.c.l.b16 %v3399
      %v3481 = vunpack.c.l.b16 %v3400
      %v3482 = vunpack.c.l.b16 %v3401
      %v3483 = vunpack.c.l.b16 %v3402
      %v3484 = vunpack.c.l.b16 %v3403
      %v3485 = vunpack.c.l.b16 %v3404
      %v3486 = vunpack.c.l.b16 %v3405
      %v3487 = vunpack.c.l.b16 %v3406
      %v3488 = vunpack.c.l.b16 %v3407
      %v3489 = vunpack.c.l.b16 %v3408
      %v3490 = vunpack.c.l.b16 %v3409
      %v3491 = vunpack.c.l.b16 %v3410
      %v3492 = vunpack.c.l.b16 %v3411
      %v3493 = vunpack.c.l.b16 %v3412
      %v3494 = vunpack.c.l.b16 %v3413
      %v3495 = vunpack.c.l.b16 %v3414
      %v3496 = vunpack.c.l.b16 %v3415
      %v3497 = vunpack.c.l.b16 %v3416
      %v3498 = vunpack.c.l.b16 %v3417
      %v3499 = vunpack.c.l.b16 %v3418
      %v3500 = vunpack.c.l.b16 %v3419
      %v3501 = vunpack.c.l.b16 %v3420
      %v3502 = vunpack.c.l.b16 %v3421
      %v3503 = vunpack.c.l.b16 %v3422
      %v3504 = vunpack.c.l.b16 %v3423
      %v3505 = vunpack.c.l.b16 %v3424
      %v3506 = vunpack.c.l.b16 %v3425
      %v3507 = vunpack.c.l.b16 %v3426
      %v3508 = vunpack.c.l.b16 %v3427
      %v3509 = vunpack.c.l.b16 %v3428
      %v3510 = vunpack.c.l.b16 %v3429
      %v3511 = vunpack.c.l.b16 %v3430
      %v3512 = vpack.c.b16 %v3481, %v3480
      %v3513 = vpack.c.b16 %v3483, %v3482
      %v3514 = vpack.c.b16 %v3485, %v3484
      %v3515 = vpack.c.b16 %v3487, %v3486
      %v3516 = vpack.c.b16 %v3489, %v3488
      %v3517 = vpack.c.b16 %v3491, %v3490
      %v3518 = vpack.c.b16 %v3493, %v3492
      %v3519 = vpack.c.b16 %v3495, %v3494
      %v3520 = vpack.c.b16 %v3497, %v3496
      %v3521 = vpack.c.b16 %v3499, %v3498
      %v3522 = vpack.c.b16 %v3501, %v3500
      %v3523 = vpack.c.b16 %v3503, %v3502
      %v3524 = vpack.c.b16 %v3505, %v3504
      %v3525 = vpack.c.b16 %v3507, %v3506
      %v3526 = vpack.c.b16 %v3509, %v3508
      %v3527 = vpack.c.b16 %v3511, %v3510
      %v3560 = vunpack.c.l.b16 %v3432
      %v3561 = vunpack.c.l.b16 %v3433
      %v3562 = vunpack.c.l.b16 %v3434
      %v3563 = vunpack.c.l.b16 %v3435
      %v3564 = vunpack.c.l.b16 %v3436
      %v3565 = vunpack.c.l.b16 %v3437
      %v3566 = vunpack.c.l.b16 %v3438
      %v3567 = vunpack.c.l.b16 %v3439
      %v3568 = vunpack.c.l.b16 %v3440
      %v3569 = vunpack.c.l.b16 %v3441
      %v3570 = vunpack.c.l.b16 %v3442
      %v3571 = vunpack.c.l.b16 %v3443
      %v3572 = vunpack.c.l.b16 %v3444
      %v3573 = vunpack.c.l.b16 %v3445
      %v3574 = vunpack.c.l.b16 %v3446
      %v3575 = vunpack.c.l.b16 %v3447
      %v3576 = vpack.c.b16 %v3561, %v3560
      %v3577 = vpack.c.b16 %v3563, %v3562
      %v3578 = vpack.c.b16 %v3565, %v3564
      %v3579 = vpack.c.b16 %v3567, %v3566
      %v3580 = vpack.c.b16 %v3569, %v3568
      %v3581 = vpack.c.b16 %v3571, %v3570
      %v3582 = vpack.c.b16 %v3573, %v3572
      %v3583 = vpack.c.b16 %v3575, %v3574
      %3592 = vmatprep.subr.bf16.mxu0 0
      %3593 = vmatpush1.bf16.msra.mxu0 %v3576
      %3594 = vmatprep.subr.bf16.mxu0 0
      %3595 = vmatpush1.bf16.msra.mxu0 %v3577
      %3596 = vmatprep.subr.bf16.mxu0 0
      %3597 = vmatpush1.bf16.msra.mxu0 %v3578
      %3598 = vmatprep.subr.bf16.mxu0 0
      %3599 = vmatpush1.bf16.msra.mxu0 %v3579
      %3600 = vmatprep.subr.bf16.mxu0 0
      %3601 = vmatpush1.bf16.msra.mxu0 %v3580
      %3602 = vmatprep.subr.bf16.mxu0 0
      %3603 = vmatpush1.bf16.msra.mxu0 %v3581
      %3604 = vmatprep.subr.bf16.mxu0 0
      %3605 = vmatpush1.bf16.msra.mxu0 %v3582
      %3606 = vmatprep.subr.bf16.mxu0 0
      %3607 = vmatpush1.bf16.msra.mxu0 %v3583
      %3608 = vmatprep.subr.bf16.mxu0 0
      %3609 = vmatpush1.bf16.msra.mxu0 0
      %3610 = vmatprep.subr.bf16.mxu0 0
      %3611 = vmatpush1.bf16.msra.mxu0 0
      %3612 = vmatprep.subr.bf16.mxu0 0
      %3613 = vmatpush1.bf16.msra.mxu0 0
      %3614 = vmatprep.subr.bf16.mxu0 0
      %3615 = vmatpush1.bf16.msra.mxu0 0
      %3616 = vmatprep.subr.bf16.mxu0 0
      %3617 = vmatpush1.bf16.msra.mxu0 0
      %3618 = vmatprep.subr.bf16.mxu0 0
      %3619 = vmatpush1.bf16.msra.mxu0 0
      %3620 = vmatprep.subr.bf16.mxu0 0
      %3621 = vmatpush1.bf16.msra.mxu0 0
      %3622 = vmatprep.subr.bf16.mxu0 0
      %3623 = vmatpush1.bf16.msra.mxu0 0
      %3624 = vmatprep.mubr.bf16.mxu0 0
      %3625 = vmatmul.mubr.bf16.gmra.mrb[0].mxu0 %v3512
      %v3626 = vpop.f32.mrb[0].mxu0
      %v3627 = vadd.f32 0.0, %v3626
      %v3628 = vpop.f32.mrb[0].mxu0
      %v3629 = vpop.f32.mrb[0].mxu0
      %v3630 = vadd.f32 0.0, %v3629
      %v3631 = vpop.f32.mrb[0].mxu0
      %3632 = vmatprep.mubr.bf16.mxu0 0
      %3633 = vmatmul.mubr.bf16.gmra.mrb[0].mxu0 %v3513
      %v3634 = vpop.f32.mrb[0].mxu0
      %v3635 = vadd.f32 0.0, %v3634
      %v3636 = vpop.f32.mrb[0].mxu0
      %v3637 = vpop.f32.mrb[0].mxu0
      %v3638 = vadd.f32 0.0, %v3637
      %v3639 = vpop.f32.mrb[0].mxu0
      %3640 = vmatprep.mubr.bf16.mxu0 0
      %3641 = vmatmul.mubr.bf16.gmra.mrb[0].mxu0 %v3514
      %v3642 = vpop.f32.mrb[0].mxu0
      %v3643 = vadd.f32 0.0, %v3642
      %v3644 = vpop.f32.mrb[0].mxu0
      %v3645 = vpop.f32.mrb[0].mxu0
      %v3646 = vadd.f32 0.0, %v3645
      %v3647 = vpop.f32.mrb[0].mxu0
      %3648 = vmatprep.mubr.bf16.mxu0 0
      %3649 = vmatmul.mubr.bf16.gmra.mrb[0].mxu0 %v3515
      %v3650 = vpop.f32.mrb[0].mxu0
      %v3651 = vadd.f32 0.0, %v3650
      %v3652 = vpop.f32.mrb[0].mxu0
      %v3653 = vpop.f32.mrb[0].mxu0
      %v3654 = vadd.f32 0.0, %v3653
      %v3655 = vpop.f32.mrb[0].mxu0
      %3656 = vmatprep.mubr.bf16.mxu0 0
      %3657 = vmatmul.mubr.bf16.gmra.mrb[0].mxu0 %v3516
      %v3658 = vpop.f32.mrb[0].mxu0
      %v3659 = vadd.f32 0.0, %v3658
      %v3660 = vpop.f32.mrb[0].mxu0
      %v3661 = vpop.f32.mrb[0].mxu0
      %v3662 = vadd.f32 0.0, %v3661
      %v3663 = vpop.f32.mrb[0].mxu0
      %3664 = vmatprep.mubr.bf16.mxu0 0
      %3665 = vmatmul.mubr.bf16.gmra.mrb[0].mxu0 %v3517
      %v3666 = vpop.f32.mrb[0].mxu0
      %v3667 = vadd.f32 0.0, %v3666
      %v3668 = vpop.f32.mrb[0].mxu0
      %v3669 = vpop.f32.mrb[0].mxu0
      %v3670 = vadd.f32 0.0, %v3669
      %v3671 = vpop.f32.mrb[0].mxu0
      %3672 = vmatprep.mubr.bf16.mxu0 0
      %3673 = vmatmul.mubr.bf16.gmra.mrb[0].mxu0 %v3518
      %v3674 = vpop.f32.mrb[0].mxu0
      %v3675 = vadd.f32 0.0, %v3674
      %v3676 = vpop.f32.mrb[0].mxu0
      %v3677 = vpop.f32.mrb[0].mxu0
      %v3678 = vadd.f32 0.0, %v3677
      %v3679 = vpop.f32.mrb[0].mxu0
      %3680 = vmatprep.mubr.bf16.mxu0 0
      %3681 = vmatmul.mubr.bf16.gmra.mrb[0].mxu0 %v3519
      %v3682 = vpop.f32.mrb[0].mxu0
      %v3683 = vadd.f32 0.0, %v3682
      %v3684 = vpop.f32.mrb[0].mxu0
      %v3685 = vpop.f32.mrb[0].mxu0
      %v3686 = vadd.f32 0.0, %v3685
      %v3687 = vpop.f32.mrb[0].mxu0
      %3688 = vmatprep.mubr.bf16.mxu0 0
      %3689 = vmatmul.mubr.bf16.gmra.mrb[0].mxu0 %v3520
      %v3690 = vpop.f32.mrb[0].mxu0
      %v3691 = vadd.f32 0.0, %v3690
      %v3692 = vpop.f32.mrb[0].mxu0
      %v3693 = vpop.f32.mrb[0].mxu0
      %v3694 = vadd.f32 0.0, %v3693
      %v3695 = vpop.f32.mrb[0].mxu0
      %3696 = vmatprep.mubr.bf16.mxu0 0
      %3697 = vmatmul.mubr.bf16.gmra.mrb[0].mxu0 %v3521
      %v3698 = vpop.f32.mrb[0].mxu0
      %v3699 = vadd.f32 0.0, %v3698
      %v3700 = vpop.f32.mrb[0].mxu0
      %v3701 = vpop.f32.mrb[0].mxu0
      %v3702 = vadd.f32 0.0, %v3701
      %v3703 = vpop.f32.mrb[0].mxu0
      %3704 = vmatprep.mubr.bf16.mxu0 0
      %3705 = vmatmul.mubr.bf16.gmra.mrb[0].mxu0 %v3522
      %v3706 = vpop.f32.mrb[0].mxu0
      %v3707 = vadd.f32 0.0, %v3706
      %v3708 = vpop.f32.mrb[0].mxu0
      %v3709 = vpop.f32.mrb[0].mxu0
      %v3710 = vadd.f32 0.0, %v3709
      %v3711 = vpop.f32.mrb[0].mxu0
      %3712 = vmatprep.mubr.bf16.mxu0 0
      %3713 = vmatmul.mubr.bf16.gmra.mrb[0].mxu0 %v3523
      %v3714 = vpop.f32.mrb[0].mxu0
      %v3715 = vadd.f32 0.0, %v3714
      %v3716 = vpop.f32.mrb[0].mxu0
      %v3717 = vpop.f32.mrb[0].mxu0
      %v3718 = vadd.f32 0.0, %v3717
      %v3719 = vpop.f32.mrb[0].mxu0
      %3720 = vmatprep.mubr.bf16.mxu0 0
      %3721 = vmatmul.mubr.bf16.gmra.mrb[0].mxu0 %v3524
      %v3722 = vpop.f32.mrb[0].mxu0
      %v3723 = vadd.f32 0.0, %v3722
      %v3724 = vpop.f32.mrb[0].mxu0
      %v3725 = vpop.f32.mrb[0].mxu0
      %v3726 = vadd.f32 0.0, %v3725
      %v3727 = vpop.f32.mrb[0].mxu0
      %3728 = vmatprep.mubr.bf16.mxu0 0
      %3729 = vmatmul.mubr.bf16.gmra.mrb[0].mxu0 %v3525
      %v3730 = vpop.f32.mrb[0].mxu0
      %v3731 = vadd.f32 0.0, %v3730
      %v3732 = vpop.f32.mrb[0].mxu0
      %v3733 = vpop.f32.mrb[0].mxu0
      %v3734 = vadd.f32 0.0, %v3733
      %v3735 = vpop.f32.mrb[0].mxu0
      %3736 = vmatprep.mubr.bf16.mxu0 0
      %3737 = vmatmul.mubr.bf16.gmra.mrb[0].mxu0 %v3526
      %v3738 = vpop.f32.mrb[0].mxu0
      %v3739 = vadd.f32 0.0, %v3738
      %v3740 = vpop.f32.mrb[0].mxu0
      %v3741 = vpop.f32.mrb[0].mxu0
      %v3742 = vadd.f32 0.0, %v3741
      %v3743 = vpop.f32.mrb[0].mxu0
      %3744 = vmatprep.mubr.bf16.mxu0 0
      %3745 = vmatmul.mubr.bf16.gmra.mrb[0].mxu0 %v3527
      %v3746 = vpop.f32.mrb[0].mxu0
      %v3747 = vadd.f32 0.0, %v3746
      %v3748 = vpop.f32.mrb[0].mxu0
      %v3749 = vpop.f32.mrb[0].mxu0
      %v3750 = vadd.f32 0.0, %v3749
      %v3751 = vpop.f32.mrb[0].mxu0
      %3752 = vdwg.mxu0
      %v3753 = vadd.f32 %v3366, %v3627
      %v3754 = vadd.f32 %v3367, %v3630
      %v3755 = vadd.f32 %v3368, %v3635
      %v3756 = vadd.f32 %v3369, %v3638
      %v3757 = vadd.f32 %v3370, %v3643
      %v3758 = vadd.f32 %v3371, %v3646
      %v3759 = vadd.f32 %v3372, %v3651
      %v3760 = vadd.f32 %v3373, %v3654
      %v3761 = vadd.f32 %v3374, %v3659
      %v3762 = vadd.f32 %v3375, %v3662
      %v3763 = vadd.f32 %v3376, %v3667
      %v3764 = vadd.f32 %v3377, %v3670
      %v3765 = vadd.f32 %v3378, %v3675
      %v3766 = vadd.f32 %v3379, %v3678
      %v3767 = vadd.f32 %v3380, %v3683
      %v3768 = vadd.f32 %v3381, %v3686
      %v3769 = vadd.f32 %v3382, %v3691
      %v3770 = vadd.f32 %v3383, %v3694
      %v3771 = vadd.f32 %v3384, %v3699
      %v3772 = vadd.f32 %v3385, %v3702
      %v3773 = vadd.f32 %v3386, %v3707
      %v3774 = vadd.f32 %v3387, %v3710
      %v3775 = vadd.f32 %v3388, %v3715
      %v3776 = vadd.f32 %v3389, %v3718
      %v3777 = vadd.f32 %v3390, %v3723
      %v3778 = vadd.f32 %v3391, %v3726
      %v3779 = vadd.f32 %v3392, %v3731
      %v3780 = vadd.f32 %v3393, %v3734
      %v3781 = vadd.f32 %v3394, %v3739
      %v3782 = vadd.f32 %v3395, %v3742
      %v3783 = vadd.f32 %v3396, %v3747
      %v3784 = vadd.f32 %v3397, %v3750
      %v3785 = vld [vmem:[%s3398] sm:$0xf]
      %v3786 = vld [vmem:[%s3398 + $0x4] sm:$0xf]
      %v3787 = vld [vmem:[%s3398 + $0x8] sm:$0x1]
      %v3788 = vld [vmem:[%s3398 + $0xc] sm:$0xf]
      %v3789 = vld [vmem:[%s3398 + $0x10] sm:$0xf]
      %v3790 = vld [vmem:[%s3398 + $0x14] sm:$0x1]
      %v3791 = vld [vmem:[%s3398 + $0x18] sm:$0xf]
      %v3792 = vld [vmem:[%s3398 + $0x1c] sm:$0xf]
      %v3793 = vld [vmem:[%s3398 + $0x20] sm:$0x1]
      %v3794 = vld [vmem:[%s3398 + $0x24] sm:$0xf]
      %v3795 = vld [vmem:[%s3398 + $0x28] sm:$0xf]
      %v3796 = vld [vmem:[%s3398 + $0x2c] sm:$0x1]
      %v3797 = vld [vmem:[%s3398 + $0x30] sm:$0xf]
      %v3798 = vld [vmem:[%s3398 + $0x34] sm:$0xf]
      %v3799 = vld [vmem:[%s3398 + $0x38] sm:$0x1]
      %v3800 = vld [vmem:[%s3398 + $0x3c] sm:$0xf]
      %v3801 = vld [vmem:[%s3398 + $0x40] sm:$0xf]
      %v3802 = vld [vmem:[%s3398 + $0x44] sm:$0x1]
      %v3803 = vld [vmem:[%s3398 + $0x48] sm:$0xf]
      %v3804 = vld [vmem:[%s3398 + $0x4c] sm:$0xf]
      %v3805 = vld [vmem:[%s3398 + $0x50] sm:$0x1]
      %v3806 = vld [vmem:[%s3398 + $0x54] sm:$0xf]
      %v3807 = vld [vmem:[%s3398 + $0x58] sm:$0xf]
      %v3808 = vld [vmem:[%s3398 + $0x5c] sm:$0x1]
      %v3809 = vld [vmem:[%s3398 + $0x60] sm:$0xf]
      %v3810 = vld [vmem:[%s3398 + $0x64] sm:$0xf]
      %v3811 = vld [vmem:[%s3398 + $0x68] sm:$0x1]
      %v3812 = vld [vmem:[%s3398 + $0x6c] sm:$0xf]
      %v3813 = vld [vmem:[%s3398 + $0x70] sm:$0xf]
      %v3814 = vld [vmem:[%s3398 + $0x74] sm:$0x1]
      %v3815 = vld [vmem:[%s3398 + $0x78] sm:$0xf]
      %v3816 = vld [vmem:[%s3398 + $0x7c] sm:$0xf]
      %v3817 = vld [vmem:[%s3398 + $0x80] sm:$0x1]
      %v3818 = vld [vmem:[%s3398 + $0x84] sm:$0xf]
      %v3819 = vld [vmem:[%s3398 + $0x88] sm:$0xf]
      %v3820 = vld [vmem:[%s3398 + $0x8c] sm:$0x1]
      %v3821 = vld [vmem:[%s3398 + $0x90] sm:$0xf]
      %v3822 = vld [vmem:[%s3398 + $0x94] sm:$0xf]
      %v3823 = vld [vmem:[%s3398 + $0x98] sm:$0x1]
      %v3824 = vld [vmem:[%s3398 + $0x9c] sm:$0xf]
      %v3825 = vld [vmem:[%s3398 + $0xa0] sm:$0xf]
      %v3826 = vld [vmem:[%s3398 + $0xa4] sm:$0x1]
      %v3827 = vld [vmem:[%s3398 + $0xa8] sm:$0xf]
      %v3828 = vld [vmem:[%s3398 + $0xac] sm:$0xf]
      %v3829 = vld [vmem:[%s3398 + $0xb0] sm:$0x1]
      %v3830 = vld [vmem:[%s3398 + $0xb4] sm:$0xf]
      %v3831 = vld [vmem:[%s3398 + $0xb8] sm:$0xf]
      %v3832 = vld [vmem:[%s3398 + $0xbc] sm:$0x1]
      %v3834 = vshrl.u32 %v3785, 16
      %v3836 = vrot.slane %v3834, 4
      %v3837 = vshll.u32 %v3785, 16
      %v3839 = vrot.slane %v3837, 5
      %v3840 = vor.u32 %v3836, %v3839
      %v3841 = vrot.slane %v3840, 4
      %v3843 = vshll.u32 %v3786, 16
      %v3845 = vrot.slane %v3843, 5
      %v3846 = vsel %vm294, %v3841, %v3845
      %v3847 = vshrl.u32 %v3786, 16
      %v3849 = vrot.slane %v3847, 4
      %v3850 = vor.u32 %v3849, %v3845
      %v3851 = vrot.slane %v3850, 4
      %v3853 = vshll.u32 %v3787, 16
      %v3855 = vrot.slane %v3853, 5
      %v3856 = vsel %vm294, %v3851, %v3855
      %v3858 = vshrl.u32 %v3788, 16
      %v3860 = vrot.slane %v3858, 4
      %v3861 = vshll.u32 %v3788, 16
      %v3863 = vrot.slane %v3861, 5
      %v3864 = vor.u32 %v3860, %v3863
      %v3865 = vrot.slane %v3864, 4
      %v3867 = vshll.u32 %v3789, 16
      %v3869 = vrot.slane %v3867, 5
      %v3870 = vsel %vm294, %v3865, %v3869
      %v3871 = vshrl.u32 %v3789, 16
      %v3873 = vrot.slane %v3871, 4
      %v3874 = vor.u32 %v3873, %v3869
      %v3875 = vrot.slane %v3874, 4
      %v3877 = vshll.u32 %v3790, 16
      %v3879 = vrot.slane %v3877, 5
      %v3880 = vsel %vm294, %v3875, %v3879
      %v3882 = vshrl.u32 %v3791, 16
      %v3884 = vrot.slane %v3882, 4
      %v3885 = vshll.u32 %v3791, 16
      %v3887 = vrot.slane %v3885, 5
      %v3888 = vor.u32 %v3884, %v3887
      %v3889 = vrot.slane %v3888, 4
      %v3891 = vshll.u32 %v3792, 16
      %v3893 = vrot.slane %v3891, 5
      %v3894 = vsel %vm294, %v3889, %v3893
      %v3895 = vshrl.u32 %v3792, 16
      %v3897 = vrot.slane %v3895, 4
      %v3898 = vor.u32 %v3897, %v3893
      %v3899 = vrot.slane %v3898, 4
      %v3901 = vshll.u32 %v3793, 16
      %v3903 = vrot.slane %v3901, 5
      %v3904 = vsel %vm294, %v3899, %v3903
      %v3906 = vshrl.u32 %v3794, 16
      %v3908 = vrot.slane %v3906, 4
      %v3909 = vshll.u32 %v3794, 16
      %v3911 = vrot.slane %v3909, 5
      %v3912 = vor.u32 %v3908, %v3911
      %v3913 = vrot.slane %v3912, 4
      %v3915 = vshll.u32 %v3795, 16
      %v3917 = vrot.slane %v3915, 5
      %v3918 = vsel %vm294, %v3913, %v3917
      %v3919 = vshrl.u32 %v3795, 16
      %v3921 = vrot.slane %v3919, 4
      %v3922 = vor.u32 %v3921, %v3917
      %v3923 = vrot.slane %v3922, 4
      %v3925 = vshll.u32 %v3796, 16
      %v3927 = vrot.slane %v3925, 5
      %v3928 = vsel %vm294, %v3923, %v3927
      %v3930 = vshrl.u32 %v3797, 16
      %v3932 = vrot.slane %v3930, 4
      %v3933 = vshll.u32 %v3797, 16
      %v3935 = vrot.slane %v3933, 5
      %v3936 = vor.u32 %v3932, %v3935
      %v3937 = vrot.slane %v3936, 4
      %v3939 = vshll.u32 %v3798, 16
      %v3941 = vrot.slane %v3939, 5
      %v3942 = vsel %vm294, %v3937, %v3941
      %v3943 = vshrl.u32 %v3798, 16
      %v3945 = vrot.slane %v3943, 4
      %v3946 = vor.u32 %v3945, %v3941
      %v3947 = vrot.slane %v3946, 4
      %v3949 = vshll.u32 %v3799, 16
      %v3951 = vrot.slane %v3949, 5
      %v3952 = vsel %vm294, %v3947, %v3951
      %v3954 = vshrl.u32 %v3800, 16
      %v3956 = vrot.slane %v3954, 4
      %v3957 = vshll.u32 %v3800, 16
      %v3959 = vrot.slane %v3957, 5
      %v3960 = vor.u32 %v3956, %v3959
      %v3961 = vrot.slane %v3960, 4
      %v3963 = vshll.u32 %v3801, 16
      %v3965 = vrot.slane %v3963, 5
      %v3966 = vsel %vm294, %v3961, %v3965
      %v3967 = vshrl.u32 %v3801, 16
      %v3969 = vrot.slane %v3967, 4
      %v3970 = vor.u32 %v3969, %v3965
      %v3971 = vrot.slane %v3970, 4
      %v3973 = vshll.u32 %v3802, 16
      %v3975 = vrot.slane %v3973, 5
      %v3976 = vsel %vm294, %v3971, %v3975
      %v3978 = vshrl.u32 %v3803, 16
      %v3980 = vrot.slane %v3978, 4
      %v3981 = vshll.u32 %v3803, 16
      %v3983 = vrot.slane %v3981, 5
      %v3984 = vor.u32 %v3980, %v3983
      %v3985 = vrot.slane %v3984, 4
      %v3987 = vshll.u32 %v3804, 16
      %v3989 = vrot.slane %v3987, 5
      %v3990 = vsel %vm294, %v3985, %v3989
      %v3991 = vshrl.u32 %v3804, 16
      %v3993 = vrot.slane %v3991, 4
      %v3994 = vor.u32 %v3993, %v3989
      %v3995 = vrot.slane %v3994, 4
      %v3997 = vshll.u32 %v3805, 16
      %v3999 = vrot.slane %v3997, 5
      %v4000 = vsel %vm294, %v3995, %v3999
      %v4002 = vshrl.u32 %v3806, 16
      %v4004 = vrot.slane %v4002, 4
      %v4005 = vshll.u32 %v3806, 16
      %v4007 = vrot.slane %v4005, 5
      %v4008 = vor.u32 %v4004, %v4007
      %v4009 = vrot.slane %v4008, 4
      %v4011 = vshll.u32 %v3807, 16
      %v4013 = vrot.slane %v4011, 5
      %v4014 = vsel %vm294, %v4009, %v4013
      %v4015 = vshrl.u32 %v3807, 16
      %v4017 = vrot.slane %v4015, 4
      %v4018 = vor.u32 %v4017, %v4013
      %v4019 = vrot.slane %v4018, 4
      %v4021 = vshll.u32 %v3808, 16
      %v4023 = vrot.slane %v4021, 5
      %v4024 = vsel %vm294, %v4019, %v4023
      %v4026 = vshrl.u32 %v3809, 16
      %v4028 = vrot.slane %v4026, 4
      %v4029 = vshll.u32 %v3809, 16
      %v4031 = vrot.slane %v4029, 5
      %v4032 = vor.u32 %v4028, %v4031
      %v4033 = vrot.slane %v4032, 4
      %v4035 = vshll.u32 %v3810, 16
      %v4037 = vrot.slane %v4035, 5
      %v4038 = vsel %vm294, %v4033, %v4037
      %v4039 = vshrl.u32 %v3810, 16
      %v4041 = vrot.slane %v4039, 4
      %v4042 = vor.u32 %v4041, %v4037
      %v4043 = vrot.slane %v4042, 4
      %v4045 = vshll.u32 %v3811, 16
      %v4047 = vrot.slane %v4045, 5
      %v4048 = vsel %vm294, %v4043, %v4047
      %v4050 = vshrl.u32 %v3812, 16
      %v4052 = vrot.slane %v4050, 4
      %v4053 = vshll.u32 %v3812, 16
      %v4055 = vrot.slane %v4053, 5
      %v4056 = vor.u32 %v4052, %v4055
      %v4057 = vrot.slane %v4056, 4
      %v4059 = vshll.u32 %v3813, 16
      %v4061 = vrot.slane %v4059, 5
      %v4062 = vsel %vm294, %v4057, %v4061
      %v4063 = vshrl.u32 %v3813, 16
      %v4065 = vrot.slane %v4063, 4
      %v4066 = vor.u32 %v4065, %v4061
      %v4067 = vrot.slane %v4066, 4
      %v4069 = vshll.u32 %v3814, 16
      %v4071 = vrot.slane %v4069, 5
      %v4072 = vsel %vm294, %v4067, %v4071
      %v4074 = vshrl.u32 %v3815, 16
      %v4076 = vrot.slane %v4074, 4
      %v4077 = vshll.u32 %v3815, 16
      %v4079 = vrot.slane %v4077, 5
      %v4080 = vor.u32 %v4076, %v4079
      %v4081 = vrot.slane %v4080, 4
      %v4083 = vshll.u32 %v3816, 16
      %v4085 = vrot.slane %v4083, 5
      %v4086 = vsel %vm294, %v4081, %v4085
      %v4087 = vshrl.u32 %v3816, 16
      %v4089 = vrot.slane %v4087, 4
      %v4090 = vor.u32 %v4089, %v4085
      %v4091 = vrot.slane %v4090, 4
      %v4093 = vshll.u32 %v3817, 16
      %v4095 = vrot.slane %v4093, 5
      %v4096 = vsel %vm294, %v4091, %v4095
      %v4098 = vshrl.u32 %v3818, 16
      %v4100 = vrot.slane %v4098, 4
      %v4101 = vshll.u32 %v3818, 16
      %v4103 = vrot.slane %v4101, 5
      %v4104 = vor.u32 %v4100, %v4103
      %v4105 = vrot.slane %v4104, 4
      %v4107 = vshll.u32 %v3819, 16
      %v4109 = vrot.slane %v4107, 5
      %v4110 = vsel %vm294, %v4105, %v4109
      %v4111 = vshrl.u32 %v3819, 16
      %v4113 = vrot.slane %v4111, 4
      %v4114 = vor.u32 %v4113, %v4109
      %v4115 = vrot.slane %v4114, 4
      %v4117 = vshll.u32 %v3820, 16
      %v4119 = vrot.slane %v4117, 5
      %v4120 = vsel %vm294, %v4115, %v4119
      %v4122 = vshrl.u32 %v3821, 16
      %v4124 = vrot.slane %v4122, 4
      %v4125 = vshll.u32 %v3821, 16
      %v4127 = vrot.slane %v4125, 5
      %v4128 = vor.u32 %v4124, %v4127
      %v4129 = vrot.slane %v4128, 4
      %v4131 = vshll.u32 %v3822, 16
      %v4133 = vrot.slane %v4131, 5
      %v4134 = vsel %vm294, %v4129, %v4133
      %v4135 = vshrl.u32 %v3822, 16
      %v4137 = vrot.slane %v4135, 4
      %v4138 = vor.u32 %v4137, %v4133
      %v4139 = vrot.slane %v4138, 4
      %v4141 = vshll.u32 %v3823, 16
      %v4143 = vrot.slane %v4141, 5
      %v4144 = vsel %vm294, %v4139, %v4143
      %v4146 = vshrl.u32 %v3824, 16
      %v4148 = vrot.slane %v4146, 4
      %v4149 = vshll.u32 %v3824, 16
      %v4151 = vrot.slane %v4149, 5
      %v4152 = vor.u32 %v4148, %v4151
      %v4153 = vrot.slane %v4152, 4
      %v4155 = vshll.u32 %v3825, 16
      %v4157 = vrot.slane %v4155, 5
      %v4158 = vsel %vm294, %v4153, %v4157
      %v4159 = vshrl.u32 %v3825, 16
      %v4161 = vrot.slane %v4159, 4
      %v4162 = vor.u32 %v4161, %v4157
      %v4163 = vrot.slane %v4162, 4
      %v4165 = vshll.u32 %v3826, 16
      %v4167 = vrot.slane %v4165, 5
      %v4168 = vsel %vm294, %v4163, %v4167
      %v4170 = vshrl.u32 %v3827, 16
      %v4172 = vrot.slane %v4170, 4
      %v4173 = vshll.u32 %v3827, 16
      %v4175 = vrot.slane %v4173, 5
      %v4176 = vor.u32 %v4172, %v4175
      %v4177 = vrot.slane %v4176, 4
      %v4179 = vshll.u32 %v3828, 16
      %v4181 = vrot.slane %v4179, 5
      %v4182 = vsel %vm294, %v4177, %v4181
      %v4183 = vshrl.u32 %v3828, 16
      %v4185 = vrot.slane %v4183, 4
      %v4186 = vor.u32 %v4185, %v4181
      %v4187 = vrot.slane %v4186, 4
      %v4189 = vshll.u32 %v3829, 16
      %v4191 = vrot.slane %v4189, 5
      %v4192 = vsel %vm294, %v4187, %v4191
      %v4194 = vshrl.u32 %v3830, 16
      %v4196 = vrot.slane %v4194, 4
      %v4197 = vshll.u32 %v3830, 16
      %v4199 = vrot.slane %v4197, 5
      %v4200 = vor.u32 %v4196, %v4199
      %v4201 = vrot.slane %v4200, 4
      %v4203 = vshll.u32 %v3831, 16
      %v4205 = vrot.slane %v4203, 5
      %v4206 = vsel %vm294, %v4201, %v4205
      %v4207 = vshrl.u32 %v3831, 16
      %v4209 = vrot.slane %v4207, 4
      %v4210 = vor.u32 %v4209, %v4205
      %v4211 = vrot.slane %v4210, 4
      %v4213 = vshll.u32 %v3832, 16
      %v4215 = vrot.slane %v4213, 5
      %v4216 = vsel %vm294, %v4211, %v4215
      %s4217 = scalar_lea.vmem %s211, 448
      %v4218 = vld [vmem:[%s4217] sm:$0xf]
      %v4219 = vld [vmem:[%s4217 + $0x4] sm:$0xf]
      %v4220 = vld [vmem:[%s4217 + $0x8] sm:$0xf]
      %v4221 = vld [vmem:[%s4217 + $0xc] sm:$0xf]
      %v4222 = vld [vmem:[%s4217 + $0x10] sm:$0xf]
      %v4223 = vld [vmem:[%s4217 + $0x14] sm:$0xf]
      %v4224 = vld [vmem:[%s4217 + $0x18] sm:$0xf]
      %v4225 = vld [vmem:[%s4217 + $0x1c] sm:$0xf]
      %v4226 = vld [vmem:[%s4217 + $0x20] sm:$0xf]
      %v4227 = vld [vmem:[%s4217 + $0x24] sm:$0xf]
      %v4228 = vld [vmem:[%s4217 + $0x28] sm:$0xf]
      %v4229 = vld [vmem:[%s4217 + $0x2c] sm:$0xf]
      %v4230 = vld [vmem:[%s4217 + $0x30] sm:$0xf]
      %v4231 = vld [vmem:[%s4217 + $0x34] sm:$0xf]
      %v4232 = vld [vmem:[%s4217 + $0x38] sm:$0xf]
      %v4233 = vld [vmem:[%s4217 + $0x3c] sm:$0xf]
      %v4234 = vunpack.c.l.b16 %v3846
      %v4235 = vunpack.c.l.b16 %v3856
      %v4236 = vunpack.c.l.b16 %v3870
      %v4237 = vunpack.c.l.b16 %v3880
      %v4238 = vunpack.c.l.b16 %v3894
      %v4239 = vunpack.c.l.b16 %v3904
      %v4240 = vunpack.c.l.b16 %v3918
      %v4241 = vunpack.c.l.b16 %v3928
      %v4242 = vunpack.c.l.b16 %v3942
      %v4243 = vunpack.c.l.b16 %v3952
      %v4244 = vunpack.c.l.b16 %v3966
      %v4245 = vunpack.c.l.b16 %v3976
      %v4246 = vunpack.c.l.b16 %v3990
      %v4247 = vunpack.c.l.b16 %v4000
      %v4248 = vunpack.c.l.b16 %v4014
      %v4249 = vunpack.c.l.b16 %v4024
      %v4250 = vunpack.c.l.b16 %v4038
      %v4251 = vunpack.c.l.b16 %v4048
      %v4252 = vunpack.c.l.b16 %v4062
      %v4253 = vunpack.c.l.b16 %v4072
      %v4254 = vunpack.c.l.b16 %v4086
      %v4255 = vunpack.c.l.b16 %v4096
      %v4256 = vunpack.c.l.b16 %v4110
      %v4257 = vunpack.c.l.b16 %v4120
      %v4258 = vunpack.c.l.b16 %v4134
      %v4259 = vunpack.c.l.b16 %v4144
      %v4260 = vunpack.c.l.b16 %v4158
      %v4261 = vunpack.c.l.b16 %v4168
      %v4262 = vunpack.c.l.b16 %v4182
      %v4263 = vunpack.c.l.b16 %v4192
      %v4264 = vunpack.c.l.b16 %v4206
      %v4265 = vunpack.c.l.b16 %v4216
      %v4266 = vpack.c.b16 %v4235, %v4234
      %v4267 = vpack.c.b16 %v4237, %v4236
      %v4268 = vpack.c.b16 %v4239, %v4238
      %v4269 = vpack.c.b16 %v4241, %v4240
      %v4270 = vpack.c.b16 %v4243, %v4242
      %v4271 = vpack.c.b16 %v4245, %v4244
      %v4272 = vpack.c.b16 %v4247, %v4246
      %v4273 = vpack.c.b16 %v4249, %v4248
      %v4274 = vpack.c.b16 %v4251, %v4250
      %v4275 = vpack.c.b16 %v4253, %v4252
      %v4276 = vpack.c.b16 %v4255, %v4254
      %v4277 = vpack.c.b16 %v4257, %v4256
      %v4278 = vpack.c.b16 %v4259, %v4258
      %v4279 = vpack.c.b16 %v4261, %v4260
      %v4280 = vpack.c.b16 %v4263, %v4262
      %v4281 = vpack.c.b16 %v4265, %v4264
      %v4314 = vunpack.c.l.b16 %v4218
      %v4315 = vunpack.c.l.b16 %v4219
      %v4316 = vunpack.c.l.b16 %v4220
      %v4317 = vunpack.c.l.b16 %v4221
      %v4318 = vunpack.c.l.b16 %v4222
      %v4319 = vunpack.c.l.b16 %v4223
      %v4320 = vunpack.c.l.b16 %v4224
      %v4321 = vunpack.c.l.b16 %v4225
      %v4322 = vunpack.c.l.b16 %v4226
      %v4323 = vunpack.c.l.b16 %v4227
      %v4324 = vunpack.c.l.b16 %v4228
      %v4325 = vunpack.c.l.b16 %v4229
      %v4326 = vunpack.c.l.b16 %v4230
      %v4327 = vunpack.c.l.b16 %v4231
      %v4328 = vunpack.c.l.b16 %v4232
      %v4329 = vunpack.c.l.b16 %v4233
      %v4330 = vpack.c.b16 %v4315, %v4314
      %v4331 = vpack.c.b16 %v4317, %v4316
      %v4332 = vpack.c.b16 %v4319, %v4318
      %v4333 = vpack.c.b16 %v4321, %v4320
      %v4334 = vpack.c.b16 %v4323, %v4322
      %v4335 = vpack.c.b16 %v4325, %v4324
      %v4336 = vpack.c.b16 %v4327, %v4326
      %v4337 = vpack.c.b16 %v4329, %v4328
      %4346 = vmatprep.subr.bf16.mxu0 0
      %4347 = vmatpush1.bf16.msra.mxu0 %v4330
      %4348 = vmatprep.subr.bf16.mxu0 0
      %4349 = vmatpush1.bf16.msra.mxu0 %v4331
      %4350 = vmatprep.subr.bf16.mxu0 0
      %4351 = vmatpush1.bf16.msra.mxu0 %v4332
      %4352 = vmatprep.subr.bf16.mxu0 0
      %4353 = vmatpush1.bf16.msra.mxu0 %v4333
      %4354 = vmatprep.subr.bf16.mxu0 0
      %4355 = vmatpush1.bf16.msra.mxu0 %v4334
      %4356 = vmatprep.subr.bf16.mxu0 0
      %4357 = vmatpush1.bf16.msra.mxu0 %v4335
      %4358 = vmatprep.subr.bf16.mxu0 0
      %4359 = vmatpush1.bf16.msra.mxu0 %v4336
      %4360 = vmatprep.subr.bf16.mxu0 0
      %4361 = vmatpush1.bf16.msra.mxu0 %v4337
      %4362 = vmatprep.subr.bf16.mxu0 0
      %4363 = vmatpush1.bf16.msra.mxu0 0
      %4364 = vmatprep.subr.bf16.mxu0 0
      %4365 = vmatpush1.bf16.msra.mxu0 0
      %4366 = vmatprep.subr.bf16.mxu0 0
      %4367 = vmatpush1.bf16.msra.mxu0 0
      %4368 = vmatprep.subr.bf16.mxu0 0
      %4369 = vmatpush1.bf16.msra.mxu0 0
      %4370 = vmatprep.subr.bf16.mxu0 0
      %4371 = vmatpush1.bf16.msra.mxu0 0
      %4372 = vmatprep.subr.bf16.mxu0 0
      %4373 = vmatpush1.bf16.msra.mxu0 0
      %4374 = vmatprep.subr.bf16.mxu0 0
      %4375 = vmatpush1.bf16.msra.mxu0 0
      %4376 = vmatprep.subr.bf16.mxu0 0
      %4377 = vmatpush1.bf16.msra.mxu0 0
      %4378 = vmatprep.mubr.bf16.mxu0 0
      %4379 = vmatmul.mubr.bf16.gmra.mrb[0].mxu0 %v4266
      %v4380 = vpop.f32.mrb[0].mxu0
      %v4381 = vadd.f32 0.0, %v4380
      %v4382 = vpop.f32.mrb[0].mxu0
      %v4383 = vpop.f32.mrb[0].mxu0
      %v4384 = vadd.f32 0.0, %v4383
      %v4385 = vpop.f32.mrb[0].mxu0
      %4386 = vmatprep.mubr.bf16.mxu0 0
      %4387 = vmatmul.mubr.bf16.gmra.mrb[0].mxu0 %v4267
      %v4388 = vpop.f32.mrb[0].mxu0
      %v4389 = vadd.f32 0.0, %v4388
      %v4390 = vpop.f32.mrb[0].mxu0
      %v4391 = vpop.f32.mrb[0].mxu0
      %v4392 = vadd.f32 0.0, %v4391
      %v4393 = vpop.f32.mrb[0].mxu0
      %4394 = vmatprep.mubr.bf16.mxu0 0
      %4395 = vmatmul.mubr.bf16.gmra.mrb[0].mxu0 %v4268
      %v4396 = vpop.f32.mrb[0].mxu0
      %v4397 = vadd.f32 0.0, %v4396
      %v4398 = vpop.f32.mrb[0].mxu0
      %v4399 = vpop.f32.mrb[0].mxu0
      %v4400 = vadd.f32 0.0, %v4399
      %v4401 = vpop.f32.mrb[0].mxu0
      %4402 = vmatprep.mubr.bf16.mxu0 0
      %4403 = vmatmul.mubr.bf16.gmra.mrb[0].mxu0 %v4269
      %v4404 = vpop.f32.mrb[0].mxu0
      %v4405 = vadd.f32 0.0, %v4404
      %v4406 = vpop.f32.mrb[0].mxu0
      %v4407 = vpop.f32.mrb[0].mxu0
      %v4408 = vadd.f32 0.0, %v4407
      %v4409 = vpop.f32.mrb[0].mxu0
      %4410 = vmatprep.mubr.bf16.mxu0 0
      %4411 = vmatmul.mubr.bf16.gmra.mrb[0].mxu0 %v4270
      %v4412 = vpop.f32.mrb[0].mxu0
      %v4413 = vadd.f32 0.0, %v4412
      %v4414 = vpop.f32.mrb[0].mxu0
      %v4415 = vpop.f32.mrb[0].mxu0
      %v4416 = vadd.f32 0.0, %v4415
      %v4417 = vpop.f32.mrb[0].mxu0
      %4418 = vmatprep.mubr.bf16.mxu0 0
      %4419 = vmatmul.mubr.bf16.gmra.mrb[0].mxu0 %v4271
      %v4420 = vpop.f32.mrb[0].mxu0
      %v4421 = vadd.f32 0.0, %v4420
      %v4422 = vpop.f32.mrb[0].mxu0
      %v4423 = vpop.f32.mrb[0].mxu0
      %v4424 = vadd.f32 0.0, %v4423
      %v4425 = vpop.f32.mrb[0].mxu0
      %4426 = vmatprep.mubr.bf16.mxu0 0
      %4427 = vmatmul.mubr.bf16.gmra.mrb[0].mxu0 %v4272
      %v4428 = vpop.f32.mrb[0].mxu0
      %v4429 = vadd.f32 0.0, %v4428
      %v4430 = vpop.f32.mrb[0].mxu0
      %v4431 = vpop.f32.mrb[0].mxu0
      %v4432 = vadd.f32 0.0, %v4431
      %v4433 = vpop.f32.mrb[0].mxu0
      %4434 = vmatprep.mubr.bf16.mxu0 0
      %4435 = vmatmul.mubr.bf16.gmra.mrb[0].mxu0 %v4273
      %v4436 = vpop.f32.mrb[0].mxu0
      %v4437 = vadd.f32 0.0, %v4436
      %v4438 = vpop.f32.mrb[0].mxu0
      %v4439 = vpop.f32.mrb[0].mxu0
      %v4440 = vadd.f32 0.0, %v4439
      %v4441 = vpop.f32.mrb[0].mxu0
      %4442 = vmatprep.mubr.bf16.mxu0 0
      %4443 = vmatmul.mubr.bf16.gmra.mrb[0].mxu0 %v4274
      %v4444 = vpop.f32.mrb[0].mxu0
      %v4445 = vadd.f32 0.0, %v4444
      %v4446 = vpop.f32.mrb[0].mxu0
      %v4447 = vpop.f32.mrb[0].mxu0
      %v4448 = vadd.f32 0.0, %v4447
      %v4449 = vpop.f32.mrb[0].mxu0
      %4450 = vmatprep.mubr.bf16.mxu0 0
      %4451 = vmatmul.mubr.bf16.gmra.mrb[0].mxu0 %v4275
      %v4452 = vpop.f32.mrb[0].mxu0
      %v4453 = vadd.f32 0.0, %v4452
      %v4454 = vpop.f32.mrb[0].mxu0
      %v4455 = vpop.f32.mrb[0].mxu0
      %v4456 = vadd.f32 0.0, %v4455
      %v4457 = vpop.f32.mrb[0].mxu0
      %4458 = vmatprep.mubr.bf16.mxu0 0
      %4459 = vmatmul.mubr.bf16.gmra.mrb[0].mxu0 %v4276
      %v4460 = vpop.f32.mrb[0].mxu0
      %v4461 = vadd.f32 0.0, %v4460
      %v4462 = vpop.f32.mrb[0].mxu0
      %v4463 = vpop.f32.mrb[0].mxu0
      %v4464 = vadd.f32 0.0, %v4463
      %v4465 = vpop.f32.mrb[0].mxu0
      %4466 = vmatprep.mubr.bf16.mxu0 0
      %4467 = vmatmul.mubr.bf16.gmra.mrb[0].mxu0 %v4277
      %v4468 = vpop.f32.mrb[0].mxu0
      %v4469 = vadd.f32 0.0, %v4468
      %v4470 = vpop.f32.mrb[0].mxu0
      %v4471 = vpop.f32.mrb[0].mxu0
      %v4472 = vadd.f32 0.0, %v4471
      %v4473 = vpop.f32.mrb[0].mxu0
      %4474 = vmatprep.mubr.bf16.mxu0 0
      %4475 = vmatmul.mubr.bf16.gmra.mrb[0].mxu0 %v4278
      %v4476 = vpop.f32.mrb[0].mxu0
      %v4477 = vadd.f32 0.0, %v4476
      %v4478 = vpop.f32.mrb[0].mxu0
      %v4479 = vpop.f32.mrb[0].mxu0
      %v4480 = vadd.f32 0.0, %v4479
      %v4481 = vpop.f32.mrb[0].mxu0
      %4482 = vmatprep.mubr.bf16.mxu0 0
      %4483 = vmatmul.mubr.bf16.gmra.mrb[0].mxu0 %v4279
      %v4484 = vpop.f32.mrb[0].mxu0
      %v4485 = vadd.f32 0.0, %v4484
      %v4486 = vpop.f32.mrb[0].mxu0
      %v4487 = vpop.f32.mrb[0].mxu0
      %v4488 = vadd.f32 0.0, %v4487
      %v4489 = vpop.f32.mrb[0].mxu0
      %4490 = vmatprep.mubr.bf16.mxu0 0
      %4491 = vmatmul.mubr.bf16.gmra.mrb[0].mxu0 %v4280
      %v4492 = vpop.f32.mrb[0].mxu0
      %v4493 = vadd.f32 0.0, %v4492
      %v4494 = vpop.f32.mrb[0].mxu0
      %v4495 = vpop.f32.mrb[0].mxu0
      %v4496 = vadd.f32 0.0, %v4495
      %v4497 = vpop.f32.mrb[0].mxu0
      %4498 = vmatprep.mubr.bf16.mxu0 0
      %4499 = vmatmul.mubr.bf16.gmra.mrb[0].mxu0 %v4281
      %v4500 = vpop.f32.mrb[0].mxu0
      %v4501 = vadd.f32 0.0, %v4500
      %v4502 = vpop.f32.mrb[0].mxu0
      %v4503 = vpop.f32.mrb[0].mxu0
      %v4504 = vadd.f32 0.0, %v4503
      %v4505 = vpop.f32.mrb[0].mxu0
      %4506 = vdwg.mxu0
      %v4507 = vadd.f32 %v3753, %v4381
      %v4508 = vadd.f32 %v3754, %v4384
      %v4509 = vadd.f32 %v3755, %v4389
      %v4510 = vadd.f32 %v3756, %v4392
      %v4511 = vadd.f32 %v3757, %v4397
      %v4512 = vadd.f32 %v3758, %v4400
      %v4513 = vadd.f32 %v3759, %v4405
      %v4514 = vadd.f32 %v3760, %v4408
      %v4515 = vadd.f32 %v3761, %v4413
      %v4516 = vadd.f32 %v3762, %v4416
      %v4517 = vadd.f32 %v3763, %v4421
      %v4518 = vadd.f32 %v3764, %v4424
      %v4519 = vadd.f32 %v3765, %v4429
      %v4520 = vadd.f32 %v3766, %v4432
      %v4521 = vadd.f32 %v3767, %v4437
      %v4522 = vadd.f32 %v3768, %v4440
      %v4523 = vadd.f32 %v3769, %v4445
      %v4524 = vadd.f32 %v3770, %v4448
      %v4525 = vadd.f32 %v3771, %v4453
      %v4526 = vadd.f32 %v3772, %v4456
      %v4527 = vadd.f32 %v3773, %v4461
      %v4528 = vadd.f32 %v3774, %v4464
      %v4529 = vadd.f32 %v3775, %v4469
      %v4530 = vadd.f32 %v3776, %v4472
      %v4531 = vadd.f32 %v3777, %v4477
      %v4532 = vadd.f32 %v3778, %v4480
      %v4533 = vadd.f32 %v3779, %v4485
      %v4534 = vadd.f32 %v3780, %v4488
      %v4535 = vadd.f32 %v3781, %v4493
      %v4536 = vadd.f32 %v3782, %v4496
      %v4537 = vadd.f32 %v3783, %v4501
      %v4538 = vadd.f32 %v3784, %v4504
      %v4539 = vld [vmem:[%s3398] sm:$0xe]
      %v4540 = vld [vmem:[%s3398 + $0xc] sm:$0xe]
      %v4541 = vld [vmem:[%s3398 + $0x18] sm:$0xe]
      %v4542 = vld [vmem:[%s3398 + $0x24] sm:$0xe]
      %v4543 = vld [vmem:[%s3398 + $0x30] sm:$0xe]
      %v4544 = vld [vmem:[%s3398 + $0x3c] sm:$0xe]
      %v4545 = vld [vmem:[%s3398 + $0x48] sm:$0xe]
      %v4546 = vld [vmem:[%s3398 + $0x54] sm:$0xe]
      %v4547 = vld [vmem:[%s3398 + $0x60] sm:$0xe]
      %v4548 = vld [vmem:[%s3398 + $0x6c] sm:$0xe]
      %v4549 = vld [vmem:[%s3398 + $0x78] sm:$0xe]
      %v4550 = vld [vmem:[%s3398 + $0x84] sm:$0xe]
      %v4551 = vld [vmem:[%s3398 + $0x90] sm:$0xe]
      %v4552 = vld [vmem:[%s3398 + $0x9c] sm:$0xe]
      %v4553 = vld [vmem:[%s3398 + $0xa8] sm:$0xe]
      %v4554 = vld [vmem:[%s3398 + $0xb4] sm:$0xe]
      %v4603 = vrot.slane %v4539, 5
      %v4604 = vrot.slane %v4603, 4
      %v4605 = vrot.slane %v3786, 5
      %v4606 = vsel %vm1324, %v4604, %v4605
      %v4607 = vrot.slane %v4605, 4
      %v4608 = vrot.slane %v3787, 5
      %v4609 = vsel %vm1324, %v4607, %v4608
      %v4610 = vrot.slane %v4540, 5
      %v4611 = vrot.slane %v4610, 4
      %v4612 = vrot.slane %v3789, 5
      %v4613 = vsel %vm1324, %v4611, %v4612
      %v4614 = vrot.slane %v4612, 4
      %v4615 = vrot.slane %v3790, 5
      %v4616 = vsel %vm1324, %v4614, %v4615
      %v4617 = vrot.slane %v4541, 5
      %v4618 = vrot.slane %v4617, 4
      %v4619 = vrot.slane %v3792, 5
      %v4620 = vsel %vm1324, %v4618, %v4619
      %v4621 = vrot.slane %v4619, 4
      %v4622 = vrot.slane %v3793, 5
      %v4623 = vsel %vm1324, %v4621, %v4622
      %v4624 = vrot.slane %v4542, 5
      %v4625 = vrot.slane %v4624, 4
      %v4626 = vrot.slane %v3795, 5
      %v4627 = vsel %vm1324, %v4625, %v4626
      %v4628 = vrot.slane %v4626, 4
      %v4629 = vrot.slane %v3796, 5
      %v4630 = vsel %vm1324, %v4628, %v4629
      %v4631 = vrot.slane %v4543, 5
      %v4632 = vrot.slane %v4631, 4
      %v4633 = vrot.slane %v3798, 5
      %v4634 = vsel %vm1324, %v4632, %v4633
      %v4635 = vrot.slane %v4633, 4
      %v4636 = vrot.slane %v3799, 5
      %v4637 = vsel %vm1324, %v4635, %v4636
      %v4638 = vrot.slane %v4544, 5
      %v4639 = vrot.slane %v4638, 4
      %v4640 = vrot.slane %v3801, 5
      %v4641 = vsel %vm1324, %v4639, %v4640
      %v4642 = vrot.slane %v4640, 4
      %v4643 = vrot.slane %v3802, 5
      %v4644 = vsel %vm1324, %v4642, %v4643
      %v4645 = vrot.slane %v4545, 5
      %v4646 = vrot.slane %v4645, 4
      %v4647 = vrot.slane %v3804, 5
      %v4648 = vsel %vm1324, %v4646, %v4647
      %v4649 = vrot.slane %v4647, 4
      %v4650 = vrot.slane %v3805, 5
      %v4651 = vsel %vm1324, %v4649, %v4650
      %v4652 = vrot.slane %v4546, 5
      %v4653 = vrot.slane %v4652, 4
      %v4654 = vrot.slane %v3807, 5
      %v4655 = vsel %vm1324, %v4653, %v4654
      %v4656 = vrot.slane %v4654, 4
      %v4657 = vrot.slane %v3808, 5
      %v4658 = vsel %vm1324, %v4656, %v4657
      %v4659 = vrot.slane %v4547, 5
      %v4660 = vrot.slane %v4659, 4
      %v4661 = vrot.slane %v3810, 5
      %v4662 = vsel %vm1324, %v4660, %v4661
      %v4663 = vrot.slane %v4661, 4
      %v4664 = vrot.slane %v3811, 5
      %v4665 = vsel %vm1324, %v4663, %v4664
      %v4666 = vrot.slane %v4548, 5
      %v4667 = vrot.slane %v4666, 4
      %v4668 = vrot.slane %v3813, 5
      %v4669 = vsel %vm1324, %v4667, %v4668
      %v4670 = vrot.slane %v4668, 4
      %v4671 = vrot.slane %v3814, 5
      %v4672 = vsel %vm1324, %v4670, %v4671
      %v4673 = vrot.slane %v4549, 5
      %v4674 = vrot.slane %v4673, 4
      %v4675 = vrot.slane %v3816, 5
      %v4676 = vsel %vm1324, %v4674, %v4675
      %v4677 = vrot.slane %v4675, 4
      %v4678 = vrot.slane %v3817, 5
      %v4679 = vsel %vm1324, %v4677, %v4678
      %v4680 = vrot.slane %v4550, 5
      %v4681 = vrot.slane %v4680, 4
      %v4682 = vrot.slane %v3819, 5
      %v4683 = vsel %vm1324, %v4681, %v4682
      %v4684 = vrot.slane %v4682, 4
      %v4685 = vrot.slane %v3820, 5
      %v4686 = vsel %vm1324, %v4684, %v4685
      %v4687 = vrot.slane %v4551, 5
      %v4688 = vrot.slane %v4687, 4
      %v4689 = vrot.slane %v3822, 5
      %v4690 = vsel %vm1324, %v4688, %v4689
      %v4691 = vrot.slane %v4689, 4
      %v4692 = vrot.slane %v3823, 5
      %v4693 = vsel %vm1324, %v4691, %v4692
      %v4694 = vrot.slane %v4552, 5
      %v4695 = vrot.slane %v4694, 4
      %v4696 = vrot.slane %v3825, 5
      %v4697 = vsel %vm1324, %v4695, %v4696
      %v4698 = vrot.slane %v4696, 4
      %v4699 = vrot.slane %v3826, 5
      %v4700 = vsel %vm1324, %v4698, %v4699
      %v4701 = vrot.slane %v4553, 5
      %v4702 = vrot.slane %v4701, 4
      %v4703 = vrot.slane %v3828, 5
      %v4704 = vsel %vm1324, %v4702, %v4703
      %v4705 = vrot.slane %v4703, 4
      %v4706 = vrot.slane %v3829, 5
      %v4707 = vsel %vm1324, %v4705, %v4706
      %v4708 = vrot.slane %v4554, 5
      %v4709 = vrot.slane %v4708, 4
      %v4710 = vrot.slane %v3831, 5
      %v4711 = vsel %vm1324, %v4709, %v4710
      %v4712 = vrot.slane %v4710, 4
      %v4713 = vrot.slane %v3832, 5
      %v4714 = vsel %vm1324, %v4712, %v4713
      %s4715 = scalar_lea.vmem %s211, 512
      %v4716 = vld [vmem:[%s4715] sm:$0xf]
      %v4717 = vld [vmem:[%s4715 + $0x4] sm:$0xf]
      %v4718 = vld [vmem:[%s4715 + $0x8] sm:$0xf]
      %v4719 = vld [vmem:[%s4715 + $0xc] sm:$0xf]
      %v4720 = vld [vmem:[%s4715 + $0x10] sm:$0xf]
      %v4721 = vld [vmem:[%s4715 + $0x14] sm:$0xf]
      %v4722 = vld [vmem:[%s4715 + $0x18] sm:$0xf]
      %v4723 = vld [vmem:[%s4715 + $0x1c] sm:$0xf]
      %v4724 = vld [vmem:[%s4715 + $0x20] sm:$0xf]
      %v4725 = vld [vmem:[%s4715 + $0x24] sm:$0xf]
      %v4726 = vld [vmem:[%s4715 + $0x28] sm:$0xf]
      %v4727 = vld [vmem:[%s4715 + $0x2c] sm:$0xf]
      %v4728 = vld [vmem:[%s4715 + $0x30] sm:$0xf]
      %v4729 = vld [vmem:[%s4715 + $0x34] sm:$0xf]
      %v4730 = vld [vmem:[%s4715 + $0x38] sm:$0xf]
      %v4731 = vld [vmem:[%s4715 + $0x3c] sm:$0xf]
      %v4732 = vunpack.c.l.b16 %v4606
      %v4733 = vunpack.c.l.b16 %v4609
      %v4734 = vunpack.c.l.b16 %v4613
      %v4735 = vunpack.c.l.b16 %v4616
      %v4736 = vunpack.c.l.b16 %v4620
      %v4737 = vunpack.c.l.b16 %v4623
      %v4738 = vunpack.c.l.b16 %v4627
      %v4739 = vunpack.c.l.b16 %v4630
      %v4740 = vunpack.c.l.b16 %v4634
      %v4741 = vunpack.c.l.b16 %v4637
      %v4742 = vunpack.c.l.b16 %v4641
      %v4743 = vunpack.c.l.b16 %v4644
      %v4744 = vunpack.c.l.b16 %v4648
      %v4745 = vunpack.c.l.b16 %v4651
      %v4746 = vunpack.c.l.b16 %v4655
      %v4747 = vunpack.c.l.b16 %v4658
      %v4748 = vunpack.c.l.b16 %v4662
      %v4749 = vunpack.c.l.b16 %v4665
      %v4750 = vunpack.c.l.b16 %v4669
      %v4751 = vunpack.c.l.b16 %v4672
      %v4752 = vunpack.c.l.b16 %v4676
      %v4753 = vunpack.c.l.b16 %v4679
      %v4754 = vunpack.c.l.b16 %v4683
      %v4755 = vunpack.c.l.b16 %v4686
      %v4756 = vunpack.c.l.b16 %v4690
      %v4757 = vunpack.c.l.b16 %v4693
      %v4758 = vunpack.c.l.b16 %v4697
      %v4759 = vunpack.c.l.b16 %v4700
      %v4760 = vunpack.c.l.b16 %v4704
      %v4761 = vunpack.c.l.b16 %v4707
      %v4762 = vunpack.c.l.b16 %v4711
      %v4763 = vunpack.c.l.b16 %v4714
      %v4764 = vpack.c.b16 %v4733, %v4732
      %v4765 = vpack.c.b16 %v4735, %v4734
      %v4766 = vpack.c.b16 %v4737, %v4736
      %v4767 = vpack.c.b16 %v4739, %v4738
      %v4768 = vpack.c.b16 %v4741, %v4740
      %v4769 = vpack.c.b16 %v4743, %v4742
      %v4770 = vpack.c.b16 %v4745, %v4744
      %v4771 = vpack.c.b16 %v4747, %v4746
      %v4772 = vpack.c.b16 %v4749, %v4748
      %v4773 = vpack.c.b16 %v4751, %v4750
      %v4774 = vpack.c.b16 %v4753, %v4752
      %v4775 = vpack.c.b16 %v4755, %v4754
      %v4776 = vpack.c.b16 %v4757, %v4756
      %v4777 = vpack.c.b16 %v4759, %v4758
      %v4778 = vpack.c.b16 %v4761, %v4760
      %v4779 = vpack.c.b16 %v4763, %v4762
      %v4812 = vunpack.c.l.b16 %v4716
      %v4813 = vunpack.c.l.b16 %v4717
      %v4814 = vunpack.c.l.b16 %v4718
      %v4815 = vunpack.c.l.b16 %v4719
      %v4816 = vunpack.c.l.b16 %v4720
      %v4817 = vunpack.c.l.b16 %v4721
      %v4818 = vunpack.c.l.b16 %v4722
      %v4819 = vunpack.c.l.b16 %v4723
      %v4820 = vunpack.c.l.b16 %v4724
      %v4821 = vunpack.c.l.b16 %v4725
      %v4822 = vunpack.c.l.b16 %v4726
      %v4823 = vunpack.c.l.b16 %v4727
      %v4824 = vunpack.c.l.b16 %v4728
      %v4825 = vunpack.c.l.b16 %v4729
      %v4826 = vunpack.c.l.b16 %v4730
      %v4827 = vunpack.c.l.b16 %v4731
      %v4828 = vpack.c.b16 %v4813, %v4812
      %v4829 = vpack.c.b16 %v4815, %v4814
      %v4830 = vpack.c.b16 %v4817, %v4816
      %v4831 = vpack.c.b16 %v4819, %v4818
      %v4832 = vpack.c.b16 %v4821, %v4820
      %v4833 = vpack.c.b16 %v4823, %v4822
      %v4834 = vpack.c.b16 %v4825, %v4824
      %v4835 = vpack.c.b16 %v4827, %v4826
      %4844 = vmatprep.subr.bf16.mxu0 0
      %4845 = vmatpush1.bf16.msra.mxu0 %v4828
      %4846 = vmatprep.subr.bf16.mxu0 0
      %4847 = vmatpush1.bf16.msra.mxu0 %v4829
      %4848 = vmatprep.subr.bf16.mxu0 0
      %4849 = vmatpush1.bf16.msra.mxu0 %v4830
      %4850 = vmatprep.subr.bf16.mxu0 0
      %4851 = vmatpush1.bf16.msra.mxu0 %v4831
      %4852 = vmatprep.subr.bf16.mxu0 0
      %4853 = vmatpush1.bf16.msra.mxu0 %v4832
      %4854 = vmatprep.subr.bf16.mxu0 0
      %4855 = vmatpush1.bf16.msra.mxu0 %v4833
      %4856 = vmatprep.subr.bf16.mxu0 0
      %4857 = vmatpush1.bf16.msra.mxu0 %v4834
      %4858 = vmatprep.subr.bf16.mxu0 0
      %4859 = vmatpush1.bf16.msra.mxu0 %v4835
      %4860 = vmatprep.subr.bf16.mxu0 0
      %4861 = vmatpush1.bf16.msra.mxu0 0
      %4862 = vmatprep.subr.bf16.mxu0 0
      %4863 = vmatpush1.bf16.msra.mxu0 0
      %4864 = vmatprep.subr.bf16.mxu0 0
      %4865 = vmatpush1.bf16.msra.mxu0 0
      %4866 = vmatprep.subr.bf16.mxu0 0
      %4867 = vmatpush1.bf16.msra.mxu0 0
      %4868 = vmatprep.subr.bf16.mxu0 0
      %4869 = vmatpush1.bf16.msra.mxu0 0
      %4870 = vmatprep.subr.bf16.mxu0 0
      %4871 = vmatpush1.bf16.msra.mxu0 0
      %4872 = vmatprep.subr.bf16.mxu0 0
      %4873 = vmatpush1.bf16.msra.mxu0 0
      %4874 = vmatprep.subr.bf16.mxu0 0
      %4875 = vmatpush1.bf16.msra.mxu0 0
      %4876 = vmatprep.mubr.bf16.mxu0 0
      %4877 = vmatmul.mubr.bf16.gmra.mrb[0].mxu0 %v4764
      %v4878 = vpop.f32.mrb[0].mxu0
      %v4879 = vadd.f32 0.0, %v4878
      %v4880 = vpop.f32.mrb[0].mxu0
      %v4881 = vpop.f32.mrb[0].mxu0
      %v4882 = vadd.f32 0.0, %v4881
      %v4883 = vpop.f32.mrb[0].mxu0
      %4884 = vmatprep.mubr.bf16.mxu0 0
      %4885 = vmatmul.mubr.bf16.gmra.mrb[0].mxu0 %v4765
      %v4886 = vpop.f32.mrb[0].mxu0
      %v4887 = vadd.f32 0.0, %v4886
      %v4888 = vpop.f32.mrb[0].mxu0
      %v4889 = vpop.f32.mrb[0].mxu0
      %v4890 = vadd.f32 0.0, %v4889
      %v4891 = vpop.f32.mrb[0].mxu0
      %4892 = vmatprep.mubr.bf16.mxu0 0
      %4893 = vmatmul.mubr.bf16.gmra.mrb[0].mxu0 %v4766
      %v4894 = vpop.f32.mrb[0].mxu0
      %v4895 = vadd.f32 0.0, %v4894
      %v4896 = vpop.f32.mrb[0].mxu0
      %v4897 = vpop.f32.mrb[0].mxu0
      %v4898 = vadd.f32 0.0, %v4897
      %v4899 = vpop.f32.mrb[0].mxu0
      %4900 = vmatprep.mubr.bf16.mxu0 0
      %4901 = vmatmul.mubr.bf16.gmra.mrb[0].mxu0 %v4767
      %v4902 = vpop.f32.mrb[0].mxu0
      %v4903 = vadd.f32 0.0, %v4902
      %v4904 = vpop.f32.mrb[0].mxu0
      %v4905 = vpop.f32.mrb[0].mxu0
      %v4906 = vadd.f32 0.0, %v4905
      %v4907 = vpop.f32.mrb[0].mxu0
      %4908 = vmatprep.mubr.bf16.mxu0 0
      %4909 = vmatmul.mubr.bf16.gmra.mrb[0].mxu0 %v4768
      %v4910 = vpop.f32.mrb[0].mxu0
      %v4911 = vadd.f32 0.0, %v4910
      %v4912 = vpop.f32.mrb[0].mxu0
      %v4913 = vpop.f32.mrb[0].mxu0
      %v4914 = vadd.f32 0.0, %v4913
      %v4915 = vpop.f32.mrb[0].mxu0
      %4916 = vmatprep.mubr.bf16.mxu0 0
      %4917 = vmatmul.mubr.bf16.gmra.mrb[0].mxu0 %v4769
      %v4918 = vpop.f32.mrb[0].mxu0
      %v4919 = vadd.f32 0.0, %v4918
      %v4920 = vpop.f32.mrb[0].mxu0
      %v4921 = vpop.f32.mrb[0].mxu0
      %v4922 = vadd.f32 0.0, %v4921
      %v4923 = vpop.f32.mrb[0].mxu0
      %4924 = vmatprep.mubr.bf16.mxu0 0
      %4925 = vmatmul.mubr.bf16.gmra.mrb[0].mxu0 %v4770
      %v4926 = vpop.f32.mrb[0].mxu0
      %v4927 = vadd.f32 0.0, %v4926
      %v4928 = vpop.f32.mrb[0].mxu0
      %v4929 = vpop.f32.mrb[0].mxu0
      %v4930 = vadd.f32 0.0, %v4929
      %v4931 = vpop.f32.mrb[0].mxu0
      %4932 = vmatprep.mubr.bf16.mxu0 0
      %4933 = vmatmul.mubr.bf16.gmra.mrb[0].mxu0 %v4771
      %v4934 = vpop.f32.mrb[0].mxu0
      %v4935 = vadd.f32 0.0, %v4934
      %v4936 = vpop.f32.mrb[0].mxu0
      %v4937 = vpop.f32.mrb[0].mxu0
      %v4938 = vadd.f32 0.0, %v4937
      %v4939 = vpop.f32.mrb[0].mxu0
      %4940 = vmatprep.mubr.bf16.mxu0 0
      %4941 = vmatmul.mubr.bf16.gmra.mrb[0].mxu0 %v4772
      %v4942 = vpop.f32.mrb[0].mxu0
      %v4943 = vadd.f32 0.0, %v4942
      %v4944 = vpop.f32.mrb[0].mxu0
      %v4945 = vpop.f32.mrb[0].mxu0
      %v4946 = vadd.f32 0.0, %v4945
      %v4947 = vpop.f32.mrb[0].mxu0
      %4948 = vmatprep.mubr.bf16.mxu0 0
      %4949 = vmatmul.mubr.bf16.gmra.mrb[0].mxu0 %v4773
      %v4950 = vpop.f32.mrb[0].mxu0
      %v4951 = vadd.f32 0.0, %v4950
      %v4952 = vpop.f32.mrb[0].mxu0
      %v4953 = vpop.f32.mrb[0].mxu0
      %v4954 = vadd.f32 0.0, %v4953
      %v4955 = vpop.f32.mrb[0].mxu0
      %4956 = vmatprep.mubr.bf16.mxu0 0
      %4957 = vmatmul.mubr.bf16.gmra.mrb[0].mxu0 %v4774
      %v4958 = vpop.f32.mrb[0].mxu0
      %v4959 = vadd.f32 0.0, %v4958
      %v4960 = vpop.f32.mrb[0].mxu0
      %v4961 = vpop.f32.mrb[0].mxu0
      %v4962 = vadd.f32 0.0, %v4961
      %v4963 = vpop.f32.mrb[0].mxu0
      %4964 = vmatprep.mubr.bf16.mxu0 0
      %4965 = vmatmul.mubr.bf16.gmra.mrb[0].mxu0 %v4775
      %v4966 = vpop.f32.mrb[0].mxu0
      %v4967 = vadd.f32 0.0, %v4966
      %v4968 = vpop.f32.mrb[0].mxu0
      %v4969 = vpop.f32.mrb[0].mxu0
      %v4970 = vadd.f32 0.0, %v4969
      %v4971 = vpop.f32.mrb[0].mxu0
      %4972 = vmatprep.mubr.bf16.mxu0 0
      %4973 = vmatmul.mubr.bf16.gmra.mrb[0].mxu0 %v4776
      %v4974 = vpop.f32.mrb[0].mxu0
      %v4975 = vadd.f32 0.0, %v4974
      %v4976 = vpop.f32.mrb[0].mxu0
      %v4977 = vpop.f32.mrb[0].mxu0
      %v4978 = vadd.f32 0.0, %v4977
      %v4979 = vpop.f32.mrb[0].mxu0
      %4980 = vmatprep.mubr.bf16.mxu0 0
      %4981 = vmatmul.mubr.bf16.gmra.mrb[0].mxu0 %v4777
      %v4982 = vpop.f32.mrb[0].mxu0
      %v4983 = vadd.f32 0.0, %v4982
      %v4984 = vpop.f32.mrb[0].mxu0
      %v4985 = vpop.f32.mrb[0].mxu0
      %v4986 = vadd.f32 0.0, %v4985
      %v4987 = vpop.f32.mrb[0].mxu0
      %4988 = vmatprep.mubr.bf16.mxu0 0
      %4989 = vmatmul.mubr.bf16.gmra.mrb[0].mxu0 %v4778
      %v4990 = vpop.f32.mrb[0].mxu0
      %v4991 = vadd.f32 0.0, %v4990
      %v4992 = vpop.f32.mrb[0].mxu0
      %v4993 = vpop.f32.mrb[0].mxu0
      %v4994 = vadd.f32 0.0, %v4993
      %v4995 = vpop.f32.mrb[0].mxu0
      %4996 = vmatprep.mubr.bf16.mxu0 0
      %4997 = vmatmul.mubr.bf16.gmra.mrb[0].mxu0 %v4779
      %v4998 = vpop.f32.mrb[0].mxu0
      %v4999 = vadd.f32 0.0, %v4998
      %v5000 = vpop.f32.mrb[0].mxu0
      %v5001 = vpop.f32.mrb[0].mxu0
      %v5002 = vadd.f32 0.0, %v5001
      %v5003 = vpop.f32.mrb[0].mxu0
      %5004 = vdwg.mxu0
      %v5005 = vadd.f32 %v4507, %v4879
      %v5006 = vadd.f32 %v4508, %v4882
      %v5007 = vadd.f32 %v4509, %v4887
      %v5008 = vadd.f32 %v4510, %v4890
      %v5009 = vadd.f32 %v4511, %v4895
      %v5010 = vadd.f32 %v4512, %v4898
      %v5011 = vadd.f32 %v4513, %v4903
      %v5012 = vadd.f32 %v4514, %v4906
      %v5013 = vadd.f32 %v4515, %v4911
      %v5014 = vadd.f32 %v4516, %v4914
      %v5015 = vadd.f32 %v4517, %v4919
      %v5016 = vadd.f32 %v4518, %v4922
      %v5017 = vadd.f32 %v4519, %v4927
      %v5018 = vadd.f32 %v4520, %v4930
      %v5019 = vadd.f32 %v4521, %v4935
      %v5020 = vadd.f32 %v4522, %v4938
      %v5021 = vadd.f32 %v4523, %v4943
      %v5022 = vadd.f32 %v4524, %v4946
      %v5023 = vadd.f32 %v4525, %v4951
      %v5024 = vadd.f32 %v4526, %v4954
      %v5025 = vadd.f32 %v4527, %v4959
      %v5026 = vadd.f32 %v4528, %v4962
      %v5027 = vadd.f32 %v4529, %v4967
      %v5028 = vadd.f32 %v4530, %v4970
      %v5029 = vadd.f32 %v4531, %v4975
      %v5030 = vadd.f32 %v4532, %v4978
      %v5031 = vadd.f32 %v4533, %v4983
      %v5032 = vadd.f32 %v4534, %v4986
      %v5033 = vadd.f32 %v4535, %v4991
      %v5034 = vadd.f32 %v4536, %v4994
      %v5035 = vadd.f32 %v4537, %v4999
      %v5036 = vadd.f32 %v4538, %v5002
      %v5037 = vpack.c.bf16 %v5006, %v5005
      %v5038 = vpack.c.bf16 %v5008, %v5007
      %v5039 = vpack.c.bf16 %v5010, %v5009
      %v5040 = vpack.c.bf16 %v5012, %v5011
      %v5041 = vpack.c.bf16 %v5014, %v5013
      %v5042 = vpack.c.bf16 %v5016, %v5015
      %v5043 = vpack.c.bf16 %v5018, %v5017
      %v5044 = vpack.c.bf16 %v5020, %v5019
      %v5045 = vpack.c.bf16 %v5022, %v5021
      %v5046 = vpack.c.bf16 %v5024, %v5023
      %v5047 = vpack.c.bf16 %v5026, %v5025
      %v5048 = vpack.c.bf16 %v5028, %v5027
      %v5049 = vpack.c.bf16 %v5030, %v5029
      %v5050 = vpack.c.bf16 %v5032, %v5031
      %v5051 = vpack.c.bf16 %v5034, %v5033
      %v5052 = vpack.c.bf16 %v5036, %v5035
      %v5069 = vunpack.c.l.b16 %v5037
      %v5070 = vunpack.c.h.b16 %v5037
      %v5071 = vunpack.c.l.b16 %v5038
      %v5072 = vunpack.c.h.b16 %v5038
      %v5073 = vunpack.c.l.b16 %v5039
      %v5074 = vunpack.c.h.b16 %v5039
      %v5075 = vunpack.c.l.b16 %v5040
      %v5076 = vunpack.c.h.b16 %v5040
      %v5077 = vunpack.c.l.b16 %v5041
      %v5078 = vunpack.c.h.b16 %v5041
      %v5079 = vunpack.c.l.b16 %v5042
      %v5080 = vunpack.c.h.b16 %v5042
      %v5081 = vunpack.c.l.b16 %v5043
      %v5082 = vunpack.c.h.b16 %v5043
      %v5083 = vunpack.c.l.b16 %v5044
      %v5084 = vunpack.c.h.b16 %v5044
      %v5085 = vunpack.c.l.b16 %v5045
      %v5086 = vunpack.c.h.b16 %v5045
      %v5087 = vunpack.c.l.b16 %v5046
      %v5088 = vunpack.c.h.b16 %v5046
      %v5089 = vunpack.c.l.b16 %v5047
      %v5090 = vunpack.c.h.b16 %v5047
      %v5091 = vunpack.c.l.b16 %v5048
      %v5092 = vunpack.c.h.b16 %v5048
      %v5093 = vunpack.c.l.b16 %v5049
      %v5094 = vunpack.c.h.b16 %v5049
      %v5095 = vunpack.c.l.b16 %v5050
      %v5096 = vunpack.c.h.b16 %v5050
      %v5097 = vunpack.c.l.b16 %v5051
      %v5098 = vunpack.c.h.b16 %v5051
      %v5099 = vunpack.c.l.b16 %v5052
      %v5100 = vunpack.c.h.b16 %v5052
      %v5101 = vpack.c.b16 %v5069, %v5069
      %v5102 = vpack.c.b16 %v5070, %v5070
      %v5103 = vpack.c.b16 %v5071, %v5071
      %v5104 = vpack.c.b16 %v5072, %v5072
      %v5105 = vpack.c.b16 %v5073, %v5073
      %v5106 = vpack.c.b16 %v5074, %v5074
      %v5107 = vpack.c.b16 %v5075, %v5075
      %v5108 = vpack.c.b16 %v5076, %v5076
      %v5109 = vpack.c.b16 %v5077, %v5077
      %v5110 = vpack.c.b16 %v5078, %v5078
      %v5111 = vpack.c.b16 %v5079, %v5079
      %v5112 = vpack.c.b16 %v5080, %v5080
      %v5113 = vpack.c.b16 %v5081, %v5081
      %v5114 = vpack.c.b16 %v5082, %v5082
      %v5115 = vpack.c.b16 %v5083, %v5083
      %v5116 = vpack.c.b16 %v5084, %v5084
      %v5117 = vpack.c.b16 %v5085, %v5085
      %v5118 = vpack.c.b16 %v5086, %v5086
      %v5119 = vpack.c.b16 %v5087, %v5087
      %v5120 = vpack.c.b16 %v5088, %v5088
      %v5121 = vpack.c.b16 %v5089, %v5089
      %v5122 = vpack.c.b16 %v5090, %v5090
      %v5123 = vpack.c.b16 %v5091, %v5091
      %v5124 = vpack.c.b16 %v5092, %v5092
      %v5125 = vpack.c.b16 %v5093, %v5093
      %v5126 = vpack.c.b16 %v5094, %v5094
      %v5127 = vpack.c.b16 %v5095, %v5095
      %v5128 = vpack.c.b16 %v5096, %v5096
      %v5129 = vpack.c.b16 %v5097, %v5097
      %v5130 = vpack.c.b16 %v5098, %v5098
      %v5131 = vpack.c.b16 %v5099, %v5099
      %v5132 = vpack.c.b16 %v5100, %v5100
      %5165 = vst [vmem:[%s219] sm:$0xf] %v5101
      %5166 = vst [vmem:[%s219 + $0x4] sm:$0xf] %v5102
      %5167 = vst [vmem:[%s219 + $0x8] sm:$0xf] %v5103
      %5168 = vst [vmem:[%s219 + $0xc] sm:$0xf] %v5104
      %5169 = vst [vmem:[%s219 + $0x10] sm:$0xf] %v5105
      %5170 = vst [vmem:[%s219 + $0x14] sm:$0xf] %v5106
      %5171 = vst [vmem:[%s219 + $0x18] sm:$0xf] %v5107
      %5172 = vst [vmem:[%s219 + $0x1c] sm:$0xf] %v5108
      %5173 = vst [vmem:[%s219 + $0x20] sm:$0xf] %v5109
      %5174 = vst [vmem:[%s219 + $0x24] sm:$0xf] %v5110
      %5175 = vst [vmem:[%s219 + $0x28] sm:$0xf] %v5111
      %5176 = vst [vmem:[%s219 + $0x2c] sm:$0xf] %v5112
      %5177 = vst [vmem:[%s219 + $0x30] sm:$0xf] %v5113
      %5178 = vst [vmem:[%s219 + $0x34] sm:$0xf] %v5114
      %5179 = vst [vmem:[%s219 + $0x38] sm:$0xf] %v5115
      %5180 = vst [vmem:[%s219 + $0x3c] sm:$0xf] %v5116
      %5181 = vst [vmem:[%s219 + $0x40] sm:$0xf] %v5117
      %5182 = vst [vmem:[%s219 + $0x44] sm:$0xf] %v5118
      %5183 = vst [vmem:[%s219 + $0x48] sm:$0xf] %v5119
      %5184 = vst [vmem:[%s219 + $0x4c] sm:$0xf] %v5120
      %5185 = vst [vmem:[%s219 + $0x50] sm:$0xf] %v5121
      %5186 = vst [vmem:[%s219 + $0x54] sm:$0xf] %v5122
      %5187 = vst [vmem:[%s219 + $0x58] sm:$0xf] %v5123
      %5188 = vst [vmem:[%s219 + $0x5c] sm:$0xf] %v5124
      %5189 = vst [vmem:[%s219 + $0x60] sm:$0xf] %v5125
      %5190 = vst [vmem:[%s219 + $0x64] sm:$0xf] %v5126
      %5191 = vst [vmem:[%s219 + $0x68] sm:$0xf] %v5127
      %5192 = vst [vmem:[%s219 + $0x6c] sm:$0xf] %v5128
      %5193 = vst [vmem:[%s219 + $0x70] sm:$0xf] %v5129
      %5194 = vst [vmem:[%s219 + $0x74] sm:$0xf] %v5130
      %5195 = vst [vmem:[%s219 + $0x78] sm:$0xf] %v5131
      %5196 = vst [vmem:[%s219 + $0x7c] sm:$0xf] %v5132
      %v5197 = vadd.f32 %v5005, %v5006
      %v5198 = vadd.f32 %v5197, %v5007
      %v5199 = vadd.f32 %v5198, %v5008
      %v5200 = vadd.f32 %v5199, %v5009
      %v5201 = vadd.f32 %v5200, %v5010
      %v5202 = vadd.f32 %v5201, %v5011
      %v5203 = vadd.f32 %v5202, %v5012
      %v5204 = vadd.f32 %v5203, %v5013
      %v5205 = vadd.f32 %v5204, %v5014
      %v5206 = vadd.f32 %v5205, %v5015
      %v5207 = vadd.f32 %v5206, %v5016
      %v5208 = vadd.f32 %v5207, %v5017
      %v5209 = vadd.f32 %v5208, %v5018
      %v5210 = vadd.f32 %v5209, %v5019
      %v5211 = vadd.f32 %v5210, %v5020
      %v5212 = vadd.f32 %v5211, %v5021
      %v5213 = vadd.f32 %v5212, %v5022
      %v5214 = vadd.f32 %v5213, %v5023
      %v5215 = vadd.f32 %v5214, %v5024
      %v5216 = vadd.f32 %v5215, %v5025
      %v5217 = vadd.f32 %v5216, %v5026
      %v5218 = vadd.f32 %v5217, %v5027
      %v5219 = vadd.f32 %v5218, %v5028
      %v5220 = vadd.f32 %v5219, %v5029
      %v5221 = vadd.f32 %v5220, %v5030
      %v5222 = vadd.f32 %v5221, %v5031
      %v5223 = vadd.f32 %v5222, %v5032
      %v5224 = vadd.f32 %v5223, %v5033
      %v5225 = vadd.f32 %v5224, %v5034
      %v5226 = vadd.f32 %v5225, %v5035
      %v5227 = vadd.f32 %v5226, %v5036
      %v5228 = vrot.slane %v5227, 4
      %v5229 = vadd.f32 %v5227, %v5228
      %v5230 = vrot.slane %v5229, 2
      %v5231 = vadd.f32 %v5229, %v5230
      %v5232 = vrot.slane %v5231, 1
      %v5233 = vadd.f32 %v5231, %v5232
      %v5234 = vmul.f32 %v5005, %v5005
      %v5235 = vmul.f32 %v5006, %v5006
      %v5236 = vmul.f32 %v5007, %v5007
      %v5237 = vmul.f32 %v5008, %v5008
      %v5238 = vmul.f32 %v5009, %v5009
      %v5239 = vmul.f32 %v5010, %v5010
      %v5240 = vmul.f32 %v5011, %v5011
      %v5241 = vmul.f32 %v5012, %v5012
      %v5242 = vmul.f32 %v5013, %v5013
      %v5243 = vmul.f32 %v5014, %v5014
      %v5244 = vmul.f32 %v5015, %v5015
      %v5245 = vmul.f32 %v5016, %v5016
      %v5246 = vmul.f32 %v5017, %v5017
      %v5247 = vmul.f32 %v5018, %v5018
      %v5248 = vmul.f32 %v5019, %v5019
      %v5249 = vmul.f32 %v5020, %v5020
      %v5250 = vmul.f32 %v5021, %v5021
      %v5251 = vmul.f32 %v5022, %v5022
      %v5252 = vmul.f32 %v5023, %v5023
      %v5253 = vmul.f32 %v5024, %v5024
      %v5254 = vmul.f32 %v5025, %v5025
      %v5255 = vmul.f32 %v5026, %v5026
      %v5256 = vmul.f32 %v5027, %v5027
      %v5257 = vmul.f32 %v5028, %v5028
      %v5258 = vmul.f32 %v5029, %v5029
      %v5259 = vmul.f32 %v5030, %v5030
      %v5260 = vmul.f32 %v5031, %v5031
      %v5261 = vmul.f32 %v5032, %v5032
      %v5262 = vmul.f32 %v5033, %v5033
      %v5263 = vmul.f32 %v5034, %v5034
      %v5264 = vmul.f32 %v5035, %v5035
      %v5265 = vmul.f32 %v5036, %v5036
      %v5266 = vadd.f32 %v5234, %v5235
      %v5267 = vadd.f32 %v5266, %v5236
      %v5268 = vadd.f32 %v5267, %v5237
      %v5269 = vadd.f32 %v5268, %v5238
      %v5270 = vadd.f32 %v5269, %v5239
      %v5271 = vadd.f32 %v5270, %v5240
      %v5272 = vadd.f32 %v5271, %v5241
      %v5273 = vadd.f32 %v5272, %v5242
      %v5274 = vadd.f32 %v5273, %v5243
      %v5275 = vadd.f32 %v5274, %v5244
      %v5276 = vadd.f32 %v5275, %v5245
      %v5277 = vadd.f32 %v5276, %v5246
      %v5278 = vadd.f32 %v5277, %v5247
      %v5279 = vadd.f32 %v5278, %v5248
      %v5280 = vadd.f32 %v5279, %v5249
      %v5281 = vadd.f32 %v5280, %v5250
      %v5282 = vadd.f32 %v5281, %v5251
      %v5283 = vadd.f32 %v5282, %v5252
      %v5284 = vadd.f32 %v5283, %v5253
      %v5285 = vadd.f32 %v5284, %v5254
      %v5286 = vadd.f32 %v5285, %v5255
      %v5287 = vadd.f32 %v5286, %v5256
      %v5288 = vadd.f32 %v5287, %v5257
      %v5289 = vadd.f32 %v5288, %v5258
      %v5290 = vadd.f32 %v5289, %v5259
      %v5291 = vadd.f32 %v5290, %v5260
      %v5292 = vadd.f32 %v5291, %v5261
      %v5293 = vadd.f32 %v5292, %v5262
      %v5294 = vadd.f32 %v5293, %v5263
      %v5295 = vadd.f32 %v5294, %v5264
      %v5296 = vadd.f32 %v5295, %v5265
      %v5297 = vrot.slane %v5296, 4
      %v5298 = vadd.f32 %v5296, %v5297
      %v5299 = vrot.slane %v5298, 2
      %v5300 = vadd.f32 %v5298, %v5299
      %v5301 = vrot.slane %v5300, 1
      %v5302 = vadd.f32 %v5300, %v5301
      %vm5303 = vcmask 1040384
      %v5304 = vsel %vm5303, %v5233, %v5302
      %5305 = vst [vmem:[%s226] sm:$0x3] %v5304
      %p5306 = scmp.lt.s32.totalorder %s19, 1
      %s5307 = scalar_select %p5306, %s19, 1
      %p5308 = scmp.lt.s32.totalorder %s20, 0
      %s5309 = scalar_select %p5308, %s20, 0
      %s5310 = smul.addr %s5307, 32
      %s5311 = sadd.s32 %s5309, %s5310
      %s5312 = smul.addr %s5311, 4
      %s5313 = scalar_lea.vmem %s2, %s5312
      %p5314 = scmp.lt.s32.totalorder %s19, 1
      %s5315 = scalar_select %p5314, %s19, 1
      %p5316 = scmp.lt.s32.totalorder %s20, 0
      %s5317 = scalar_select %p5316, %s20, 0
      %s5318 = sadd.s32 %s5317, %s5315
      %s5319 = smul.addr %s5318, 2
      %s5320 = scalar_lea.vmem %s3, %s5319
      // Predicated region
      $region29: #{forward.6} parent=27 // pred_check
        %p5321 = pneg %p99
      $region30: #{forward.6} parent=27 // pred_check_branch
        %5323 = sbr.rel (%p5321) target = $region32
      $region31: #{forward.6} parent=27 // pred_region
        _
      $region32: #{forward.6} parent=27 // pred_fallthru
        _
      // Predicated region
      $region33: #{forward.6} parent=27 // pred_check
        %p5324 = pneg %p127
      $region34: #{forward.6} parent=27 // pred_check_branch
        %5326 = sbr.rel (%p5324) target = $region36
      $region35: #{forward.6} parent=27 // pred_region
        _
      $region36: #{forward.6} parent=27 // pred_fallthru
        _
    $region28: #{forward.6} parent=5 // pred_fallthru
      _
    %p5327 = scmp.le.s32.totalorder 2, %s10
    // Predicated region
    $region37: #{forward.6} parent=5 // pred_check
      %p5328 = pneg %p5327
    $region38: #{forward.6} parent=5 // pred_check_branch
      %5330 = sbr.rel (%p5328) target = $region40
    $region39: #{forward.6} parent=5 // pred_region
      %s5331 = ssub.s32 %s10, 2
      // Predicated region
      $region41: #{forward.6} parent=39 // pred_check
        %p5332 = pneg %p105
      $region42: #{forward.6} parent=39 // pred_check_branch
        %5334 = sbr.rel (%p5332) target = $region44
      $region43: #{forward.6} parent=39 // pred_region
        %p5335 = scmp.lt.s32.totalorder %s21, 1
        %s5336 = scalar_select %p5335, %s21, 1
        %p5337 = scmp.lt.s32.totalorder %s22, 0
        %s5338 = scalar_select %p5337, %s22, 0
        %s5339 = smul.addr %s5336, 32
        %s5340 = sadd.s32 %s5338, %s5339
        %s5341 = smul.addr %s5340, 4
        %s5342 = scalar_lea.vmem %s2, %s5341
      $region44: #{forward.6} parent=39 // pred_fallthru
        _
      // Predicated region
      $region45: #{forward.6} parent=39 // pred_check
        %p5343 = pneg %p133
      $region46: #{forward.6} parent=39 // pred_check_branch
        %5345 = sbr.rel (%p5343) target = $region48
      $region47: #{forward.6} parent=39 // pred_region
        %p5346 = scmp.lt.s32.totalorder %s21, 1
        %s5347 = scalar_select %p5346, %s21, 1
        %p5348 = scmp.lt.s32.totalorder %s22, 0
        %s5349 = scalar_select %p5348, %s22, 0
        %s5350 = sadd.s32 %s5349, %s5347
        %s5351 = smul.addr %s5350, 2
        %s5352 = scalar_lea.vmem %s3, %s5351
      $region48: #{forward.6} parent=39 // pred_fallthru
        _
    $region40: #{forward.6} parent=5 // pred_fallthru
      _
  $region6: #{forward.6} parent=0 // loop_footer
    %s14 = sadd.s32 1, %s10
  $region7: #{forward.6} parent=0 // loop_footer_branch
    %9 = sbr.rel target = $region3
  $region8: #{forward.6} parent=0 // loop_exit
    _

</llo_original>
